<compile_context>
chip_gen: v7x
topology: tpu7x:2x2x1
jax: 0.10.0
libtpu: 0.0.40
codegen_flags: <defaults>
</compile_context>

<pallas_src>
import math
import jax
import jax.numpy as jnp
import numpy as np
from jax.experimental import pallas as pl
from jax.experimental.pallas import tpu as pltpu

HIDDEN = 32
LSTM_LAYERS = 2
ALPHA = 0.001          # module constructed with training=True -> alpha is used
TAU_MAX = 3.0
R_ON = 0.05
IN_FEAT = 48
N_CLASSES = 4


def _vmem():
    return pl.BlockSpec(memory_space=pltpu.MemorySpace.VMEM)


# ---------------------------------------------------------------------------
# Phased-LSTM time gate k (elementwise precompute, no recurrence) — plain JAX,
# executed ONCE inside prepare_params (hoisted out of the per-call path).
# TODO(synk): tan(pi*(a/b - 0.5)) is singular exactly at phase-wrap points
# (matches the PyTorch fmod); kept as-is for semantic fidelity.
# ---------------------------------------------------------------------------
def compute_k(T, tau, shift):
    times = jnp.arange(T, dtype=jnp.float32)[:, None]          # (T, 1)
    a = times - shift[None, :]                                  # (T, H)
    b = tau[None, :]
    fm = b / jnp.pi * jnp.arctan(jnp.tan(jnp.pi * (a / b - 0.5))) + b / 2.0
    phi = fm / (b + 1e-8)
    k = jnp.where(
        phi < 0.5 * R_ON,
        2.0 * phi / R_ON,
        jnp.where((0.5 * R_ON <= phi) & (phi < R_ON),
                  2.0 - 2.0 * phi / R_ON,
                  ALPHA * phi),
    )
    return k.astype(jnp.float32)


# ---------------------------------------------------------------------------
# One-time parameter folding (NOT on the per-call path):
#   per layer:  W3f = W3[:H]+W3[H:2H]+W3[2H:3H]  ->  W_comb = [W3f | Wc] (H,4H)
#               U_comb likewise, b_comb = b (1,4H)
#   ff folded into layer 0:  W0_eff = ffw @ W_comb0,  b0_eff = ffb@W_comb0 + b0
#   wavefront matrix G (L*H, L*4H): diag blocks U_l, superdiag blocks W_{l+1}
#   b_all (1, L*4H): layer-0 slot zero (folded), others b_comb_l
#   fcw_eff = fc_w.T / T   (mean-over-time folded into the head)
# ---------------------------------------------------------------------------
def prepare_params(params, T):
    H = HIDDEN
    L = len(params["layers"])
    ffw = params["ff_w"].T                       # (F, H)
    ffb = params["ff_b"].reshape(1, H)

    W_combs, U_combs, b_combs, wps, ks = [], [], [], [], []
    for lp in params["layers"]:
        W3 = lp["W"][:3 * H, :3 * H]
        Wc = lp["W"][3 * H:, 3 * H:]
        U3 = lp["U"][:3 * H, :3 * H]
        Uc = lp["U"][3 * H:, 3 * H:]
        W3f = W3[:H] + W3[H:2 * H] + W3[2 * H:]
        U3f = U3[:H] + U3[H:2 * H] + U3[2 * H:]
        W_combs.append(jnp.concatenate([W3f, Wc], axis=1))     # (H, 4H)
        U_combs.append(jnp.concatenate([U3f, Uc], axis=1))     # (H, 4H)
        b_combs.append(lp["b"].reshape(1, 4 * H))
        wps.append(lp["w_peep"].reshape(1, 3 * H))
        ks.append(compute_k(T, lp["tau"], lp["shift"]))        # (T, H)

    W0_eff = ffw @ W_combs[0]                                   # (F, 4H)
    b0_eff = ffb @ W_combs[0] + b_combs[0]                      # (1, 4H)

    zero_blk = jnp.zeros((H, 4 * H), jnp.float32)
    rows = []
    for r in range(L):
        row = []
        for cidx in range(L):
            if cidx == r:
                row.append(U_combs[r])
            elif cidx == r + 1:
                row.append(W_combs[cidx])
            else:
                row.append(zero_blk)
        rows.append(jnp.concatenate(row, axis=1))
    G = jnp.concatenate(rows, axis=0)                           # (L*H, L*4H)

    b_all = jnp.concatenate(
        [jnp.zeros((1, 4 * H), jnp.float32)] + b_combs[1:], axis=1)  # (1, L*4H)
    wp_all = jnp.concatenate(wps, axis=0)                       # (L, 3H)
    k_all = jnp.concatenate(ks, axis=0)                         # (L*T, H)

    fcw_eff = params["fc_w"].T * (1.0 / T)                      # (H, 4)
    fcb = params["fc_b"].reshape(1, N_CLASSES)

    return dict(W0_eff=W0_eff, b0_eff=b0_eff, G=G, b_all=b_all,
                wp_all=wp_all, k_all=k_all, fcw_eff=fcw_eff, fcb=fcb)


# ---------------------------------------------------------------------------
# Fused forward kernel factory.
# refs = (x(T*B,F), W0_eff(F,4H), b0_eff(1,4H), G(L*H,L*4H), b_all(1,L*4H),
#         wp_all(L,3H), k_all(L*T,H), fcw_eff(H,4), fcb(1,4), out(B,4))
# ---------------------------------------------------------------------------
def make_fused_kernel(L, T, B, H):
    H3, H4 = 3 * H, 4 * H

    def kernel(x_ref, w0_ref, b0_ref, g_ref, ball_ref, wp_ref, k_ref,
               fcw_ref, fcb_ref, o_ref):
        # Layer-0 x-side projection; ff dense is folded into W0_eff/b0_eff, so
        # this single batched matmul replaces (ff dense + layer-0 W matmul) and
        # is independent of the recurrence.
        xp0 = (jnp.dot(x_ref[...], w0_ref[...],
                       preferred_element_type=jnp.float32)
               + b0_ref[...])                                   # (T*B, 4H)

        G = g_ref[...]                                          # (L*H, L*4H)
        b_all = ball_ref[...]                                   # (1, L*4H)
        wp = wp_ref[...]                                        # (L, 3H)
        k_all = k_ref[...]                                      # (L*T, H)

        h = [jnp.zeros((B, H), jnp.float32) for _ in range(L)]
        c = [jnp.zeros((B, H), jnp.float32) for _ in range(L)]
        acc = jnp.zeros((B, H), jnp.float32)

        # Wavefront over (layer, time): diagonal d updates layer l at step
        # t = d - l.  One fused (B, L*H) @ (L*H, L*4H) matmul per diagonal
        # supplies every active layer's recurrent AND x-side gate terms, so the
        # serial MXU chain is T + L - 1 dependent matmuls (vs L*T sequential).
        for d in range(T + L - 1):
            hcat = jnp.concatenate(h, axis=1) if L > 1 else h[0]   # (B, L*H)
            gg = (jnp.dot(hcat, G, preferred_element_type=jnp.float32)
                  + b_all)                                          # (B, L*4H)
            new_h = list(h)
            new_c = list(c)
            for l in range(L):
                t = d - l
                if t < 0 or t >= T:
                    continue
                g_l = gg[:, l * H4:(l + 1) * H4]
                if l == 0:
                    g_l = g_l + xp0[t * B:(t + 1) * B, :]
                wl = wp[l:l + 1, :]
                cl = c[l]
                i_t = jax.nn.sigmoid(g_l[:, 0:H] + wl[:, 0:H] * cl)
                f_t = jax.nn.sigmoid(g_l[:, H:2 * H] + wl[:, H:2 * H] * cl)
                o_t = jax.nn.sigmoid(g_l[:, 2 * H:H3] + wl[:, 2 * H:H3] * cl)
                c_prim = f_t * cl + i_t * jnp.tanh(g_l[:, H3:H4])
                k_t = k_all[l * T + t:l * T + t + 1, :]             # (1, H)
                new_c[l] = k_t * c_prim + (1.0 - k_t) * cl
                new_h[l] = k_t * (jnp.tanh(c_prim) * o_t) + (1.0 - k_t) * h[l]
                if l == L - 1:
                    acc = acc + new_h[l]        # running sum for mean-over-time
            h, c = new_h, new_c

        # Head: 1/T already folded into fcw_eff; softmax on VPU/EUP.
        logits = (jnp.dot(acc, fcw_ref[...],
                          preferred_element_type=jnp.float32)
                  + fcb_ref[...])                                   # (B, 4)
        m = jnp.max(logits, axis=1, keepdims=True)
        e = jnp.exp(logits - m)
        o_ref[...] = e / jnp.sum(e, axis=1, keepdims=True)

    return kernel


# ---------------------------------------------------------------------------
# Model forward (jitted).  Only a tiny transpose + the fused pallas_call.
# ---------------------------------------------------------------------------
def model_forward(prepped, x, lens):
    # TODO(synk): PackedSequence is a no-op in the PyTorch forward — it only
    # uses cudnn_fmt[0] (= x_flat); `lens` is accepted but unused.
    del lens
    B, T, F = x.shape
    H = HIDDEN
    L = prepped["wp_all"].shape[0]
    assert prepped["k_all"].shape[0] == L * T, "prepare_params T mismatch"

    x2d = jnp.transpose(x, (1, 0, 2)).reshape(T * B, F)   # time-major, once

    kernel = make_fused_kernel(L, T, B, H)
    return pl.pallas_call(
        kernel,
        out_shape=jax.ShapeDtypeStruct((B, N_CLASSES), jnp.float32),
        in_specs=[_vmem()] * 9,
        out_specs=_vmem(),
    )(x2d, prepped["W0_eff"], prepped["b0_eff"], prepped["G"],
      prepped["b_all"], prepped["wp_all"], prepped["k_all"],
      prepped["fcw_eff"], prepped["fcb"])


# ---------------------------------------------------------------------------
# Parameter init mirroring the PyTorch module.
# ---------------------------------------------------------------------------
def init_params(key):
    stdv = 1.0 / math.sqrt(HIDDEN)
    in_stdv = 1.0 / math.sqrt(IN_FEAT)
    keys = jax.random.split(key, 4 + LSTM_LAYERS)
    ff_w = jax.random.uniform(keys[0], (HIDDEN, IN_FEAT), jnp.float32,
                              -in_stdv, in_stdv)
    ff_b = jax.random.uniform(keys[1], (HIDDEN,), jnp.float32, -in_stdv, in_stdv)
    fc_w = jax.random.uniform(keys[2], (N_CLASSES, HIDDEN), jnp.float32,
                              -stdv, stdv)
    fc_b = jax.random.uniform(keys[3], (N_CLASSES,), jnp.float32, -stdv, stdv)
    layers = []
    for i in range(LSTM_LAYERS):
        lk = jax.random.split(keys[4 + i], 5)
        W = jax.random.uniform(lk[0], (4 * HIDDEN, 4 * HIDDEN), jnp.float32,
                               -stdv, stdv)
        U = jax.random.uniform(lk[1], (4 * HIDDEN, 4 * HIDDEN), jnp.float32,
                               -stdv, stdv)
        b = jnp.zeros((4 * HIDDEN,), jnp.float32)
        w_peep = jax.random.uniform(lk[2], (3 * HIDDEN,), jnp.float32,
                                    -stdv, stdv)
        tau = jnp.exp(jax.random.uniform(lk[3], (HIDDEN,), jnp.float32,
                                         0.0, TAU_MAX))
        shift = jax.random.uniform(lk[4], (HIDDEN,), jnp.float32,
                                   0.0, float(jnp.mean(tau)))
        layers.append(dict(W=W, U=U, b=b, w_peep=w_peep, tau=tau, shift=shift))
    return dict(ff_w=ff_w, ff_b=ff_b, fc_w=fc_w, fc_b=fc_b, layers=layers)


# Pure-JAX reference (mirrors the PyTorch module) for a numerical sanity check.
def reference_forward(params, x):
    B, T, F = x.shape
    H = HIDDEN
    hidden = x @ params["ff_w"].T + params["ff_b"]
    for lp in params["layers"]:
        k = compute_k(T, lp["tau"], lp["shift"])
        W3 = lp["W"][: 3 * H, : 3 * H]
        Wc = lp["W"][3 * H:, 3 * H:]
        U3 = lp["U"][: 3 * H, : 3 * H]
        Uc = lp["U"][3 * H:, 3 * H:]
        b3 = lp["b"][: 3 * H]
        bc = lp["b"][3 * H:]
        h = jnp.zeros((B, H), jnp.float32)
        c = jnp.zeros((B, H), jnp.float32)
        outs = []
        x_seq = jnp.transpose(hidden, (1, 0, 2))
        for t in range(T):
            x_t = x_seq[t]
            gates = (jnp.tile(x_t, (1, 3)) @ W3 + jnp.tile(h, (1, 3)) @ U3
                     + b3 + lp["w_peep"] * jnp.tile(c, (1, 3)))
            i_t = jax.nn.sigmoid(gates[:, :H])
            f_t = jax.nn.sigmoid(gates[:, H:2 * H])
            o_t = jax.nn.sigmoid(gates[:, 2 * H:])
            gate_c = x_t @ Wc + h @ Uc + bc
            c_prim = f_t * c + i_t * jnp.tanh(gate_c)
            c = k[t] * c_prim + (1 - k[t]) * c
            h_prim = jnp.tanh(c_prim) * o_t
            h = k[t] * h_prim + (1 - k[t]) * h
            outs.append(h)
        hidden = jnp.transpose(jnp.stack(outs), (1, 0, 2))
    z = jnp.mean(hidden, axis=1)
    logits = z @ params["fc_w"].T + params["fc_b"]
    return jax.nn.softmax(logits, axis=1)


if __name__ == "__main__":
    key = jax.random.PRNGKey(0)
    kp, kx = jax.random.split(key)
    params = init_params(kp)

    B, T = 2, 8
    x = jax.random.normal(kx, (B, T, IN_FEAT), jnp.float32)
    lens = jnp.full((B,), T, jnp.int32)

    # One-time folding / time-gate precompute (hoisted out of the call path).
    prepped = prepare_params(params, T)

    fwd = jax.jit(model_forward)
    y = jax.block_until_ready(fwd(prepped, x, lens))

    y_ref = reference_forward(params, x)
    assert y.shape == (B, N_CLASSES)
    assert np.allclose(np.asarray(y), np.asarray(y_ref), atol=1e-2, rtol=1e-2), (
        "mismatch vs pure-JAX reference"
    )
    print("KERNEL_OK")
</pallas_src>

<mosaic_0001>
module attributes {stable_mosaic.version = 11 : i64} {
  func.func @kernel(%arg0: memref<16x48xf32, #tpu.memory_space<vmem>>, %arg1: memref<48x128xf32, #tpu.memory_space<vmem>>, %arg2: memref<1x128xf32, #tpu.memory_space<vmem>>, %arg3: memref<64x256xf32, #tpu.memory_space<vmem>>, %arg4: memref<1x256xf32, #tpu.memory_space<vmem>>, %arg5: memref<2x96xf32, #tpu.memory_space<vmem>>, %arg6: memref<16x32xf32, #tpu.memory_space<vmem>>, %arg7: memref<32x4xf32, #tpu.memory_space<vmem>>, %arg8: memref<1x4xf32, #tpu.memory_space<vmem>>, %arg9: memref<2x4xf32, #tpu.memory_space<vmem>>) attributes {dimension_semantics = [], scalar_prefetch = 0 : i64, scratch_operands = 0 : i64, tpu.core_type = #tpu.core_type<tc>} {
    %c0 = arith.constant 0 : index
    %c0_0 = arith.constant 0 : index
    %0 = vector.load %arg0[%c0, %c0_0] : memref<16x48xf32, #tpu.memory_space<vmem>>, vector<16x48xf32>
    %c0_1 = arith.constant 0 : index
    %c0_2 = arith.constant 0 : index
    %1 = vector.load %arg1[%c0_1, %c0_2] : memref<48x128xf32, #tpu.memory_space<vmem>>, vector<48x128xf32>
    %cst = arith.constant dense<0.000000e+00> : vector<16x128xf32>
    %2 = tpu.matmul %0, %1, %cst {dimension_numbers = #tpu.dot_dimension_numbers<[1], [0], [0], [1], [0, 0, 1, 1], [], []>} : vector<16x48xf32>, vector<48x128xf32>, vector<16x128xf32> -> vector<16x128xf32>
    %c0_3 = arith.constant 0 : index
    %c0_4 = arith.constant 0 : index
    %3 = vector.load %arg2[%c0_3, %c0_4] : memref<1x128xf32, #tpu.memory_space<vmem>>, vector<1x128xf32>
    %4 = vector.broadcast %3 : vector<1x128xf32> to vector<16x128xf32>
    %5 = arith.addf %2, %4 : vector<16x128xf32>
    %c0_5 = arith.constant 0 : index
    %c0_6 = arith.constant 0 : index
    %6 = vector.load %arg3[%c0_5, %c0_6] : memref<64x256xf32, #tpu.memory_space<vmem>>, vector<64x256xf32>
    %c0_7 = arith.constant 0 : index
    %c0_8 = arith.constant 0 : index
    %7 = vector.load %arg4[%c0_7, %c0_8] : memref<1x256xf32, #tpu.memory_space<vmem>>, vector<1x256xf32>
    %c0_9 = arith.constant 0 : index
    %c0_10 = arith.constant 0 : index
    %8 = vector.load %arg5[%c0_9, %c0_10] : memref<2x96xf32, #tpu.memory_space<vmem>>, vector<2x96xf32>
    %c0_11 = arith.constant 0 : index
    %c0_12 = arith.constant 0 : index
    %9 = vector.load %arg6[%c0_11, %c0_12] : memref<16x32xf32, #tpu.memory_space<vmem>>, vector<16x32xf32>
    %cst_13 = arith.constant 0.000000e+00 : f32
    %10 = vector.broadcast %cst_13 : f32 to vector<2x32xf32>
    %cst_14 = arith.constant 0.000000e+00 : f32
    %11 = vector.broadcast %cst_14 : f32 to vector<2x32xf32>
    %cst_15 = arith.constant 0.000000e+00 : f32
    %12 = vector.broadcast %cst_15 : f32 to vector<2x32xf32>
    %cst_16 = arith.constant 0.000000e+00 : f32
    %13 = vector.broadcast %cst_16 : f32 to vector<2x32xf32>
    %cst_17 = arith.constant 0.000000e+00 : f32
    %14 = vector.broadcast %cst_17 : f32 to vector<2x32xf32>
    %15 = tpu.concatenate %10, %11 in 1 : vector<2x32xf32>, vector<2x32xf32> -> vector<2x64xf32>
    %cst_18 = arith.constant dense<0.000000e+00> : vector<2x256xf32>
    %16 = tpu.matmul %15, %6, %cst_18 {dimension_numbers = #tpu.dot_dimension_numbers<[1], [0], [0], [1], [0, 0, 1, 1], [], []>} : vector<2x64xf32>, vector<64x256xf32>, vector<2x256xf32> -> vector<2x256xf32>
    %17 = vector.broadcast %7 : vector<1x256xf32> to vector<2x256xf32>
    %18 = arith.addf %16, %17 : vector<2x256xf32>
    %19 = vector.extract_strided_slice %18 {offsets = [0, 0], sizes = [2, 128], strides = [1, 1]} : vector<2x256xf32> to vector<2x128xf32>
    %20 = vector.extract_strided_slice %5 {offsets = [0, 0], sizes = [2, 128], strides = [1, 1]} : vector<16x128xf32> to vector<2x128xf32>
    %21 = arith.addf %19, %20 : vector<2x128xf32>
    %22 = vector.extract_strided_slice %8 {offsets = [0, 0], sizes = [1, 96], strides = [1, 1]} : vector<2x96xf32> to vector<1x96xf32>
    %23 = vector.extract_strided_slice %21 {offsets = [0, 0], sizes = [2, 32], strides = [1, 1]} : vector<2x128xf32> to vector<2x32xf32>
    %24 = vector.extract_strided_slice %22 {offsets = [0, 0], sizes = [1, 32], strides = [1, 1]} : vector<1x96xf32> to vector<1x32xf32>
    %25 = vector.broadcast %24 : vector<1x32xf32> to vector<2x32xf32>
    %26 = arith.mulf %25, %12 : vector<2x32xf32>
    %27 = arith.addf %23, %26 : vector<2x32xf32>
    %28 = arith.negf %27 : vector<2x32xf32>
    %29 = math.exp %28 : vector<2x32xf32>
    %cst_19 = arith.constant 1.000000e+00 : f32
    %30 = vector.broadcast %cst_19 : f32 to vector<2x32xf32>
    %31 = arith.addf %30, %29 : vector<2x32xf32>
    %32 = arith.divf %30, %31 : vector<2x32xf32>
    %33 = vector.extract_strided_slice %21 {offsets = [0, 32], sizes = [2, 32], strides = [1, 1]} : vector<2x128xf32> to vector<2x32xf32>
    %34 = vector.extract_strided_slice %22 {offsets = [0, 32], sizes = [1, 32], strides = [1, 1]} : vector<1x96xf32> to vector<1x32xf32>
    %35 = vector.broadcast %34 : vector<1x32xf32> to vector<2x32xf32>
    %36 = arith.mulf %35, %12 : vector<2x32xf32>
    %37 = arith.addf %33, %36 : vector<2x32xf32>
    %38 = arith.negf %37 : vector<2x32xf32>
    %39 = math.exp %38 : vector<2x32xf32>
    %cst_20 = arith.constant 1.000000e+00 : f32
    %40 = vector.broadcast %cst_20 : f32 to vector<2x32xf32>
    %41 = arith.addf %40, %39 : vector<2x32xf32>
    %42 = arith.divf %40, %41 : vector<2x32xf32>
    %43 = vector.extract_strided_slice %21 {offsets = [0, 64], sizes = [2, 32], strides = [1, 1]} : vector<2x128xf32> to vector<2x32xf32>
    %44 = vector.extract_strided_slice %22 {offsets = [0, 64], sizes = [1, 32], strides = [1, 1]} : vector<1x96xf32> to vector<1x32xf32>
    %45 = vector.broadcast %44 : vector<1x32xf32> to vector<2x32xf32>
    %46 = arith.mulf %45, %12 : vector<2x32xf32>
    %47 = arith.addf %43, %46 : vector<2x32xf32>
    %48 = arith.negf %47 : vector<2x32xf32>
    %49 = math.exp %48 : vector<2x32xf32>
    %cst_21 = arith.constant 1.000000e+00 : f32
    %50 = vector.broadcast %cst_21 : f32 to vector<2x32xf32>
    %51 = arith.addf %50, %49 : vector<2x32xf32>
    %52 = arith.divf %50, %51 : vector<2x32xf32>
    %53 = arith.mulf %42, %12 : vector<2x32xf32>
    %54 = vector.extract_strided_slice %21 {offsets = [0, 96], sizes = [2, 32], strides = [1, 1]} : vector<2x128xf32> to vector<2x32xf32>
    %55 = math.tanh %54 : vector<2x32xf32>
    %56 = arith.mulf %32, %55 : vector<2x32xf32>
    %57 = arith.addf %53, %56 : vector<2x32xf32>
    %58 = vector.extract_strided_slice %9 {offsets = [0, 0], sizes = [1, 32], strides = [1, 1]} : vector<16x32xf32> to vector<1x32xf32>
    %59 = vector.broadcast %58 : vector<1x32xf32> to vector<2x32xf32>
    %60 = arith.mulf %59, %57 : vector<2x32xf32>
    %cst_22 = arith.constant 1.000000e+00 : f32
    %61 = vector.broadcast %cst_22 : f32 to vector<1x32xf32>
    %62 = arith.subf %61, %58 : vector<1x32xf32>
    %63 = vector.broadcast %62 : vector<1x32xf32> to vector<2x32xf32>
    %64 = arith.mulf %63, %12 : vector<2x32xf32>
    %65 = arith.addf %60, %64 : vector<2x32xf32>
    %66 = math.tanh %57 : vector<2x32xf32>
    %67 = arith.mulf %66, %52 : vector<2x32xf32>
    %68 = vector.broadcast %58 : vector<1x32xf32> to vector<2x32xf32>
    %69 = arith.mulf %68, %67 : vector<2x32xf32>
    %cst_23 = arith.constant 1.000000e+00 : f32
    %70 = vector.broadcast %cst_23 : f32 to vector<1x32xf32>
    %71 = arith.subf %70, %58 : vector<1x32xf32>
    %72 = vector.broadcast %71 : vector<1x32xf32> to vector<2x32xf32>
    %73 = arith.mulf %72, %10 : vector<2x32xf32>
    %74 = arith.addf %69, %73 : vector<2x32xf32>
    %75 = tpu.concatenate %74, %11 in 1 : vector<2x32xf32>, vector<2x32xf32> -> vector<2x64xf32>
    %cst_24 = arith.constant dense<0.000000e+00> : vector<2x256xf32>
    %76 = tpu.matmul %75, %6, %cst_24 {dimension_numbers = #tpu.dot_dimension_numbers<[1], [0], [0], [1], [0, 0, 1, 1], [], []>} : vector<2x64xf32>, vector<64x256xf32>, vector<2x256xf32> -> vector<2x256xf32>
    %77 = vector.broadcast %7 : vector<1x256xf32> to vector<2x256xf32>
    %78 = arith.addf %76, %77 : vector<2x256xf32>
    %79 = vector.extract_strided_slice %78 {offsets = [0, 0], sizes = [2, 128], strides = [1, 1]} : vector<2x256xf32> to vector<2x128xf32>
    %80 = vector.extract_strided_slice %5 {offsets = [2, 0], sizes = [2, 128], strides = [1, 1]} : vector<16x128xf32> to vector<2x128xf32>
    %81 = arith.addf %79, %80 : vector<2x128xf32>
    %82 = vector.extract_strided_slice %8 {offsets = [0, 0], sizes = [1, 96], strides = [1, 1]} : vector<2x96xf32> to vector<1x96xf32>
    %83 = vector.extract_strided_slice %81 {offsets = [0, 0], sizes = [2, 32], strides = [1, 1]} : vector<2x128xf32> to vector<2x32xf32>
    %84 = vector.extract_strided_slice %82 {offsets = [0, 0], sizes = [1, 32], strides = [1, 1]} : vector<1x96xf32> to vector<1x32xf32>
    %85 = vector.broadcast %84 : vector<1x32xf32> to vector<2x32xf32>
    %86 = arith.mulf %85, %65 : vector<2x32xf32>
    %87 = arith.addf %83, %86 : vector<2x32xf32>
    %88 = arith.negf %87 : vector<2x32xf32>
    %89 = math.exp %88 : vector<2x32xf32>
    %cst_25 = arith.constant 1.000000e+00 : f32
    %90 = vector.broadcast %cst_25 : f32 to vector<2x32xf32>
    %91 = arith.addf %90, %89 : vector<2x32xf32>
    %92 = arith.divf %90, %91 : vector<2x32xf32>
    %93 = vector.extract_strided_slice %81 {offsets = [0, 32], sizes = [2, 32], strides = [1, 1]} : vector<2x128xf32> to vector<2x32xf32>
    %94 = vector.extract_strided_slice %82 {offsets = [0, 32], sizes = [1, 32], strides = [1, 1]} : vector<1x96xf32> to vector<1x32xf32>
    %95 = vector.broadcast %94 : vector<1x32xf32> to vector<2x32xf32>
    %96 = arith.mulf %95, %65 : vector<2x32xf32>
    %97 = arith.addf %93, %96 : vector<2x32xf32>
    %98 = arith.negf %97 : vector<2x32xf32>
    %99 = math.exp %98 : vector<2x32xf32>
    %cst_26 = arith.constant 1.000000e+00 : f32
    %100 = vector.broadcast %cst_26 : f32 to vector<2x32xf32>
    %101 = arith.addf %100, %99 : vector<2x32xf32>
    %102 = arith.divf %100, %101 : vector<2x32xf32>
    %103 = vector.extract_strided_slice %81 {offsets = [0, 64], sizes = [2, 32], strides = [1, 1]} : vector<2x128xf32> to vector<2x32xf32>
    %104 = vector.extract_strided_slice %82 {offsets = [0, 64], sizes = [1, 32], strides = [1, 1]} : vector<1x96xf32> to vector<1x32xf32>
    %105 = vector.broadcast %104 : vector<1x32xf32> to vector<2x32xf32>
    %106 = arith.mulf %105, %65 : vector<2x32xf32>
    %107 = arith.addf %103, %106 : vector<2x32xf32>
    %108 = arith.negf %107 : vector<2x32xf32>
    %109 = math.exp %108 : vector<2x32xf32>
    %cst_27 = arith.constant 1.000000e+00 : f32
    %110 = vector.broadcast %cst_27 : f32 to vector<2x32xf32>
    %111 = arith.addf %110, %109 : vector<2x32xf32>
    %112 = arith.divf %110, %111 : vector<2x32xf32>
    %113 = arith.mulf %102, %65 : vector<2x32xf32>
    %114 = vector.extract_strided_slice %81 {offsets = [0, 96], sizes = [2, 32], strides = [1, 1]} : vector<2x128xf32> to vector<2x32xf32>
    %115 = math.tanh %114 : vector<2x32xf32>
    %116 = arith.mulf %92, %115 : vector<2x32xf32>
    %117 = arith.addf %113, %116 : vector<2x32xf32>
    %118 = vector.extract_strided_slice %9 {offsets = [1, 0], sizes = [1, 32], strides = [1, 1]} : vector<16x32xf32> to vector<1x32xf32>
    %119 = vector.broadcast %118 : vector<1x32xf32> to vector<2x32xf32>
    %120 = arith.mulf %119, %117 : vector<2x32xf32>
    %cst_28 = arith.constant 1.000000e+00 : f32
    %121 = vector.broadcast %cst_28 : f32 to vector<1x32xf32>
    %122 = arith.subf %121, %118 : vector<1x32xf32>
    %123 = vector.broadcast %122 : vector<1x32xf32> to vector<2x32xf32>
    %124 = arith.mulf %123, %65 : vector<2x32xf32>
    %125 = arith.addf %120, %124 : vector<2x32xf32>
    %126 = math.tanh %117 : vector<2x32xf32>
    %127 = arith.mulf %126, %112 : vector<2x32xf32>
    %128 = vector.broadcast %118 : vector<1x32xf32> to vector<2x32xf32>
    %129 = arith.mulf %128, %127 : vector<2x32xf32>
    %cst_29 = arith.constant 1.000000e+00 : f32
    %130 = vector.broadcast %cst_29 : f32 to vector<1x32xf32>
    %131 = arith.subf %130, %118 : vector<1x32xf32>
    %132 = vector.broadcast %131 : vector<1x32xf32> to vector<2x32xf32>
    %133 = arith.mulf %132, %74 : vector<2x32xf32>
    %134 = arith.addf %129, %133 : vector<2x32xf32>
    %135 = vector.extract_strided_slice %78 {offsets = [0, 128], sizes = [2, 128], strides = [1, 1]} : vector<2x256xf32> to vector<2x128xf32>
    %136 = vector.extract_strided_slice %8 {offsets = [1, 0], sizes = [1, 96], strides = [1, 1]} : vector<2x96xf32> to vector<1x96xf32>
    %137 = vector.extract_strided_slice %135 {offsets = [0, 0], sizes = [2, 32], strides = [1, 1]} : vector<2x128xf32> to vector<2x32xf32>
    %138 = vector.extract_strided_slice %136 {offsets = [0, 0], sizes = [1, 32], strides = [1, 1]} : vector<1x96xf32> to vector<1x32xf32>
    %139 = vector.broadcast %138 : vector<1x32xf32> to vector<2x32xf32>
    %140 = arith.mulf %139, %13 : vector<2x32xf32>
    %141 = arith.addf %137, %140 : vector<2x32xf32>
    %142 = arith.negf %141 : vector<2x32xf32>
    %143 = math.exp %142 : vector<2x32xf32>
    %cst_30 = arith.constant 1.000000e+00 : f32
    %144 = vector.broadcast %cst_30 : f32 to vector<2x32xf32>
    %145 = arith.addf %144, %143 : vector<2x32xf32>
    %146 = arith.divf %144, %145 : vector<2x32xf32>
    %147 = vector.extract_strided_slice %135 {offsets = [0, 32], sizes = [2, 32], strides = [1, 1]} : vector<2x128xf32> to vector<2x32xf32>
    %148 = vector.extract_strided_slice %136 {offsets = [0, 32], sizes = [1, 32], strides = [1, 1]} : vector<1x96xf32> to vector<1x32xf32>
    %149 = vector.broadcast %148 : vector<1x32xf32> to vector<2x32xf32>
    %150 = arith.mulf %149, %13 : vector<2x32xf32>
    %151 = arith.addf %147, %150 : vector<2x32xf32>
    %152 = arith.negf %151 : vector<2x32xf32>
    %153 = math.exp %152 : vector<2x32xf32>
    %cst_31 = arith.constant 1.000000e+00 : f32
    %154 = vector.broadcast %cst_31 : f32 to vector<2x32xf32>
    %155 = arith.addf %154, %153 : vector<2x32xf32>
    %156 = arith.divf %154, %155 : vector<2x32xf32>
    %157 = vector.extract_strided_slice %135 {offsets = [0, 64], sizes = [2, 32], strides = [1, 1]} : vector<2x128xf32> to vector<2x32xf32>
    %158 = vector.extract_strided_slice %136 {offsets = [0, 64], sizes = [1, 32], strides = [1, 1]} : vector<1x96xf32> to vector<1x32xf32>
    %159 = vector.broadcast %158 : vector<1x32xf32> to vector<2x32xf32>
    %160 = arith.mulf %159, %13 : vector<2x32xf32>
    %161 = arith.addf %157, %160 : vector<2x32xf32>
    %162 = arith.negf %161 : vector<2x32xf32>
    %163 = math.exp %162 : vector<2x32xf32>
    %cst_32 = arith.constant 1.000000e+00 : f32
    %164 = vector.broadcast %cst_32 : f32 to vector<2x32xf32>
    %165 = arith.addf %164, %163 : vector<2x32xf32>
    %166 = arith.divf %164, %165 : vector<2x32xf32>
    %167 = arith.mulf %156, %13 : vector<2x32xf32>
    %168 = vector.extract_strided_slice %135 {offsets = [0, 96], sizes = [2, 32], strides = [1, 1]} : vector<2x128xf32> to vector<2x32xf32>
    %169 = math.tanh %168 : vector<2x32xf32>
    %170 = arith.mulf %146, %169 : vector<2x32xf32>
    %171 = arith.addf %167, %170 : vector<2x32xf32>
    %172 = vector.extract_strided_slice %9 {offsets = [8, 0], sizes = [1, 32], strides = [1, 1]} : vector<16x32xf32> to vector<1x32xf32>
    %173 = vector.broadcast %172 : vector<1x32xf32> to vector<2x32xf32>
    %174 = arith.mulf %173, %171 : vector<2x32xf32>
    %cst_33 = arith.constant 1.000000e+00 : f32
    %175 = vector.broadcast %cst_33 : f32 to vector<1x32xf32>
    %176 = arith.subf %175, %172 : vector<1x32xf32>
    %177 = vector.broadcast %176 : vector<1x32xf32> to vector<2x32xf32>
    %178 = arith.mulf %177, %13 : vector<2x32xf32>
    %179 = arith.addf %174, %178 : vector<2x32xf32>
    %180 = math.tanh %171 : vector<2x32xf32>
    %181 = arith.mulf %180, %166 : vector<2x32xf32>
    %182 = vector.broadcast %172 : vector<1x32xf32> to vector<2x32xf32>
    %183 = arith.mulf %182, %181 : vector<2x32xf32>
    %cst_34 = arith.constant 1.000000e+00 : f32
    %184 = vector.broadcast %cst_34 : f32 to vector<1x32xf32>
    %185 = arith.subf %184, %172 : vector<1x32xf32>
    %186 = vector.broadcast %185 : vector<1x32xf32> to vector<2x32xf32>
    %187 = arith.mulf %186, %11 : vector<2x32xf32>
    %188 = arith.addf %183, %187 : vector<2x32xf32>
    %189 = arith.addf %14, %188 : vector<2x32xf32>
    %190 = tpu.concatenate %134, %188 in 1 : vector<2x32xf32>, vector<2x32xf32> -> vector<2x64xf32>
    %cst_35 = arith.constant dense<0.000000e+00> : vector<2x256xf32>
    %191 = tpu.matmul %190, %6, %cst_35 {dimension_numbers = #tpu.dot_dimension_numbers<[1], [0], [0], [1], [0, 0, 1, 1], [], []>} : vector<2x64xf32>, vector<64x256xf32>, vector<2x256xf32> -> vector<2x256xf32>
    %192 = vector.broadcast %7 : vector<1x256xf32> to vector<2x256xf32>
    %193 = arith.addf %191, %192 : vector<2x256xf32>
    %194 = vector.extract_strided_slice %193 {offsets = [0, 0], sizes = [2, 128], strides = [1, 1]} : vector<2x256xf32> to vector<2x128xf32>
    %195 = vector.extract_strided_slice %5 {offsets = [4, 0], sizes = [2, 128], strides = [1, 1]} : vector<16x128xf32> to vector<2x128xf32>
    %196 = arith.addf %194, %195 : vector<2x128xf32>
    %197 = vector.extract_strided_slice %8 {offsets = [0, 0], sizes = [1, 96], strides = [1, 1]} : vector<2x96xf32> to vector<1x96xf32>
    %198 = vector.extract_strided_slice %196 {offsets = [0, 0], sizes = [2, 32], strides = [1, 1]} : vector<2x128xf32> to vector<2x32xf32>
    %199 = vector.extract_strided_slice %197 {offsets = [0, 0], sizes = [1, 32], strides = [1, 1]} : vector<1x96xf32> to vector<1x32xf32>
    %200 = vector.broadcast %199 : vector<1x32xf32> to vector<2x32xf32>
    %201 = arith.mulf %200, %125 : vector<2x32xf32>
    %202 = arith.addf %198, %201 : vector<2x32xf32>
    %203 = arith.negf %202 : vector<2x32xf32>
    %204 = math.exp %203 : vector<2x32xf32>
    %cst_36 = arith.constant 1.000000e+00 : f32
    %205 = vector.broadcast %cst_36 : f32 to vector<2x32xf32>
    %206 = arith.addf %205, %204 : vector<2x32xf32>
    %207 = arith.divf %205, %206 : vector<2x32xf32>
    %208 = vector.extract_strided_slice %196 {offsets = [0, 32], sizes = [2, 32], strides = [1, 1]} : vector<2x128xf32> to vector<2x32xf32>
    %209 = vector.extract_strided_slice %197 {offsets = [0, 32], sizes = [1, 32], strides = [1, 1]} : vector<1x96xf32> to vector<1x32xf32>
    %210 = vector.broadcast %209 : vector<1x32xf32> to vector<2x32xf32>
    %211 = arith.mulf %210, %125 : vector<2x32xf32>
    %212 = arith.addf %208, %211 : vector<2x32xf32>
    %213 = arith.negf %212 : vector<2x32xf32>
    %214 = math.exp %213 : vector<2x32xf32>
    %cst_37 = arith.constant 1.000000e+00 : f32
    %215 = vector.broadcast %cst_37 : f32 to vector<2x32xf32>
    %216 = arith.addf %215, %214 : vector<2x32xf32>
    %217 = arith.divf %215, %216 : vector<2x32xf32>
    %218 = vector.extract_strided_slice %196 {offsets = [0, 64], sizes = [2, 32], strides = [1, 1]} : vector<2x128xf32> to vector<2x32xf32>
    %219 = vector.extract_strided_slice %197 {offsets = [0, 64], sizes = [1, 32], strides = [1, 1]} : vector<1x96xf32> to vector<1x32xf32>
    %220 = vector.broadcast %219 : vector<1x32xf32> to vector<2x32xf32>
    %221 = arith.mulf %220, %125 : vector<2x32xf32>
    %222 = arith.addf %218, %221 : vector<2x32xf32>
    %223 = arith.negf %222 : vector<2x32xf32>
    %224 = math.exp %223 : vector<2x32xf32>
    %cst_38 = arith.constant 1.000000e+00 : f32
    %225 = vector.broadcast %cst_38 : f32 to vector<2x32xf32>
    %226 = arith.addf %225, %224 : vector<2x32xf32>
    %227 = arith.divf %225, %226 : vector<2x32xf32>
    %228 = arith.mulf %217, %125 : vector<2x32xf32>
    %229 = vector.extract_strided_slice %196 {offsets = [0, 96], sizes = [2, 32], strides = [1, 1]} : vector<2x128xf32> to vector<2x32xf32>
    %230 = math.tanh %229 : vector<2x32xf32>
    %231 = arith.mulf %207, %230 : vector<2x32xf32>
    %232 = arith.addf %228, %231 : vector<2x32xf32>
    %233 = vector.extract_strided_slice %9 {offsets = [2, 0], sizes = [1, 32], strides = [1, 1]} : vector<16x32xf32> to vector<1x32xf32>
    %234 = vector.broadcast %233 : vector<1x32xf32> to vector<2x32xf32>
    %235 = arith.mulf %234, %232 : vector<2x32xf32>
    %cst_39 = arith.constant 1.000000e+00 : f32
    %236 = vector.broadcast %cst_39 : f32 to vector<1x32xf32>
    %237 = arith.subf %236, %233 : vector<1x32xf32>
    %238 = vector.broadcast %237 : vector<1x32xf32> to vector<2x32xf32>
    %239 = arith.mulf %238, %125 : vector<2x32xf32>
    %240 = arith.addf %235, %239 : vector<2x32xf32>
    %241 = math.tanh %232 : vector<2x32xf32>
    %242 = arith.mulf %241, %227 : vector<2x32xf32>
    %243 = vector.broadcast %233 : vector<1x32xf32> to vector<2x32xf32>
    %244 = arith.mulf %243, %242 : vector<2x32xf32>
    %cst_40 = arith.constant 1.000000e+00 : f32
    %245 = vector.broadcast %cst_40 : f32 to vector<1x32xf32>
    %246 = arith.subf %245, %233 : vector<1x32xf32>
    %247 = vector.broadcast %246 : vector<1x32xf32> to vector<2x32xf32>
    %248 = arith.mulf %247, %134 : vector<2x32xf32>
    %249 = arith.addf %244, %248 : vector<2x32xf32>
    %250 = vector.extract_strided_slice %193 {offsets = [0, 128], sizes = [2, 128], strides = [1, 1]} : vector<2x256xf32> to vector<2x128xf32>
    %251 = vector.extract_strided_slice %8 {offsets = [1, 0], sizes = [1, 96], strides = [1, 1]} : vector<2x96xf32> to vector<1x96xf32>
    %252 = vector.extract_strided_slice %250 {offsets = [0, 0], sizes = [2, 32], strides = [1, 1]} : vector<2x128xf32> to vector<2x32xf32>
    %253 = vector.extract_strided_slice %251 {offsets = [0, 0], sizes = [1, 32], strides = [1, 1]} : vector<1x96xf32> to vector<1x32xf32>
    %254 = vector.broadcast %253 : vector<1x32xf32> to vector<2x32xf32>
    %255 = arith.mulf %254, %179 : vector<2x32xf32>
    %256 = arith.addf %252, %255 : vector<2x32xf32>
    %257 = arith.negf %256 : vector<2x32xf32>
    %258 = math.exp %257 : vector<2x32xf32>
    %cst_41 = arith.constant 1.000000e+00 : f32
    %259 = vector.broadcast %cst_41 : f32 to vector<2x32xf32>
    %260 = arith.addf %259, %258 : vector<2x32xf32>
    %261 = arith.divf %259, %260 : vector<2x32xf32>
    %262 = vector.extract_strided_slice %250 {offsets = [0, 32], sizes = [2, 32], strides = [1, 1]} : vector<2x128xf32> to vector<2x32xf32>
    %263 = vector.extract_strided_slice %251 {offsets = [0, 32], sizes = [1, 32], strides = [1, 1]} : vector<1x96xf32> to vector<1x32xf32>
    %264 = vector.broadcast %263 : vector<1x32xf32> to vector<2x32xf32>
    %265 = arith.mulf %264, %179 : vector<2x32xf32>
    %266 = arith.addf %262, %265 : vector<2x32xf32>
    %267 = arith.negf %266 : vector<2x32xf32>
    %268 = math.exp %267 : vector<2x32xf32>
    %cst_42 = arith.constant 1.000000e+00 : f32
    %269 = vector.broadcast %cst_42 : f32 to vector<2x32xf32>
    %270 = arith.addf %269, %268 : vector<2x32xf32>
    %271 = arith.divf %269, %270 : vector<2x32xf32>
    %272 = vector.extract_strided_slice %250 {offsets = [0, 64], sizes = [2, 32], strides = [1, 1]} : vector<2x128xf32> to vector<2x32xf32>
    %273 = vector.extract_strided_slice %251 {offsets = [0, 64], sizes = [1, 32], strides = [1, 1]} : vector<1x96xf32> to vector<1x32xf32>
    %274 = vector.broadcast %273 : vector<1x32xf32> to vector<2x32xf32>
    %275 = arith.mulf %274, %179 : vector<2x32xf32>
    %276 = arith.addf %272, %275 : vector<2x32xf32>
    %277 = arith.negf %276 : vector<2x32xf32>
    %278 = math.exp %277 : vector<2x32xf32>
    %cst_43 = arith.constant 1.000000e+00 : f32
    %279 = vector.broadcast %cst_43 : f32 to vector<2x32xf32>
    %280 = arith.addf %279, %278 : vector<2x32xf32>
    %281 = arith.divf %279, %280 : vector<2x32xf32>
    %282 = arith.mulf %271, %179 : vector<2x32xf32>
    %283 = vector.extract_strided_slice %250 {offsets = [0, 96], sizes = [2, 32], strides = [1, 1]} : vector<2x128xf32> to vector<2x32xf32>
    %284 = math.tanh %283 : vector<2x32xf32>
    %285 = arith.mulf %261, %284 : vector<2x32xf32>
    %286 = arith.addf %282, %285 : vector<2x32xf32>
    %287 = vector.extract_strided_slice %9 {offsets = [9, 0], sizes = [1, 32], strides = [1, 1]} : vector<16x32xf32> to vector<1x32xf32>
    %288 = vector.broadcast %287 : vector<1x32xf32> to vector<2x32xf32>
    %289 = arith.mulf %288, %286 : vector<2x32xf32>
    %cst_44 = arith.constant 1.000000e+00 : f32
    %290 = vector.broadcast %cst_44 : f32 to vector<1x32xf32>
    %291 = arith.subf %290, %287 : vector<1x32xf32>
    %292 = vector.broadcast %291 : vector<1x32xf32> to vector<2x32xf32>
    %293 = arith.mulf %292, %179 : vector<2x32xf32>
    %294 = arith.addf %289, %293 : vector<2x32xf32>
    %295 = math.tanh %286 : vector<2x32xf32>
    %296 = arith.mulf %295, %281 : vector<2x32xf32>
    %297 = vector.broadcast %287 : vector<1x32xf32> to vector<2x32xf32>
    %298 = arith.mulf %297, %296 : vector<2x32xf32>
    %cst_45 = arith.constant 1.000000e+00 : f32
    %299 = vector.broadcast %cst_45 : f32 to vector<1x32xf32>
    %300 = arith.subf %299, %287 : vector<1x32xf32>
    %301 = vector.broadcast %300 : vector<1x32xf32> to vector<2x32xf32>
    %302 = arith.mulf %301, %188 : vector<2x32xf32>
    %303 = arith.addf %298, %302 : vector<2x32xf32>
    %304 = arith.addf %189, %303 : vector<2x32xf32>
    %305 = tpu.concatenate %249, %303 in 1 : vector<2x32xf32>, vector<2x32xf32> -> vector<2x64xf32>
    %cst_46 = arith.constant dense<0.000000e+00> : vector<2x256xf32>
    %306 = tpu.matmul %305, %6, %cst_46 {dimension_numbers = #tpu.dot_dimension_numbers<[1], [0], [0], [1], [0, 0, 1, 1], [], []>} : vector<2x64xf32>, vector<64x256xf32>, vector<2x256xf32> -> vector<2x256xf32>
    %307 = vector.broadcast %7 : vector<1x256xf32> to vector<2x256xf32>
    %308 = arith.addf %306, %307 : vector<2x256xf32>
    %309 = vector.extract_strided_slice %308 {offsets = [0, 0], sizes = [2, 128], strides = [1, 1]} : vector<2x256xf32> to vector<2x128xf32>
    %310 = vector.extract_strided_slice %5 {offsets = [6, 0], sizes = [2, 128], strides = [1, 1]} : vector<16x128xf32> to vector<2x128xf32>
    %311 = arith.addf %309, %310 : vector<2x128xf32>
    %312 = vector.extract_strided_slice %8 {offsets = [0, 0], sizes = [1, 96], strides = [1, 1]} : vector<2x96xf32> to vector<1x96xf32>
    %313 = vector.extract_strided_slice %311 {offsets = [0, 0], sizes = [2, 32], strides = [1, 1]} : vector<2x128xf32> to vector<2x32xf32>
    %314 = vector.extract_strided_slice %312 {offsets = [0, 0], sizes = [1, 32], strides = [1, 1]} : vector<1x96xf32> to vector<1x32xf32>
    %315 = vector.broadcast %314 : vector<1x32xf32> to vector<2x32xf32>
    %316 = arith.mulf %315, %240 : vector<2x32xf32>
    %317 = arith.addf %313, %316 : vector<2x32xf32>
    %318 = arith.negf %317 : vector<2x32xf32>
    %319 = math.exp %318 : vector<2x32xf32>
    %cst_47 = arith.constant 1.000000e+00 : f32
    %320 = vector.broadcast %cst_47 : f32 to vector<2x32xf32>
    %321 = arith.addf %320, %319 : vector<2x32xf32>
    %322 = arith.divf %320, %321 : vector<2x32xf32>
    %323 = vector.extract_strided_slice %311 {offsets = [0, 32], sizes = [2, 32], strides = [1, 1]} : vector<2x128xf32> to vector<2x32xf32>
    %324 = vector.extract_strided_slice %312 {offsets = [0, 32], sizes = [1, 32], strides = [1, 1]} : vector<1x96xf32> to vector<1x32xf32>
    %325 = vector.broadcast %324 : vector<1x32xf32> to vector<2x32xf32>
    %326 = arith.mulf %325, %240 : vector<2x32xf32>
    %327 = arith.addf %323, %326 : vector<2x32xf32>
    %328 = arith.negf %327 : vector<2x32xf32>
    %329 = math.exp %328 : vector<2x32xf32>
    %cst_48 = arith.constant 1.000000e+00 : f32
    %330 = vector.broadcast %cst_48 : f32 to vector<2x32xf32>
    %331 = arith.addf %330, %329 : vector<2x32xf32>
    %332 = arith.divf %330, %331 : vector<2x32xf32>
    %333 = vector.extract_strided_slice %311 {offsets = [0, 64], sizes = [2, 32], strides = [1, 1]} : vector<2x128xf32> to vector<2x32xf32>
    %334 = vector.extract_strided_slice %312 {offsets = [0, 64], sizes = [1, 32], strides = [1, 1]} : vector<1x96xf32> to vector<1x32xf32>
    %335 = vector.broadcast %334 : vector<1x32xf32> to vector<2x32xf32>
    %336 = arith.mulf %335, %240 : vector<2x32xf32>
    %337 = arith.addf %333, %336 : vector<2x32xf32>
    %338 = arith.negf %337 : vector<2x32xf32>
    %339 = math.exp %338 : vector<2x32xf32>
    %cst_49 = arith.constant 1.000000e+00 : f32
    %340 = vector.broadcast %cst_49 : f32 to vector<2x32xf32>
    %341 = arith.addf %340, %339 : vector<2x32xf32>
    %342 = arith.divf %340, %341 : vector<2x32xf32>
    %343 = arith.mulf %332, %240 : vector<2x32xf32>
    %344 = vector.extract_strided_slice %311 {offsets = [0, 96], sizes = [2, 32], strides = [1, 1]} : vector<2x128xf32> to vector<2x32xf32>
    %345 = math.tanh %344 : vector<2x32xf32>
    %346 = arith.mulf %322, %345 : vector<2x32xf32>
    %347 = arith.addf %343, %346 : vector<2x32xf32>
    %348 = vector.extract_strided_slice %9 {offsets = [3, 0], sizes = [1, 32], strides = [1, 1]} : vector<16x32xf32> to vector<1x32xf32>
    %349 = vector.broadcast %348 : vector<1x32xf32> to vector<2x32xf32>
    %350 = arith.mulf %349, %347 : vector<2x32xf32>
    %cst_50 = arith.constant 1.000000e+00 : f32
    %351 = vector.broadcast %cst_50 : f32 to vector<1x32xf32>
    %352 = arith.subf %351, %348 : vector<1x32xf32>
    %353 = vector.broadcast %352 : vector<1x32xf32> to vector<2x32xf32>
    %354 = arith.mulf %353, %240 : vector<2x32xf32>
    %355 = arith.addf %350, %354 : vector<2x32xf32>
    %356 = math.tanh %347 : vector<2x32xf32>
    %357 = arith.mulf %356, %342 : vector<2x32xf32>
    %358 = vector.broadcast %348 : vector<1x32xf32> to vector<2x32xf32>
    %359 = arith.mulf %358, %357 : vector<2x32xf32>
    %cst_51 = arith.constant 1.000000e+00 : f32
    %360 = vector.broadcast %cst_51 : f32 to vector<1x32xf32>
    %361 = arith.subf %360, %348 : vector<1x32xf32>
    %362 = vector.broadcast %361 : vector<1x32xf32> to vector<2x32xf32>
    %363 = arith.mulf %362, %249 : vector<2x32xf32>
    %364 = arith.addf %359, %363 : vector<2x32xf32>
    %365 = vector.extract_strided_slice %308 {offsets = [0, 128], sizes = [2, 128], strides = [1, 1]} : vector<2x256xf32> to vector<2x128xf32>
    %366 = vector.extract_strided_slice %8 {offsets = [1, 0], sizes = [1, 96], strides = [1, 1]} : vector<2x96xf32> to vector<1x96xf32>
    %367 = vector.extract_strided_slice %365 {offsets = [0, 0], sizes = [2, 32], strides = [1, 1]} : vector<2x128xf32> to vector<2x32xf32>
    %368 = vector.extract_strided_slice %366 {offsets = [0, 0], sizes = [1, 32], strides = [1, 1]} : vector<1x96xf32> to vector<1x32xf32>
    %369 = vector.broadcast %368 : vector<1x32xf32> to vector<2x32xf32>
    %370 = arith.mulf %369, %294 : vector<2x32xf32>
    %371 = arith.addf %367, %370 : vector<2x32xf32>
    %372 = arith.negf %371 : vector<2x32xf32>
    %373 = math.exp %372 : vector<2x32xf32>
    %cst_52 = arith.constant 1.000000e+00 : f32
    %374 = vector.broadcast %cst_52 : f32 to vector<2x32xf32>
    %375 = arith.addf %374, %373 : vector<2x32xf32>
    %376 = arith.divf %374, %375 : vector<2x32xf32>
    %377 = vector.extract_strided_slice %365 {offsets = [0, 32], sizes = [2, 32], strides = [1, 1]} : vector<2x128xf32> to vector<2x32xf32>
    %378 = vector.extract_strided_slice %366 {offsets = [0, 32], sizes = [1, 32], strides = [1, 1]} : vector<1x96xf32> to vector<1x32xf32>
    %379 = vector.broadcast %378 : vector<1x32xf32> to vector<2x32xf32>
    %380 = arith.mulf %379, %294 : vector<2x32xf32>
    %381 = arith.addf %377, %380 : vector<2x32xf32>
    %382 = arith.negf %381 : vector<2x32xf32>
    %383 = math.exp %382 : vector<2x32xf32>
    %cst_53 = arith.constant 1.000000e+00 : f32
    %384 = vector.broadcast %cst_53 : f32 to vector<2x32xf32>
    %385 = arith.addf %384, %383 : vector<2x32xf32>
    %386 = arith.divf %384, %385 : vector<2x32xf32>
    %387 = vector.extract_strided_slice %365 {offsets = [0, 64], sizes = [2, 32], strides = [1, 1]} : vector<2x128xf32> to vector<2x32xf32>
    %388 = vector.extract_strided_slice %366 {offsets = [0, 64], sizes = [1, 32], strides = [1, 1]} : vector<1x96xf32> to vector<1x32xf32>
    %389 = vector.broadcast %388 : vector<1x32xf32> to vector<2x32xf32>
    %390 = arith.mulf %389, %294 : vector<2x32xf32>
    %391 = arith.addf %387, %390 : vector<2x32xf32>
    %392 = arith.negf %391 : vector<2x32xf32>
    %393 = math.exp %392 : vector<2x32xf32>
    %cst_54 = arith.constant 1.000000e+00 : f32
    %394 = vector.broadcast %cst_54 : f32 to vector<2x32xf32>
    %395 = arith.addf %394, %393 : vector<2x32xf32>
    %396 = arith.divf %394, %395 : vector<2x32xf32>
    %397 = arith.mulf %386, %294 : vector<2x32xf32>
    %398 = vector.extract_strided_slice %365 {offsets = [0, 96], sizes = [2, 32], strides = [1, 1]} : vector<2x128xf32> to vector<2x32xf32>
    %399 = math.tanh %398 : vector<2x32xf32>
    %400 = arith.mulf %376, %399 : vector<2x32xf32>
    %401 = arith.addf %397, %400 : vector<2x32xf32>
    %402 = vector.extract_strided_slice %9 {offsets = [10, 0], sizes = [1, 32], strides = [1, 1]} : vector<16x32xf32> to vector<1x32xf32>
    %403 = vector.broadcast %402 : vector<1x32xf32> to vector<2x32xf32>
    %404 = arith.mulf %403, %401 : vector<2x32xf32>
    %cst_55 = arith.constant 1.000000e+00 : f32
    %405 = vector.broadcast %cst_55 : f32 to vector<1x32xf32>
    %406 = arith.subf %405, %402 : vector<1x32xf32>
    %407 = vector.broadcast %406 : vector<1x32xf32> to vector<2x32xf32>
    %408 = arith.mulf %407, %294 : vector<2x32xf32>
    %409 = arith.addf %404, %408 : vector<2x32xf32>
    %410 = math.tanh %401 : vector<2x32xf32>
    %411 = arith.mulf %410, %396 : vector<2x32xf32>
    %412 = vector.broadcast %402 : vector<1x32xf32> to vector<2x32xf32>
    %413 = arith.mulf %412, %411 : vector<2x32xf32>
    %cst_56 = arith.constant 1.000000e+00 : f32
    %414 = vector.broadcast %cst_56 : f32 to vector<1x32xf32>
    %415 = arith.subf %414, %402 : vector<1x32xf32>
    %416 = vector.broadcast %415 : vector<1x32xf32> to vector<2x32xf32>
    %417 = arith.mulf %416, %303 : vector<2x32xf32>
    %418 = arith.addf %413, %417 : vector<2x32xf32>
    %419 = arith.addf %304, %418 : vector<2x32xf32>
    %420 = tpu.concatenate %364, %418 in 1 : vector<2x32xf32>, vector<2x32xf32> -> vector<2x64xf32>
    %cst_57 = arith.constant dense<0.000000e+00> : vector<2x256xf32>
    %421 = tpu.matmul %420, %6, %cst_57 {dimension_numbers = #tpu.dot_dimension_numbers<[1], [0], [0], [1], [0, 0, 1, 1], [], []>} : vector<2x64xf32>, vector<64x256xf32>, vector<2x256xf32> -> vector<2x256xf32>
    %422 = vector.broadcast %7 : vector<1x256xf32> to vector<2x256xf32>
    %423 = arith.addf %421, %422 : vector<2x256xf32>
    %424 = vector.extract_strided_slice %423 {offsets = [0, 0], sizes = [2, 128], strides = [1, 1]} : vector<2x256xf32> to vector<2x128xf32>
    %425 = vector.extract_strided_slice %5 {offsets = [8, 0], sizes = [2, 128], strides = [1, 1]} : vector<16x128xf32> to vector<2x128xf32>
    %426 = arith.addf %424, %425 : vector<2x128xf32>
    %427 = vector.extract_strided_slice %8 {offsets = [0, 0], sizes = [1, 96], strides = [1, 1]} : vector<2x96xf32> to vector<1x96xf32>
    %428 = vector.extract_strided_slice %426 {offsets = [0, 0], sizes = [2, 32], strides = [1, 1]} : vector<2x128xf32> to vector<2x32xf32>
    %429 = vector.extract_strided_slice %427 {offsets = [0, 0], sizes = [1, 32], strides = [1, 1]} : vector<1x96xf32> to vector<1x32xf32>
    %430 = vector.broadcast %429 : vector<1x32xf32> to vector<2x32xf32>
    %431 = arith.mulf %430, %355 : vector<2x32xf32>
    %432 = arith.addf %428, %431 : vector<2x32xf32>
    %433 = arith.negf %432 : vector<2x32xf32>
    %434 = math.exp %433 : vector<2x32xf32>
    %cst_58 = arith.constant 1.000000e+00 : f32
    %435 = vector.broadcast %cst_58 : f32 to vector<2x32xf32>
    %436 = arith.addf %435, %434 : vector<2x32xf32>
    %437 = arith.divf %435, %436 : vector<2x32xf32>
    %438 = vector.extract_strided_slice %426 {offsets = [0, 32], sizes = [2, 32], strides = [1, 1]} : vector<2x128xf32> to vector<2x32xf32>
    %439 = vector.extract_strided_slice %427 {offsets = [0, 32], sizes = [1, 32], strides = [1, 1]} : vector<1x96xf32> to vector<1x32xf32>
    %440 = vector.broadcast %439 : vector<1x32xf32> to vector<2x32xf32>
    %441 = arith.mulf %440, %355 : vector<2x32xf32>
    %442 = arith.addf %438, %441 : vector<2x32xf32>
    %443 = arith.negf %442 : vector<2x32xf32>
    %444 = math.exp %443 : vector<2x32xf32>
    %cst_59 = arith.constant 1.000000e+00 : f32
    %445 = vector.broadcast %cst_59 : f32 to vector<2x32xf32>
    %446 = arith.addf %445, %444 : vector<2x32xf32>
    %447 = arith.divf %445, %446 : vector<2x32xf32>
    %448 = vector.extract_strided_slice %426 {offsets = [0, 64], sizes = [2, 32], strides = [1, 1]} : vector<2x128xf32> to vector<2x32xf32>
    %449 = vector.extract_strided_slice %427 {offsets = [0, 64], sizes = [1, 32], strides = [1, 1]} : vector<1x96xf32> to vector<1x32xf32>
    %450 = vector.broadcast %449 : vector<1x32xf32> to vector<2x32xf32>
    %451 = arith.mulf %450, %355 : vector<2x32xf32>
    %452 = arith.addf %448, %451 : vector<2x32xf32>
    %453 = arith.negf %452 : vector<2x32xf32>
    %454 = math.exp %453 : vector<2x32xf32>
    %cst_60 = arith.constant 1.000000e+00 : f32
    %455 = vector.broadcast %cst_60 : f32 to vector<2x32xf32>
    %456 = arith.addf %455, %454 : vector<2x32xf32>
    %457 = arith.divf %455, %456 : vector<2x32xf32>
    %458 = arith.mulf %447, %355 : vector<2x32xf32>
    %459 = vector.extract_strided_slice %426 {offsets = [0, 96], sizes = [2, 32], strides = [1, 1]} : vector<2x128xf32> to vector<2x32xf32>
    %460 = math.tanh %459 : vector<2x32xf32>
    %461 = arith.mulf %437, %460 : vector<2x32xf32>
    %462 = arith.addf %458, %461 : vector<2x32xf32>
    %463 = vector.extract_strided_slice %9 {offsets = [4, 0], sizes = [1, 32], strides = [1, 1]} : vector<16x32xf32> to vector<1x32xf32>
    %464 = vector.broadcast %463 : vector<1x32xf32> to vector<2x32xf32>
    %465 = arith.mulf %464, %462 : vector<2x32xf32>
    %cst_61 = arith.constant 1.000000e+00 : f32
    %466 = vector.broadcast %cst_61 : f32 to vector<1x32xf32>
    %467 = arith.subf %466, %463 : vector<1x32xf32>
    %468 = vector.broadcast %467 : vector<1x32xf32> to vector<2x32xf32>
    %469 = arith.mulf %468, %355 : vector<2x32xf32>
    %470 = arith.addf %465, %469 : vector<2x32xf32>
    %471 = math.tanh %462 : vector<2x32xf32>
    %472 = arith.mulf %471, %457 : vector<2x32xf32>
    %473 = vector.broadcast %463 : vector<1x32xf32> to vector<2x32xf32>
    %474 = arith.mulf %473, %472 : vector<2x32xf32>
    %cst_62 = arith.constant 1.000000e+00 : f32
    %475 = vector.broadcast %cst_62 : f32 to vector<1x32xf32>
    %476 = arith.subf %475, %463 : vector<1x32xf32>
    %477 = vector.broadcast %476 : vector<1x32xf32> to vector<2x32xf32>
    %478 = arith.mulf %477, %364 : vector<2x32xf32>
    %479 = arith.addf %474, %478 : vector<2x32xf32>
    %480 = vector.extract_strided_slice %423 {offsets = [0, 128], sizes = [2, 128], strides = [1, 1]} : vector<2x256xf32> to vector<2x128xf32>
    %481 = vector.extract_strided_slice %8 {offsets = [1, 0], sizes = [1, 96], strides = [1, 1]} : vector<2x96xf32> to vector<1x96xf32>
    %482 = vector.extract_strided_slice %480 {offsets = [0, 0], sizes = [2, 32], strides = [1, 1]} : vector<2x128xf32> to vector<2x32xf32>
    %483 = vector.extract_strided_slice %481 {offsets = [0, 0], sizes = [1, 32], strides = [1, 1]} : vector<1x96xf32> to vector<1x32xf32>
    %484 = vector.broadcast %483 : vector<1x32xf32> to vector<2x32xf32>
    %485 = arith.mulf %484, %409 : vector<2x32xf32>
    %486 = arith.addf %482, %485 : vector<2x32xf32>
    %487 = arith.negf %486 : vector<2x32xf32>
    %488 = math.exp %487 : vector<2x32xf32>
    %cst_63 = arith.constant 1.000000e+00 : f32
    %489 = vector.broadcast %cst_63 : f32 to vector<2x32xf32>
    %490 = arith.addf %489, %488 : vector<2x32xf32>
    %491 = arith.divf %489, %490 : vector<2x32xf32>
    %492 = vector.extract_strided_slice %480 {offsets = [0, 32], sizes = [2, 32], strides = [1, 1]} : vector<2x128xf32> to vector<2x32xf32>
    %493 = vector.extract_strided_slice %481 {offsets = [0, 32], sizes = [1, 32], strides = [1, 1]} : vector<1x96xf32> to vector<1x32xf32>
    %494 = vector.broadcast %493 : vector<1x32xf32> to vector<2x32xf32>
    %495 = arith.mulf %494, %409 : vector<2x32xf32>
    %496 = arith.addf %492, %495 : vector<2x32xf32>
    %497 = arith.negf %496 : vector<2x32xf32>
    %498 = math.exp %497 : vector<2x32xf32>
    %cst_64 = arith.constant 1.000000e+00 : f32
    %499 = vector.broadcast %cst_64 : f32 to vector<2x32xf32>
    %500 = arith.addf %499, %498 : vector<2x32xf32>
    %501 = arith.divf %499, %500 : vector<2x32xf32>
    %502 = vector.extract_strided_slice %480 {offsets = [0, 64], sizes = [2, 32], strides = [1, 1]} : vector<2x128xf32> to vector<2x32xf32>
    %503 = vector.extract_strided_slice %481 {offsets = [0, 64], sizes = [1, 32], strides = [1, 1]} : vector<1x96xf32> to vector<1x32xf32>
    %504 = vector.broadcast %503 : vector<1x32xf32> to vector<2x32xf32>
    %505 = arith.mulf %504, %409 : vector<2x32xf32>
    %506 = arith.addf %502, %505 : vector<2x32xf32>
    %507 = arith.negf %506 : vector<2x32xf32>
    %508 = math.exp %507 : vector<2x32xf32>
    %cst_65 = arith.constant 1.000000e+00 : f32
    %509 = vector.broadcast %cst_65 : f32 to vector<2x32xf32>
    %510 = arith.addf %509, %508 : vector<2x32xf32>
    %511 = arith.divf %509, %510 : vector<2x32xf32>
    %512 = arith.mulf %501, %409 : vector<2x32xf32>
    %513 = vector.extract_strided_slice %480 {offsets = [0, 96], sizes = [2, 32], strides = [1, 1]} : vector<2x128xf32> to vector<2x32xf32>
    %514 = math.tanh %513 : vector<2x32xf32>
    %515 = arith.mulf %491, %514 : vector<2x32xf32>
    %516 = arith.addf %512, %515 : vector<2x32xf32>
    %517 = vector.extract_strided_slice %9 {offsets = [11, 0], sizes = [1, 32], strides = [1, 1]} : vector<16x32xf32> to vector<1x32xf32>
    %518 = vector.broadcast %517 : vector<1x32xf32> to vector<2x32xf32>
    %519 = arith.mulf %518, %516 : vector<2x32xf32>
    %cst_66 = arith.constant 1.000000e+00 : f32
    %520 = vector.broadcast %cst_66 : f32 to vector<1x32xf32>
    %521 = arith.subf %520, %517 : vector<1x32xf32>
    %522 = vector.broadcast %521 : vector<1x32xf32> to vector<2x32xf32>
    %523 = arith.mulf %522, %409 : vector<2x32xf32>
    %524 = arith.addf %519, %523 : vector<2x32xf32>
    %525 = math.tanh %516 : vector<2x32xf32>
    %526 = arith.mulf %525, %511 : vector<2x32xf32>
    %527 = vector.broadcast %517 : vector<1x32xf32> to vector<2x32xf32>
    %528 = arith.mulf %527, %526 : vector<2x32xf32>
    %cst_67 = arith.constant 1.000000e+00 : f32
    %529 = vector.broadcast %cst_67 : f32 to vector<1x32xf32>
    %530 = arith.subf %529, %517 : vector<1x32xf32>
    %531 = vector.broadcast %530 : vector<1x32xf32> to vector<2x32xf32>
    %532 = arith.mulf %531, %418 : vector<2x32xf32>
    %533 = arith.addf %528, %532 : vector<2x32xf32>
    %534 = arith.addf %419, %533 : vector<2x32xf32>
    %535 = tpu.concatenate %479, %533 in 1 : vector<2x32xf32>, vector<2x32xf32> -> vector<2x64xf32>
    %cst_68 = arith.constant dense<0.000000e+00> : vector<2x256xf32>
    %536 = tpu.matmul %535, %6, %cst_68 {dimension_numbers = #tpu.dot_dimension_numbers<[1], [0], [0], [1], [0, 0, 1, 1], [], []>} : vector<2x64xf32>, vector<64x256xf32>, vector<2x256xf32> -> vector<2x256xf32>
    %537 = vector.broadcast %7 : vector<1x256xf32> to vector<2x256xf32>
    %538 = arith.addf %536, %537 : vector<2x256xf32>
    %539 = vector.extract_strided_slice %538 {offsets = [0, 0], sizes = [2, 128], strides = [1, 1]} : vector<2x256xf32> to vector<2x128xf32>
    %540 = vector.extract_strided_slice %5 {offsets = [10, 0], sizes = [2, 128], strides = [1, 1]} : vector<16x128xf32> to vector<2x128xf32>
    %541 = arith.addf %539, %540 : vector<2x128xf32>
    %542 = vector.extract_strided_slice %8 {offsets = [0, 0], sizes = [1, 96], strides = [1, 1]} : vector<2x96xf32> to vector<1x96xf32>
    %543 = vector.extract_strided_slice %541 {offsets = [0, 0], sizes = [2, 32], strides = [1, 1]} : vector<2x128xf32> to vector<2x32xf32>
    %544 = vector.extract_strided_slice %542 {offsets = [0, 0], sizes = [1, 32], strides = [1, 1]} : vector<1x96xf32> to vector<1x32xf32>
    %545 = vector.broadcast %544 : vector<1x32xf32> to vector<2x32xf32>
    %546 = arith.mulf %545, %470 : vector<2x32xf32>
    %547 = arith.addf %543, %546 : vector<2x32xf32>
    %548 = arith.negf %547 : vector<2x32xf32>
    %549 = math.exp %548 : vector<2x32xf32>
    %cst_69 = arith.constant 1.000000e+00 : f32
    %550 = vector.broadcast %cst_69 : f32 to vector<2x32xf32>
    %551 = arith.addf %550, %549 : vector<2x32xf32>
    %552 = arith.divf %550, %551 : vector<2x32xf32>
    %553 = vector.extract_strided_slice %541 {offsets = [0, 32], sizes = [2, 32], strides = [1, 1]} : vector<2x128xf32> to vector<2x32xf32>
    %554 = vector.extract_strided_slice %542 {offsets = [0, 32], sizes = [1, 32], strides = [1, 1]} : vector<1x96xf32> to vector<1x32xf32>
    %555 = vector.broadcast %554 : vector<1x32xf32> to vector<2x32xf32>
    %556 = arith.mulf %555, %470 : vector<2x32xf32>
    %557 = arith.addf %553, %556 : vector<2x32xf32>
    %558 = arith.negf %557 : vector<2x32xf32>
    %559 = math.exp %558 : vector<2x32xf32>
    %cst_70 = arith.constant 1.000000e+00 : f32
    %560 = vector.broadcast %cst_70 : f32 to vector<2x32xf32>
    %561 = arith.addf %560, %559 : vector<2x32xf32>
    %562 = arith.divf %560, %561 : vector<2x32xf32>
    %563 = vector.extract_strided_slice %541 {offsets = [0, 64], sizes = [2, 32], strides = [1, 1]} : vector<2x128xf32> to vector<2x32xf32>
    %564 = vector.extract_strided_slice %542 {offsets = [0, 64], sizes = [1, 32], strides = [1, 1]} : vector<1x96xf32> to vector<1x32xf32>
    %565 = vector.broadcast %564 : vector<1x32xf32> to vector<2x32xf32>
    %566 = arith.mulf %565, %470 : vector<2x32xf32>
    %567 = arith.addf %563, %566 : vector<2x32xf32>
    %568 = arith.negf %567 : vector<2x32xf32>
    %569 = math.exp %568 : vector<2x32xf32>
    %cst_71 = arith.constant 1.000000e+00 : f32
    %570 = vector.broadcast %cst_71 : f32 to vector<2x32xf32>
    %571 = arith.addf %570, %569 : vector<2x32xf32>
    %572 = arith.divf %570, %571 : vector<2x32xf32>
    %573 = arith.mulf %562, %470 : vector<2x32xf32>
    %574 = vector.extract_strided_slice %541 {offsets = [0, 96], sizes = [2, 32], strides = [1, 1]} : vector<2x128xf32> to vector<2x32xf32>
    %575 = math.tanh %574 : vector<2x32xf32>
    %576 = arith.mulf %552, %575 : vector<2x32xf32>
    %577 = arith.addf %573, %576 : vector<2x32xf32>
    %578 = vector.extract_strided_slice %9 {offsets = [5, 0], sizes = [1, 32], strides = [1, 1]} : vector<16x32xf32> to vector<1x32xf32>
    %579 = vector.broadcast %578 : vector<1x32xf32> to vector<2x32xf32>
    %580 = arith.mulf %579, %577 : vector<2x32xf32>
    %cst_72 = arith.constant 1.000000e+00 : f32
    %581 = vector.broadcast %cst_72 : f32 to vector<1x32xf32>
    %582 = arith.subf %581, %578 : vector<1x32xf32>
    %583 = vector.broadcast %582 : vector<1x32xf32> to vector<2x32xf32>
    %584 = arith.mulf %583, %470 : vector<2x32xf32>
    %585 = arith.addf %580, %584 : vector<2x32xf32>
    %586 = math.tanh %577 : vector<2x32xf32>
    %587 = arith.mulf %586, %572 : vector<2x32xf32>
    %588 = vector.broadcast %578 : vector<1x32xf32> to vector<2x32xf32>
    %589 = arith.mulf %588, %587 : vector<2x32xf32>
    %cst_73 = arith.constant 1.000000e+00 : f32
    %590 = vector.broadcast %cst_73 : f32 to vector<1x32xf32>
    %591 = arith.subf %590, %578 : vector<1x32xf32>
    %592 = vector.broadcast %591 : vector<1x32xf32> to vector<2x32xf32>
    %593 = arith.mulf %592, %479 : vector<2x32xf32>
    %594 = arith.addf %589, %593 : vector<2x32xf32>
    %595 = vector.extract_strided_slice %538 {offsets = [0, 128], sizes = [2, 128], strides = [1, 1]} : vector<2x256xf32> to vector<2x128xf32>
    %596 = vector.extract_strided_slice %8 {offsets = [1, 0], sizes = [1, 96], strides = [1, 1]} : vector<2x96xf32> to vector<1x96xf32>
    %597 = vector.extract_strided_slice %595 {offsets = [0, 0], sizes = [2, 32], strides = [1, 1]} : vector<2x128xf32> to vector<2x32xf32>
    %598 = vector.extract_strided_slice %596 {offsets = [0, 0], sizes = [1, 32], strides = [1, 1]} : vector<1x96xf32> to vector<1x32xf32>
    %599 = vector.broadcast %598 : vector<1x32xf32> to vector<2x32xf32>
    %600 = arith.mulf %599, %524 : vector<2x32xf32>
    %601 = arith.addf %597, %600 : vector<2x32xf32>
    %602 = arith.negf %601 : vector<2x32xf32>
    %603 = math.exp %602 : vector<2x32xf32>
    %cst_74 = arith.constant 1.000000e+00 : f32
    %604 = vector.broadcast %cst_74 : f32 to vector<2x32xf32>
    %605 = arith.addf %604, %603 : vector<2x32xf32>
    %606 = arith.divf %604, %605 : vector<2x32xf32>
    %607 = vector.extract_strided_slice %595 {offsets = [0, 32], sizes = [2, 32], strides = [1, 1]} : vector<2x128xf32> to vector<2x32xf32>
    %608 = vector.extract_strided_slice %596 {offsets = [0, 32], sizes = [1, 32], strides = [1, 1]} : vector<1x96xf32> to vector<1x32xf32>
    %609 = vector.broadcast %608 : vector<1x32xf32> to vector<2x32xf32>
    %610 = arith.mulf %609, %524 : vector<2x32xf32>
    %611 = arith.addf %607, %610 : vector<2x32xf32>
    %612 = arith.negf %611 : vector<2x32xf32>
    %613 = math.exp %612 : vector<2x32xf32>
    %cst_75 = arith.constant 1.000000e+00 : f32
    %614 = vector.broadcast %cst_75 : f32 to vector<2x32xf32>
    %615 = arith.addf %614, %613 : vector<2x32xf32>
    %616 = arith.divf %614, %615 : vector<2x32xf32>
    %617 = vector.extract_strided_slice %595 {offsets = [0, 64], sizes = [2, 32], strides = [1, 1]} : vector<2x128xf32> to vector<2x32xf32>
    %618 = vector.extract_strided_slice %596 {offsets = [0, 64], sizes = [1, 32], strides = [1, 1]} : vector<1x96xf32> to vector<1x32xf32>
    %619 = vector.broadcast %618 : vector<1x32xf32> to vector<2x32xf32>
    %620 = arith.mulf %619, %524 : vector<2x32xf32>
    %621 = arith.addf %617, %620 : vector<2x32xf32>
    %622 = arith.negf %621 : vector<2x32xf32>
    %623 = math.exp %622 : vector<2x32xf32>
    %cst_76 = arith.constant 1.000000e+00 : f32
    %624 = vector.broadcast %cst_76 : f32 to vector<2x32xf32>
    %625 = arith.addf %624, %623 : vector<2x32xf32>
    %626 = arith.divf %624, %625 : vector<2x32xf32>
    %627 = arith.mulf %616, %524 : vector<2x32xf32>
    %628 = vector.extract_strided_slice %595 {offsets = [0, 96], sizes = [2, 32], strides = [1, 1]} : vector<2x128xf32> to vector<2x32xf32>
    %629 = math.tanh %628 : vector<2x32xf32>
    %630 = arith.mulf %606, %629 : vector<2x32xf32>
    %631 = arith.addf %627, %630 : vector<2x32xf32>
    %632 = vector.extract_strided_slice %9 {offsets = [12, 0], sizes = [1, 32], strides = [1, 1]} : vector<16x32xf32> to vector<1x32xf32>
    %633 = vector.broadcast %632 : vector<1x32xf32> to vector<2x32xf32>
    %634 = arith.mulf %633, %631 : vector<2x32xf32>
    %cst_77 = arith.constant 1.000000e+00 : f32
    %635 = vector.broadcast %cst_77 : f32 to vector<1x32xf32>
    %636 = arith.subf %635, %632 : vector<1x32xf32>
    %637 = vector.broadcast %636 : vector<1x32xf32> to vector<2x32xf32>
    %638 = arith.mulf %637, %524 : vector<2x32xf32>
    %639 = arith.addf %634, %638 : vector<2x32xf32>
    %640 = math.tanh %631 : vector<2x32xf32>
    %641 = arith.mulf %640, %626 : vector<2x32xf32>
    %642 = vector.broadcast %632 : vector<1x32xf32> to vector<2x32xf32>
    %643 = arith.mulf %642, %641 : vector<2x32xf32>
    %cst_78 = arith.constant 1.000000e+00 : f32
    %644 = vector.broadcast %cst_78 : f32 to vector<1x32xf32>
    %645 = arith.subf %644, %632 : vector<1x32xf32>
    %646 = vector.broadcast %645 : vector<1x32xf32> to vector<2x32xf32>
    %647 = arith.mulf %646, %533 : vector<2x32xf32>
    %648 = arith.addf %643, %647 : vector<2x32xf32>
    %649 = arith.addf %534, %648 : vector<2x32xf32>
    %650 = tpu.concatenate %594, %648 in 1 : vector<2x32xf32>, vector<2x32xf32> -> vector<2x64xf32>
    %cst_79 = arith.constant dense<0.000000e+00> : vector<2x256xf32>
    %651 = tpu.matmul %650, %6, %cst_79 {dimension_numbers = #tpu.dot_dimension_numbers<[1], [0], [0], [1], [0, 0, 1, 1], [], []>} : vector<2x64xf32>, vector<64x256xf32>, vector<2x256xf32> -> vector<2x256xf32>
    %652 = vector.broadcast %7 : vector<1x256xf32> to vector<2x256xf32>
    %653 = arith.addf %651, %652 : vector<2x256xf32>
    %654 = vector.extract_strided_slice %653 {offsets = [0, 0], sizes = [2, 128], strides = [1, 1]} : vector<2x256xf32> to vector<2x128xf32>
    %655 = vector.extract_strided_slice %5 {offsets = [12, 0], sizes = [2, 128], strides = [1, 1]} : vector<16x128xf32> to vector<2x128xf32>
    %656 = arith.addf %654, %655 : vector<2x128xf32>
    %657 = vector.extract_strided_slice %8 {offsets = [0, 0], sizes = [1, 96], strides = [1, 1]} : vector<2x96xf32> to vector<1x96xf32>
    %658 = vector.extract_strided_slice %656 {offsets = [0, 0], sizes = [2, 32], strides = [1, 1]} : vector<2x128xf32> to vector<2x32xf32>
    %659 = vector.extract_strided_slice %657 {offsets = [0, 0], sizes = [1, 32], strides = [1, 1]} : vector<1x96xf32> to vector<1x32xf32>
    %660 = vector.broadcast %659 : vector<1x32xf32> to vector<2x32xf32>
    %661 = arith.mulf %660, %585 : vector<2x32xf32>
    %662 = arith.addf %658, %661 : vector<2x32xf32>
    %663 = arith.negf %662 : vector<2x32xf32>
    %664 = math.exp %663 : vector<2x32xf32>
    %cst_80 = arith.constant 1.000000e+00 : f32
    %665 = vector.broadcast %cst_80 : f32 to vector<2x32xf32>
    %666 = arith.addf %665, %664 : vector<2x32xf32>
    %667 = arith.divf %665, %666 : vector<2x32xf32>
    %668 = vector.extract_strided_slice %656 {offsets = [0, 32], sizes = [2, 32], strides = [1, 1]} : vector<2x128xf32> to vector<2x32xf32>
    %669 = vector.extract_strided_slice %657 {offsets = [0, 32], sizes = [1, 32], strides = [1, 1]} : vector<1x96xf32> to vector<1x32xf32>
    %670 = vector.broadcast %669 : vector<1x32xf32> to vector<2x32xf32>
    %671 = arith.mulf %670, %585 : vector<2x32xf32>
    %672 = arith.addf %668, %671 : vector<2x32xf32>
    %673 = arith.negf %672 : vector<2x32xf32>
    %674 = math.exp %673 : vector<2x32xf32>
    %cst_81 = arith.constant 1.000000e+00 : f32
    %675 = vector.broadcast %cst_81 : f32 to vector<2x32xf32>
    %676 = arith.addf %675, %674 : vector<2x32xf32>
    %677 = arith.divf %675, %676 : vector<2x32xf32>
    %678 = vector.extract_strided_slice %656 {offsets = [0, 64], sizes = [2, 32], strides = [1, 1]} : vector<2x128xf32> to vector<2x32xf32>
    %679 = vector.extract_strided_slice %657 {offsets = [0, 64], sizes = [1, 32], strides = [1, 1]} : vector<1x96xf32> to vector<1x32xf32>
    %680 = vector.broadcast %679 : vector<1x32xf32> to vector<2x32xf32>
    %681 = arith.mulf %680, %585 : vector<2x32xf32>
    %682 = arith.addf %678, %681 : vector<2x32xf32>
    %683 = arith.negf %682 : vector<2x32xf32>
    %684 = math.exp %683 : vector<2x32xf32>
    %cst_82 = arith.constant 1.000000e+00 : f32
    %685 = vector.broadcast %cst_82 : f32 to vector<2x32xf32>
    %686 = arith.addf %685, %684 : vector<2x32xf32>
    %687 = arith.divf %685, %686 : vector<2x32xf32>
    %688 = arith.mulf %677, %585 : vector<2x32xf32>
    %689 = vector.extract_strided_slice %656 {offsets = [0, 96], sizes = [2, 32], strides = [1, 1]} : vector<2x128xf32> to vector<2x32xf32>
    %690 = math.tanh %689 : vector<2x32xf32>
    %691 = arith.mulf %667, %690 : vector<2x32xf32>
    %692 = arith.addf %688, %691 : vector<2x32xf32>
    %693 = vector.extract_strided_slice %9 {offsets = [6, 0], sizes = [1, 32], strides = [1, 1]} : vector<16x32xf32> to vector<1x32xf32>
    %694 = vector.broadcast %693 : vector<1x32xf32> to vector<2x32xf32>
    %695 = arith.mulf %694, %692 : vector<2x32xf32>
    %cst_83 = arith.constant 1.000000e+00 : f32
    %696 = vector.broadcast %cst_83 : f32 to vector<1x32xf32>
    %697 = arith.subf %696, %693 : vector<1x32xf32>
    %698 = vector.broadcast %697 : vector<1x32xf32> to vector<2x32xf32>
    %699 = arith.mulf %698, %585 : vector<2x32xf32>
    %700 = arith.addf %695, %699 : vector<2x32xf32>
    %701 = math.tanh %692 : vector<2x32xf32>
    %702 = arith.mulf %701, %687 : vector<2x32xf32>
    %703 = vector.broadcast %693 : vector<1x32xf32> to vector<2x32xf32>
    %704 = arith.mulf %703, %702 : vector<2x32xf32>
    %cst_84 = arith.constant 1.000000e+00 : f32
    %705 = vector.broadcast %cst_84 : f32 to vector<1x32xf32>
    %706 = arith.subf %705, %693 : vector<1x32xf32>
    %707 = vector.broadcast %706 : vector<1x32xf32> to vector<2x32xf32>
    %708 = arith.mulf %707, %594 : vector<2x32xf32>
    %709 = arith.addf %704, %708 : vector<2x32xf32>
    %710 = vector.extract_strided_slice %653 {offsets = [0, 128], sizes = [2, 128], strides = [1, 1]} : vector<2x256xf32> to vector<2x128xf32>
    %711 = vector.extract_strided_slice %8 {offsets = [1, 0], sizes = [1, 96], strides = [1, 1]} : vector<2x96xf32> to vector<1x96xf32>
    %712 = vector.extract_strided_slice %710 {offsets = [0, 0], sizes = [2, 32], strides = [1, 1]} : vector<2x128xf32> to vector<2x32xf32>
    %713 = vector.extract_strided_slice %711 {offsets = [0, 0], sizes = [1, 32], strides = [1, 1]} : vector<1x96xf32> to vector<1x32xf32>
    %714 = vector.broadcast %713 : vector<1x32xf32> to vector<2x32xf32>
    %715 = arith.mulf %714, %639 : vector<2x32xf32>
    %716 = arith.addf %712, %715 : vector<2x32xf32>
    %717 = arith.negf %716 : vector<2x32xf32>
    %718 = math.exp %717 : vector<2x32xf32>
    %cst_85 = arith.constant 1.000000e+00 : f32
    %719 = vector.broadcast %cst_85 : f32 to vector<2x32xf32>
    %720 = arith.addf %719, %718 : vector<2x32xf32>
    %721 = arith.divf %719, %720 : vector<2x32xf32>
    %722 = vector.extract_strided_slice %710 {offsets = [0, 32], sizes = [2, 32], strides = [1, 1]} : vector<2x128xf32> to vector<2x32xf32>
    %723 = vector.extract_strided_slice %711 {offsets = [0, 32], sizes = [1, 32], strides = [1, 1]} : vector<1x96xf32> to vector<1x32xf32>
    %724 = vector.broadcast %723 : vector<1x32xf32> to vector<2x32xf32>
    %725 = arith.mulf %724, %639 : vector<2x32xf32>
    %726 = arith.addf %722, %725 : vector<2x32xf32>
    %727 = arith.negf %726 : vector<2x32xf32>
    %728 = math.exp %727 : vector<2x32xf32>
    %cst_86 = arith.constant 1.000000e+00 : f32
    %729 = vector.broadcast %cst_86 : f32 to vector<2x32xf32>
    %730 = arith.addf %729, %728 : vector<2x32xf32>
    %731 = arith.divf %729, %730 : vector<2x32xf32>
    %732 = vector.extract_strided_slice %710 {offsets = [0, 64], sizes = [2, 32], strides = [1, 1]} : vector<2x128xf32> to vector<2x32xf32>
    %733 = vector.extract_strided_slice %711 {offsets = [0, 64], sizes = [1, 32], strides = [1, 1]} : vector<1x96xf32> to vector<1x32xf32>
    %734 = vector.broadcast %733 : vector<1x32xf32> to vector<2x32xf32>
    %735 = arith.mulf %734, %639 : vector<2x32xf32>
    %736 = arith.addf %732, %735 : vector<2x32xf32>
    %737 = arith.negf %736 : vector<2x32xf32>
    %738 = math.exp %737 : vector<2x32xf32>
    %cst_87 = arith.constant 1.000000e+00 : f32
    %739 = vector.broadcast %cst_87 : f32 to vector<2x32xf32>
    %740 = arith.addf %739, %738 : vector<2x32xf32>
    %741 = arith.divf %739, %740 : vector<2x32xf32>
    %742 = arith.mulf %731, %639 : vector<2x32xf32>
    %743 = vector.extract_strided_slice %710 {offsets = [0, 96], sizes = [2, 32], strides = [1, 1]} : vector<2x128xf32> to vector<2x32xf32>
    %744 = math.tanh %743 : vector<2x32xf32>
    %745 = arith.mulf %721, %744 : vector<2x32xf32>
    %746 = arith.addf %742, %745 : vector<2x32xf32>
    %747 = vector.extract_strided_slice %9 {offsets = [13, 0], sizes = [1, 32], strides = [1, 1]} : vector<16x32xf32> to vector<1x32xf32>
    %748 = vector.broadcast %747 : vector<1x32xf32> to vector<2x32xf32>
    %749 = arith.mulf %748, %746 : vector<2x32xf32>
    %cst_88 = arith.constant 1.000000e+00 : f32
    %750 = vector.broadcast %cst_88 : f32 to vector<1x32xf32>
    %751 = arith.subf %750, %747 : vector<1x32xf32>
    %752 = vector.broadcast %751 : vector<1x32xf32> to vector<2x32xf32>
    %753 = arith.mulf %752, %639 : vector<2x32xf32>
    %754 = arith.addf %749, %753 : vector<2x32xf32>
    %755 = math.tanh %746 : vector<2x32xf32>
    %756 = arith.mulf %755, %741 : vector<2x32xf32>
    %757 = vector.broadcast %747 : vector<1x32xf32> to vector<2x32xf32>
    %758 = arith.mulf %757, %756 : vector<2x32xf32>
    %cst_89 = arith.constant 1.000000e+00 : f32
    %759 = vector.broadcast %cst_89 : f32 to vector<1x32xf32>
    %760 = arith.subf %759, %747 : vector<1x32xf32>
    %761 = vector.broadcast %760 : vector<1x32xf32> to vector<2x32xf32>
    %762 = arith.mulf %761, %648 : vector<2x32xf32>
    %763 = arith.addf %758, %762 : vector<2x32xf32>
    %764 = arith.addf %649, %763 : vector<2x32xf32>
    %765 = tpu.concatenate %709, %763 in 1 : vector<2x32xf32>, vector<2x32xf32> -> vector<2x64xf32>
    %cst_90 = arith.constant dense<0.000000e+00> : vector<2x256xf32>
    %766 = tpu.matmul %765, %6, %cst_90 {dimension_numbers = #tpu.dot_dimension_numbers<[1], [0], [0], [1], [0, 0, 1, 1], [], []>} : vector<2x64xf32>, vector<64x256xf32>, vector<2x256xf32> -> vector<2x256xf32>
    %767 = vector.broadcast %7 : vector<1x256xf32> to vector<2x256xf32>
    %768 = arith.addf %766, %767 : vector<2x256xf32>
    %769 = vector.extract_strided_slice %768 {offsets = [0, 0], sizes = [2, 128], strides = [1, 1]} : vector<2x256xf32> to vector<2x128xf32>
    %770 = vector.extract_strided_slice %5 {offsets = [14, 0], sizes = [2, 128], strides = [1, 1]} : vector<16x128xf32> to vector<2x128xf32>
    %771 = arith.addf %769, %770 : vector<2x128xf32>
    %772 = vector.extract_strided_slice %8 {offsets = [0, 0], sizes = [1, 96], strides = [1, 1]} : vector<2x96xf32> to vector<1x96xf32>
    %773 = vector.extract_strided_slice %771 {offsets = [0, 0], sizes = [2, 32], strides = [1, 1]} : vector<2x128xf32> to vector<2x32xf32>
    %774 = vector.extract_strided_slice %772 {offsets = [0, 0], sizes = [1, 32], strides = [1, 1]} : vector<1x96xf32> to vector<1x32xf32>
    %775 = vector.broadcast %774 : vector<1x32xf32> to vector<2x32xf32>
    %776 = arith.mulf %775, %700 : vector<2x32xf32>
    %777 = arith.addf %773, %776 : vector<2x32xf32>
    %778 = arith.negf %777 : vector<2x32xf32>
    %779 = math.exp %778 : vector<2x32xf32>
    %cst_91 = arith.constant 1.000000e+00 : f32
    %780 = vector.broadcast %cst_91 : f32 to vector<2x32xf32>
    %781 = arith.addf %780, %779 : vector<2x32xf32>
    %782 = arith.divf %780, %781 : vector<2x32xf32>
    %783 = vector.extract_strided_slice %771 {offsets = [0, 32], sizes = [2, 32], strides = [1, 1]} : vector<2x128xf32> to vector<2x32xf32>
    %784 = vector.extract_strided_slice %772 {offsets = [0, 32], sizes = [1, 32], strides = [1, 1]} : vector<1x96xf32> to vector<1x32xf32>
    %785 = vector.broadcast %784 : vector<1x32xf32> to vector<2x32xf32>
    %786 = arith.mulf %785, %700 : vector<2x32xf32>
    %787 = arith.addf %783, %786 : vector<2x32xf32>
    %788 = arith.negf %787 : vector<2x32xf32>
    %789 = math.exp %788 : vector<2x32xf32>
    %cst_92 = arith.constant 1.000000e+00 : f32
    %790 = vector.broadcast %cst_92 : f32 to vector<2x32xf32>
    %791 = arith.addf %790, %789 : vector<2x32xf32>
    %792 = arith.divf %790, %791 : vector<2x32xf32>
    %793 = vector.extract_strided_slice %771 {offsets = [0, 64], sizes = [2, 32], strides = [1, 1]} : vector<2x128xf32> to vector<2x32xf32>
    %794 = vector.extract_strided_slice %772 {offsets = [0, 64], sizes = [1, 32], strides = [1, 1]} : vector<1x96xf32> to vector<1x32xf32>
    %795 = vector.broadcast %794 : vector<1x32xf32> to vector<2x32xf32>
    %796 = arith.mulf %795, %700 : vector<2x32xf32>
    %797 = arith.addf %793, %796 : vector<2x32xf32>
    %798 = arith.negf %797 : vector<2x32xf32>
    %799 = math.exp %798 : vector<2x32xf32>
    %cst_93 = arith.constant 1.000000e+00 : f32
    %800 = vector.broadcast %cst_93 : f32 to vector<2x32xf32>
    %801 = arith.addf %800, %799 : vector<2x32xf32>
    %802 = arith.divf %800, %801 : vector<2x32xf32>
    %803 = arith.mulf %792, %700 : vector<2x32xf32>
    %804 = vector.extract_strided_slice %771 {offsets = [0, 96], sizes = [2, 32], strides = [1, 1]} : vector<2x128xf32> to vector<2x32xf32>
    %805 = math.tanh %804 : vector<2x32xf32>
    %806 = arith.mulf %782, %805 : vector<2x32xf32>
    %807 = arith.addf %803, %806 : vector<2x32xf32>
    %808 = vector.extract_strided_slice %9 {offsets = [7, 0], sizes = [1, 32], strides = [1, 1]} : vector<16x32xf32> to vector<1x32xf32>
    %809 = math.tanh %807 : vector<2x32xf32>
    %810 = arith.mulf %809, %802 : vector<2x32xf32>
    %811 = vector.broadcast %808 : vector<1x32xf32> to vector<2x32xf32>
    %812 = arith.mulf %811, %810 : vector<2x32xf32>
    %cst_94 = arith.constant 1.000000e+00 : f32
    %813 = vector.broadcast %cst_94 : f32 to vector<1x32xf32>
    %814 = arith.subf %813, %808 : vector<1x32xf32>
    %815 = vector.broadcast %814 : vector<1x32xf32> to vector<2x32xf32>
    %816 = arith.mulf %815, %709 : vector<2x32xf32>
    %817 = arith.addf %812, %816 : vector<2x32xf32>
    %818 = vector.extract_strided_slice %768 {offsets = [0, 128], sizes = [2, 128], strides = [1, 1]} : vector<2x256xf32> to vector<2x128xf32>
    %819 = vector.extract_strided_slice %8 {offsets = [1, 0], sizes = [1, 96], strides = [1, 1]} : vector<2x96xf32> to vector<1x96xf32>
    %820 = vector.extract_strided_slice %818 {offsets = [0, 0], sizes = [2, 32], strides = [1, 1]} : vector<2x128xf32> to vector<2x32xf32>
    %821 = vector.extract_strided_slice %819 {offsets = [0, 0], sizes = [1, 32], strides = [1, 1]} : vector<1x96xf32> to vector<1x32xf32>
    %822 = vector.broadcast %821 : vector<1x32xf32> to vector<2x32xf32>
    %823 = arith.mulf %822, %754 : vector<2x32xf32>
    %824 = arith.addf %820, %823 : vector<2x32xf32>
    %825 = arith.negf %824 : vector<2x32xf32>
    %826 = math.exp %825 : vector<2x32xf32>
    %cst_95 = arith.constant 1.000000e+00 : f32
    %827 = vector.broadcast %cst_95 : f32 to vector<2x32xf32>
    %828 = arith.addf %827, %826 : vector<2x32xf32>
    %829 = arith.divf %827, %828 : vector<2x32xf32>
    %830 = vector.extract_strided_slice %818 {offsets = [0, 32], sizes = [2, 32], strides = [1, 1]} : vector<2x128xf32> to vector<2x32xf32>
    %831 = vector.extract_strided_slice %819 {offsets = [0, 32], sizes = [1, 32], strides = [1, 1]} : vector<1x96xf32> to vector<1x32xf32>
    %832 = vector.broadcast %831 : vector<1x32xf32> to vector<2x32xf32>
    %833 = arith.mulf %832, %754 : vector<2x32xf32>
    %834 = arith.addf %830, %833 : vector<2x32xf32>
    %835 = arith.negf %834 : vector<2x32xf32>
    %836 = math.exp %835 : vector<2x32xf32>
    %cst_96 = arith.constant 1.000000e+00 : f32
    %837 = vector.broadcast %cst_96 : f32 to vector<2x32xf32>
    %838 = arith.addf %837, %836 : vector<2x32xf32>
    %839 = arith.divf %837, %838 : vector<2x32xf32>
    %840 = vector.extract_strided_slice %818 {offsets = [0, 64], sizes = [2, 32], strides = [1, 1]} : vector<2x128xf32> to vector<2x32xf32>
    %841 = vector.extract_strided_slice %819 {offsets = [0, 64], sizes = [1, 32], strides = [1, 1]} : vector<1x96xf32> to vector<1x32xf32>
    %842 = vector.broadcast %841 : vector<1x32xf32> to vector<2x32xf32>
    %843 = arith.mulf %842, %754 : vector<2x32xf32>
    %844 = arith.addf %840, %843 : vector<2x32xf32>
    %845 = arith.negf %844 : vector<2x32xf32>
    %846 = math.exp %845 : vector<2x32xf32>
    %cst_97 = arith.constant 1.000000e+00 : f32
    %847 = vector.broadcast %cst_97 : f32 to vector<2x32xf32>
    %848 = arith.addf %847, %846 : vector<2x32xf32>
    %849 = arith.divf %847, %848 : vector<2x32xf32>
    %850 = arith.mulf %839, %754 : vector<2x32xf32>
    %851 = vector.extract_strided_slice %818 {offsets = [0, 96], sizes = [2, 32], strides = [1, 1]} : vector<2x128xf32> to vector<2x32xf32>
    %852 = math.tanh %851 : vector<2x32xf32>
    %853 = arith.mulf %829, %852 : vector<2x32xf32>
    %854 = arith.addf %850, %853 : vector<2x32xf32>
    %855 = vector.extract_strided_slice %9 {offsets = [14, 0], sizes = [1, 32], strides = [1, 1]} : vector<16x32xf32> to vector<1x32xf32>
    %856 = vector.broadcast %855 : vector<1x32xf32> to vector<2x32xf32>
    %857 = arith.mulf %856, %854 : vector<2x32xf32>
    %cst_98 = arith.constant 1.000000e+00 : f32
    %858 = vector.broadcast %cst_98 : f32 to vector<1x32xf32>
    %859 = arith.subf %858, %855 : vector<1x32xf32>
    %860 = vector.broadcast %859 : vector<1x32xf32> to vector<2x32xf32>
    %861 = arith.mulf %860, %754 : vector<2x32xf32>
    %862 = arith.addf %857, %861 : vector<2x32xf32>
    %863 = math.tanh %854 : vector<2x32xf32>
    %864 = arith.mulf %863, %849 : vector<2x32xf32>
    %865 = vector.broadcast %855 : vector<1x32xf32> to vector<2x32xf32>
    %866 = arith.mulf %865, %864 : vector<2x32xf32>
    %cst_99 = arith.constant 1.000000e+00 : f32
    %867 = vector.broadcast %cst_99 : f32 to vector<1x32xf32>
    %868 = arith.subf %867, %855 : vector<1x32xf32>
    %869 = vector.broadcast %868 : vector<1x32xf32> to vector<2x32xf32>
    %870 = arith.mulf %869, %763 : vector<2x32xf32>
    %871 = arith.addf %866, %870 : vector<2x32xf32>
    %872 = arith.addf %764, %871 : vector<2x32xf32>
    %873 = tpu.concatenate %817, %871 in 1 : vector<2x32xf32>, vector<2x32xf32> -> vector<2x64xf32>
    %cst_100 = arith.constant dense<0.000000e+00> : vector<2x256xf32>
    %874 = tpu.matmul %873, %6, %cst_100 {dimension_numbers = #tpu.dot_dimension_numbers<[1], [0], [0], [1], [0, 0, 1, 1], [], []>} : vector<2x64xf32>, vector<64x256xf32>, vector<2x256xf32> -> vector<2x256xf32>
    %875 = vector.broadcast %7 : vector<1x256xf32> to vector<2x256xf32>
    %876 = arith.addf %874, %875 : vector<2x256xf32>
    %877 = vector.extract_strided_slice %876 {offsets = [0, 128], sizes = [2, 128], strides = [1, 1]} : vector<2x256xf32> to vector<2x128xf32>
    %878 = vector.extract_strided_slice %8 {offsets = [1, 0], sizes = [1, 96], strides = [1, 1]} : vector<2x96xf32> to vector<1x96xf32>
    %879 = vector.extract_strided_slice %877 {offsets = [0, 0], sizes = [2, 32], strides = [1, 1]} : vector<2x128xf32> to vector<2x32xf32>
    %880 = vector.extract_strided_slice %878 {offsets = [0, 0], sizes = [1, 32], strides = [1, 1]} : vector<1x96xf32> to vector<1x32xf32>
    %881 = vector.broadcast %880 : vector<1x32xf32> to vector<2x32xf32>
    %882 = arith.mulf %881, %862 : vector<2x32xf32>
    %883 = arith.addf %879, %882 : vector<2x32xf32>
    %884 = arith.negf %883 : vector<2x32xf32>
    %885 = math.exp %884 : vector<2x32xf32>
    %cst_101 = arith.constant 1.000000e+00 : f32
    %886 = vector.broadcast %cst_101 : f32 to vector<2x32xf32>
    %887 = arith.addf %886, %885 : vector<2x32xf32>
    %888 = arith.divf %886, %887 : vector<2x32xf32>
    %889 = vector.extract_strided_slice %877 {offsets = [0, 32], sizes = [2, 32], strides = [1, 1]} : vector<2x128xf32> to vector<2x32xf32>
    %890 = vector.extract_strided_slice %878 {offsets = [0, 32], sizes = [1, 32], strides = [1, 1]} : vector<1x96xf32> to vector<1x32xf32>
    %891 = vector.broadcast %890 : vector<1x32xf32> to vector<2x32xf32>
    %892 = arith.mulf %891, %862 : vector<2x32xf32>
    %893 = arith.addf %889, %892 : vector<2x32xf32>
    %894 = arith.negf %893 : vector<2x32xf32>
    %895 = math.exp %894 : vector<2x32xf32>
    %cst_102 = arith.constant 1.000000e+00 : f32
    %896 = vector.broadcast %cst_102 : f32 to vector<2x32xf32>
    %897 = arith.addf %896, %895 : vector<2x32xf32>
    %898 = arith.divf %896, %897 : vector<2x32xf32>
    %899 = vector.extract_strided_slice %877 {offsets = [0, 64], sizes = [2, 32], strides = [1, 1]} : vector<2x128xf32> to vector<2x32xf32>
    %900 = vector.extract_strided_slice %878 {offsets = [0, 64], sizes = [1, 32], strides = [1, 1]} : vector<1x96xf32> to vector<1x32xf32>
    %901 = vector.broadcast %900 : vector<1x32xf32> to vector<2x32xf32>
    %902 = arith.mulf %901, %862 : vector<2x32xf32>
    %903 = arith.addf %899, %902 : vector<2x32xf32>
    %904 = arith.negf %903 : vector<2x32xf32>
    %905 = math.exp %904 : vector<2x32xf32>
    %cst_103 = arith.constant 1.000000e+00 : f32
    %906 = vector.broadcast %cst_103 : f32 to vector<2x32xf32>
    %907 = arith.addf %906, %905 : vector<2x32xf32>
    %908 = arith.divf %906, %907 : vector<2x32xf32>
    %909 = arith.mulf %898, %862 : vector<2x32xf32>
    %910 = vector.extract_strided_slice %877 {offsets = [0, 96], sizes = [2, 32], strides = [1, 1]} : vector<2x128xf32> to vector<2x32xf32>
    %911 = math.tanh %910 : vector<2x32xf32>
    %912 = arith.mulf %888, %911 : vector<2x32xf32>
    %913 = arith.addf %909, %912 : vector<2x32xf32>
    %914 = vector.extract_strided_slice %9 {offsets = [15, 0], sizes = [1, 32], strides = [1, 1]} : vector<16x32xf32> to vector<1x32xf32>
    %915 = math.tanh %913 : vector<2x32xf32>
    %916 = arith.mulf %915, %908 : vector<2x32xf32>
    %917 = vector.broadcast %914 : vector<1x32xf32> to vector<2x32xf32>
    %918 = arith.mulf %917, %916 : vector<2x32xf32>
    %cst_104 = arith.constant 1.000000e+00 : f32
    %919 = vector.broadcast %cst_104 : f32 to vector<1x32xf32>
    %920 = arith.subf %919, %914 : vector<1x32xf32>
    %921 = vector.broadcast %920 : vector<1x32xf32> to vector<2x32xf32>
    %922 = arith.mulf %921, %871 : vector<2x32xf32>
    %923 = arith.addf %918, %922 : vector<2x32xf32>
    %924 = arith.addf %872, %923 : vector<2x32xf32>
    %c0_105 = arith.constant 0 : index
    %c0_106 = arith.constant 0 : index
    %925 = vector.load %arg7[%c0_105, %c0_106] : memref<32x4xf32, #tpu.memory_space<vmem>>, vector<32x4xf32>
    %cst_107 = arith.constant dense<0.000000e+00> : vector<2x4xf32>
    %926 = tpu.matmul %924, %925, %cst_107 {dimension_numbers = #tpu.dot_dimension_numbers<[1], [0], [0], [1], [0, 0, 1, 1], [], []>} : vector<2x32xf32>, vector<32x4xf32>, vector<2x4xf32> -> vector<2x4xf32>
    %c0_108 = arith.constant 0 : index
    %c0_109 = arith.constant 0 : index
    %927 = vector.load %arg8[%c0_108, %c0_109] : memref<1x4xf32, #tpu.memory_space<vmem>>, vector<1x4xf32>
    %928 = vector.broadcast %927 : vector<1x4xf32> to vector<2x4xf32>
    %929 = arith.addf %926, %928 : vector<2x4xf32>
    %cst_110 = arith.constant dense<0xFF800000> : vector<2xf32>
    %930 = vector.multi_reduction <maximumf>, %929, %cst_110 [1] : vector<2x4xf32> to vector<2xf32>
    %931 = vector.shape_cast %930 : vector<2xf32> to vector<2x1xf32>
    %932 = vector.broadcast %931 : vector<2x1xf32> to vector<2x4xf32>
    %933 = arith.subf %929, %932 : vector<2x4xf32>
    %934 = math.exp %933 : vector<2x4xf32>
    %cst_111 = arith.constant dense<0.000000e+00> : vector<2xf32>
    %935 = vector.multi_reduction <add>, %934, %cst_111 [1] : vector<2x4xf32> to vector<2xf32>
    %936 = vector.shape_cast %935 : vector<2xf32> to vector<2x1xf32>
    %937 = vector.broadcast %936 : vector<2x1xf32> to vector<2x4xf32>
    %938 = arith.divf %934, %937 : vector<2x4xf32>
    %c0_112 = arith.constant 0 : index
    %c0_113 = arith.constant 0 : index
    %939 = vector.load %arg9[%c0_112, %c0_113] : memref<2x4xf32, #tpu.memory_space<vmem>>, vector<2x4xf32>
    tpu.vector_store %arg9[%c0_112, %c0_113], %938 {strides = array<i32>} : memref<2x4xf32, #tpu.memory_space<vmem>>, vector<2x4xf32>,
    return
  }
}

</mosaic_0001>

<llo_original>
// kernel: model_forward.1
$region0: #{model_forward.1}
  #allocation0 [shape = 'u32[]', space=smem, size = 0x4, offset = 0x4, fixed_abs, tag = 'smem constant byte address 0x4 - core index']
  #allocation1 [shape = 'u32[144,128]{1,0:T(1,128)}', space=vmem, size = 0x12000, scoped, tag = 'internal scratch']
  %s0 = inlined_call_operand.vmem [shape: f32[16,48], index: 0, kind: input, shape index: {}]
  %s1 = inlined_call_operand.vmem [shape: f32[48,128], index: 1, kind: input, shape index: {}]
  %s2 = inlined_call_operand.vmem [shape: f32[1,128], index: 2, kind: input, shape index: {}]
  %s3 = inlined_call_operand.hbm [shape: f32[64,256], index: 3, kind: input, shape index: {}]
  %s4 = inlined_call_operand.vmem [shape: f32[1,256], index: 4, kind: input, shape index: {}]
  %s5 = inlined_call_operand.vmem [shape: f32[2,96], index: 5, kind: input, shape index: {}]
  %s6 = inlined_call_operand.vmem [shape: f32[16,32], index: 6, kind: input, shape index: {}]
  %s7 = inlined_call_operand.vmem [shape: f32[32,4], index: 7, kind: input, shape index: {}]
  %s8 = inlined_call_operand.vmem [shape: f32[1,4], index: 8, kind: input, shape index: {}]
  %s9 = inlined_call_operand.hbm [shape: f32[2,4], index: 9, kind: output, shape index: {}]
  %s10 = sld [smem:[#allocation0]]
  $region50: #{model_forward.1} parent=0
    _
  %s12 = ssub.s32 1, %s10
  %s13 = scalar_select 0, %s12, %s10
  $region1: #{model_forward.1} parent=0
    #allocation2 [shape = 'u8[65536]{0}', space=vmem, size = 0x10000, scoped, tag = 'input window, operand 3, single buffered']
    #allocation3 [shape = 's32[1]{0}', space=sflag, size = 0x4, scoped, tag = 'scoped memory for model_forward.1']
    #allocation4 [shape = 's32[1]{0}', space=sflag, size = 0x4, scoped, tag = 'scoped memory for model_forward.1']
    #allocation5 [shape = 'u8[1024]{0}', space=vmem, size = 0x400, scoped, tag = 'output window, operand 0, single buffered']
    %14 = vsyncpa [#allocation3], 0
    %15 = vsyncpa [#allocation4], 0
    // Predicated region
    $region2: #{model_forward.1} parent=1 // pred_check
      _
    $region3: #{model_forward.1} parent=1 // pred_check_branch
      %17 = sbr.rel (0) target = $region5
    $region4: #{model_forward.1} parent=1 // pred_region
      _
    $region5: #{model_forward.1} parent=1 // pred_fallthru
      _
    // Predicated region
    $region6: #{model_forward.1} parent=1 // pred_check
      _
    $region7: #{model_forward.1} parent=1 // pred_check_branch
      %19 = sbr.rel (0) target = $region9
    $region8: #{model_forward.1} parent=1 // pred_region
      _
    $region9: #{model_forward.1} parent=1 // pred_fallthru
      _
    // Predicated region
    $region10: #{model_forward.1} parent=1 // pred_check
      _
    $region11: #{model_forward.1} parent=1 // pred_check_branch
      %21 = sbr.rel (0) target = $region13
    $region12: #{model_forward.1} parent=1 // pred_region
      _
    $region13: #{model_forward.1} parent=1 // pred_fallthru
      _
    // Predicated region
    $region14: #{model_forward.1} parent=1 // pred_check
      _
    $region15: #{model_forward.1} parent=1 // pred_check_branch
      %23 = sbr.rel (0) target = $region17
    $region16: #{model_forward.1} parent=1 // pred_region
      %s25 = ssub.s32 2048, 2048
      %26 = vsyncadd [#allocation3], %s25
      %s27 = sshll.u32 [#allocation2], 4
      %s28 = int_to_ptr.vmem [resolvable:$true] %s27
      %33 = dma.hbm_to_vmem [thread:$0]  %s3, 2048, %s28, [#allocation3], 256, 256, 16
    $region17: #{model_forward.1} parent=1 // pred_fallthru
      _
    // Predicated region
    $region18: #{model_forward.1} parent=1 // pred_check
      _
    $region19: #{model_forward.1} parent=1 // pred_check_branch
      %35 = sbr.rel (0) target = $region21
    $region20: #{model_forward.1} parent=1 // pred_region
      _
    $region21: #{model_forward.1} parent=1 // pred_fallthru
      _
    // Predicated region
    $region22: #{model_forward.1} parent=1 // pred_check
      _
    $region23: #{model_forward.1} parent=1 // pred_check_branch
      %37 = sbr.rel (0) target = $region25
    $region24: #{model_forward.1} parent=1 // pred_region
      _
    $region25: #{model_forward.1} parent=1 // pred_fallthru
      _
    // Predicated region
    $region26: #{model_forward.1} parent=1 // pred_check
      _
    $region27: #{model_forward.1} parent=1 // pred_check_branch
      %39 = sbr.rel (0) target = $region29
    $region28: #{model_forward.1} parent=1 // pred_region
      _
    $region29: #{model_forward.1} parent=1 // pred_fallthru
      _
    // Predicated region
    $region30: #{model_forward.1} parent=1 // pred_check
      _
    $region31: #{model_forward.1} parent=1 // pred_check_branch
      %41 = sbr.rel (0) target = $region33
    $region32: #{model_forward.1} parent=1 // pred_region
      _
    $region33: #{model_forward.1} parent=1 // pred_fallthru
      _
    // Predicated region
    $region34: #{model_forward.1} parent=1 // pred_check
      _
    $region35: #{model_forward.1} parent=1 // pred_check_branch
      %43 = sbr.rel (0) target = $region37
    $region36: #{model_forward.1} parent=1 // pred_region
      _
    $region37: #{model_forward.1} parent=1 // pred_fallthru
      _
    // Predicated region
    $region38: #{model_forward.1} parent=1 // pred_check
      _
    $region39: #{model_forward.1} parent=1 // pred_check_branch
      %45 = sbr.rel (0) target = $region41
    $region40: #{model_forward.1} parent=1 // pred_region
      %46 = dma.done [#allocation3], 2048
    $region41: #{model_forward.1} parent=1 // pred_fallthru
      _
    %v47 = vld [vmem:[%s0] sm:$0xff]
    %v48 = vld [vmem:[%s0 + $0x8] sm:$0xff]
    %v49 = vld [vmem:[%s1] sm:$0xff]
    %v50 = vld [vmem:[%s1 + $0x8] sm:$0xff]
    %v51 = vld [vmem:[%s1 + $0x10] sm:$0xff]
    %v52 = vld [vmem:[%s1 + $0x18] sm:$0xff]
    %v53 = vld [vmem:[%s1 + $0x20] sm:$0xff]
    %v54 = vld [vmem:[%s1 + $0x28] sm:$0xff]
    %v55 = vld [vmem:[%s2] sm:$0x1]
    %v57 = vlaneseq
    %v58 = vshrl.u32 %v57, 7
    %v59 = vsub.s32 0, %v58
    %v60 = vrot.slane %v55, %v59
    %vm62 = vcmask 392192
    %v64 = vsel %vm62, %v47, 0
    %v67 = vsel %vm62, %v48, 0
    %69 = vmatprep.subr.mxu0 0.0
    %70 = vmatpush1.msra.mxu0 %v49
    %71 = vmatprep.subr.mxu0 0.0
    %72 = vmatpush1.msra.mxu0 %v50
    %73 = vmatprep.subr.mxu0 0.0
    %74 = vmatpush1.msra.mxu0 %v51
    %75 = vmatprep.subr.mxu0 0.0
    %76 = vmatpush1.msra.mxu0 %v52
    %77 = vmatprep.subr.mxu0 0.0
    %78 = vmatpush1.msra.mxu0 %v53
    %79 = vmatprep.subr.mxu0 0.0
    %80 = vmatpush1.msra.mxu0 %v54
    %81 = vmatprep.subr.mxu0 0.0
    %82 = vmatpush1.msra.mxu0 0.0
    %83 = vmatprep.subr.mxu0 0.0
    %84 = vmatpush1.msra.mxu0 0.0
    %85 = vmatprep.subr.mxu0 0.0
    %86 = vmatpush1.msra.mxu0 0.0
    %87 = vmatprep.subr.mxu0 0.0
    %88 = vmatpush1.msra.mxu0 0.0
    %89 = vmatprep.subr.mxu0 0.0
    %90 = vmatpush1.msra.mxu0 0.0
    %91 = vmatprep.subr.mxu0 0.0
    %92 = vmatpush1.msra.mxu0 0.0
    %93 = vmatprep.subr.mxu0 0.0
    %94 = vmatpush1.msra.mxu0 0.0
    %95 = vmatprep.subr.mxu0 0.0
    %96 = vmatpush1.msra.mxu0 0.0
    %97 = vmatprep.subr.mxu0 0.0
    %98 = vmatpush1.msra.mxu0 0.0
    %99 = vmatprep.subr.mxu0 0.0
    %100 = vmatpush1.msra.mxu0 0.0
    %101 = vmatprep.subr.mxu0 0.0
    %102 = vmatpush1.msra.mxu0 0.0
    %103 = vmatprep.subr.mxu0 0.0
    %104 = vmatpush1.msra.mxu0 0.0
    %105 = vmatprep.subr.mxu0 0.0
    %106 = vmatpush1.msra.mxu0 0.0
    %107 = vmatprep.subr.mxu0 0.0
    %108 = vmatpush1.msra.mxu0 0.0
    %109 = vmatprep.subr.mxu0 0.0
    %110 = vmatpush1.msra.mxu0 0.0
    %111 = vmatprep.subr.mxu0 0.0
    %112 = vmatpush1.msra.mxu0 0.0
    %113 = vmatprep.subr.mxu0 0.0
    %114 = vmatpush1.msra.mxu0 0.0
    %115 = vmatprep.subr.mxu0 0.0
    %116 = vmatpush1.msra.mxu0 0.0
    %117 = vmatprep.subr.mxu0 0.0
    %118 = vmatpush1.msra.mxu0 0.0
    %119 = vmatprep.subr.mxu0 0.0
    %120 = vmatpush1.msra.mxu0 0.0
    %121 = vmatprep.subr.mxu0 0.0
    %122 = vmatpush1.msra.mxu0 0.0
    %123 = vmatprep.subr.mxu0 0.0
    %124 = vmatpush1.msra.mxu0 0.0
    %125 = vmatprep.subr.mxu0 0.0
    %126 = vmatpush1.msra.mxu0 0.0
    %127 = vmatprep.subr.mxu0 0.0
    %128 = vmatpush1.msra.mxu0 0.0
    %129 = vmatprep.subr.mxu0 0.0
    %130 = vmatpush1.msra.mxu0 0.0
    %131 = vmatprep.subr.mxu0 0.0
    %132 = vmatpush1.msra.mxu0 0.0
    %133 = vmatprep.mubr.f32.mxu0 0.0
    %134 = vmatmul.mubr.f32.gmra.mrb[0].mxu0 %v64
    %v135 = vpop.f32.mrb[0].mxu0
    %v136 = vadd.f32 %v60, %v135
    %v137 = vpop.f32.mrb[0].mxu0
    %138 = vmatprep.mubr.f32.mxu0 0.0
    %139 = vmatmul.mubr.f32.gmra.mrb[0].mxu0 %v67
    %v140 = vpop.f32.mrb[0].mxu0
    %v141 = vadd.f32 %v60, %v140
    %v142 = vpop.f32.mrb[0].mxu0
    %143 = vdwg.mxu0
    %v144 = vld [vmem:[#allocation2] sm:$0xff]
    %v145 = vld [vmem:[#allocation2 + $0x8] sm:$0xff]
    %v146 = vld [vmem:[#allocation2 + $0x10] sm:$0xff]
    %v147 = vld [vmem:[#allocation2 + $0x18] sm:$0xff]
    %v148 = vld [vmem:[#allocation2 + $0x20] sm:$0xff]
    %v149 = vld [vmem:[#allocation2 + $0x28] sm:$0xff]
    %v150 = vld [vmem:[#allocation2 + $0x30] sm:$0xff]
    %v151 = vld [vmem:[#allocation2 + $0x38] sm:$0xff]
    %v152 = vld [vmem:[#allocation2 + $0x40] sm:$0xff]
    %v153 = vld [vmem:[#allocation2 + $0x48] sm:$0xff]
    %v154 = vld [vmem:[#allocation2 + $0x50] sm:$0xff]
    %v155 = vld [vmem:[#allocation2 + $0x58] sm:$0xff]
    %v156 = vld [vmem:[#allocation2 + $0x60] sm:$0xff]
    %v157 = vld [vmem:[#allocation2 + $0x68] sm:$0xff]
    %v158 = vld [vmem:[#allocation2 + $0x70] sm:$0xff]
    %v159 = vld [vmem:[#allocation2 + $0x78] sm:$0xff]
    %v160 = vld [vmem:[%s4] sm:$0x3]
    %v161 = vld [vmem:[%s5] sm:$0x3]
    %v162 = vld [vmem:[%s6] sm:$0xff]
    %v163 = vld [vmem:[%s6 + $0x8] sm:$0xff]
    %v165 = vlaneseq
    %v166 = vshrl.u32 %v165, 7
    %v167 = vsub.s32 0, %v166
    %v168 = vrot.slane %v160, %v167
    %v169 = vlaneseq
    %v170 = vshrl.u32 %v169, 7
    %v171 = vsub.s32 1, %v170
    %v172 = vrot.slane %v160, %v171
    %vm175 = vcmask 523264
    %v177 = vsel %vm175, 0.0, 0
    %179 = vmatprep.subr.mxu0 %v145
    %180 = vmatpush1.msra.mxu0 %v144
    %181 = vmatprep.subr.mxu0 %v147
    %182 = vmatpush1.msra.mxu0 %v146
    %183 = vmatprep.subr.mxu0 %v149
    %184 = vmatpush1.msra.mxu0 %v148
    %185 = vmatprep.subr.mxu0 %v151
    %186 = vmatpush1.msra.mxu0 %v150
    %187 = vmatprep.subr.mxu0 %v153
    %188 = vmatpush1.msra.mxu0 %v152
    %189 = vmatprep.subr.mxu0 %v155
    %190 = vmatpush1.msra.mxu0 %v154
    %191 = vmatprep.subr.mxu0 %v157
    %192 = vmatpush1.msra.mxu0 %v156
    %193 = vmatprep.subr.mxu0 %v159
    %194 = vmatpush1.msra.mxu0 %v158
    %195 = vmatprep.subr.mxu0 0.0
    %196 = vmatpush1.msra.mxu0 0.0
    %197 = vmatprep.subr.mxu0 0.0
    %198 = vmatpush1.msra.mxu0 0.0
    %199 = vmatprep.subr.mxu0 0.0
    %200 = vmatpush1.msra.mxu0 0.0
    %201 = vmatprep.subr.mxu0 0.0
    %202 = vmatpush1.msra.mxu0 0.0
    %203 = vmatprep.subr.mxu0 0.0
    %204 = vmatpush1.msra.mxu0 0.0
    %205 = vmatprep.subr.mxu0 0.0
    %206 = vmatpush1.msra.mxu0 0.0
    %207 = vmatprep.subr.mxu0 0.0
    %208 = vmatpush1.msra.mxu0 0.0
    %209 = vmatprep.subr.mxu0 0.0
    %210 = vmatpush1.msra.mxu0 0.0
    %211 = vmatprep.subr.mxu0 0.0
    %212 = vmatpush1.msra.mxu0 0.0
    %213 = vmatprep.subr.mxu0 0.0
    %214 = vmatpush1.msra.mxu0 0.0
    %215 = vmatprep.subr.mxu0 0.0
    %216 = vmatpush1.msra.mxu0 0.0
    %217 = vmatprep.subr.mxu0 0.0
    %218 = vmatpush1.msra.mxu0 0.0
    %219 = vmatprep.subr.mxu0 0.0
    %220 = vmatpush1.msra.mxu0 0.0
    %221 = vmatprep.subr.mxu0 0.0
    %222 = vmatpush1.msra.mxu0 0.0
    %223 = vmatprep.subr.mxu0 0.0
    %224 = vmatpush1.msra.mxu0 0.0
    %225 = vmatprep.subr.mxu0 0.0
    %226 = vmatpush1.msra.mxu0 0.0
    %227 = vmatprep.subr.mxu0 0.0
    %228 = vmatpush1.msra.mxu0 0.0
    %229 = vmatprep.subr.mxu0 0.0
    %230 = vmatpush1.msra.mxu0 0.0
    %231 = vmatprep.subr.mxu0 0.0
    %232 = vmatpush1.msra.mxu0 0.0
    %233 = vmatprep.subr.mxu0 0.0
    %234 = vmatpush1.msra.mxu0 0.0
    %235 = vmatprep.subr.mxu0 0.0
    %236 = vmatpush1.msra.mxu0 0.0
    %237 = vmatprep.subr.mxu0 0.0
    %238 = vmatpush1.msra.mxu0 0.0
    %239 = vmatprep.subr.mxu0 0.0
    %240 = vmatpush1.msra.mxu0 0.0
    %241 = vmatprep.subr.mxu0 0.0
    %242 = vmatpush1.msra.mxu0 0.0
    %243 = vmatprep.mubr.f32.mxu0 0.0
    %244 = vmatmul.mubr.f32.gmra.mrb[0].mxu0 %v177
    %v245 = vpop.f32.mrb[0].mxu0
    %v246 = vadd.f32 %v168, %v245
    %v247 = vpop.f32.mrb[0].mxu0
    %248 = vdwg.mxu0
    %v249 = vadd.f32 %v246, %v136
    %v250 = vlaneseq
    %v251 = vshrl.u32 %v250, 7
    %v252 = vsub.s32 0, %v251
    %v253 = vrot.slane %v161, %v252
    %v254 = vmul.f32 %v253, 0.0
    %v255 = vadd.f32 %v249, %v254
    %v256 = vxor.u32 %v255, 2147483648
    %v257 = vmul.f32 %v256, 1.442695
    %v258 = vpow.pop %v257
    %v259 = vadd.f32 %v258, 1.0
    %v260 = vrcp.pop %v259
    %v261 = vmul.f32 1.0, %v260
    %v262 = vmul.f32 %v261, 0.0
    %v263 = vtanh.pop %v249
    %265 = vrot.lane.b32.xlu0 %v263, 32
    %v266 = vpop.permute.xlu0 %265
    %v268 = vmul.f32 %v261, %v266
    %270 = vrot.lane.b32.xlu0 %v268, 32
    %v271 = vpop.permute.xlu0 %270
    %v273 = vadd.f32 %v262, %v271
    %v274 = vlaneseq
    %v275 = vshrl.u32 %v274, 7
    %v276 = vsub.s32 0, %v275
    %v277 = vrot.slane %v162, %v276
    %279 = vrot.lane.b32.xlu0 %v273, 96
    %v280 = vpop.permute.xlu0 %279
    %v282 = vmul.f32 %v277, %v280
    %v283 = vsub.f32 1.0, %v162
    %v284 = vlaneseq
    %v285 = vshrl.u32 %v284, 7
    %v286 = vsub.s32 0, %v285
    %v287 = vrot.slane %v283, %v286
    %v288 = vmul.f32 %v287, 0.0
    %v289 = vadd.f32 %v282, %v288
    %v290 = vtanh.pop %v273
    %292 = vrot.lane.b32.xlu0 %v261, 96
    %v293 = vpop.permute.xlu0 %292
    %v295 = vmul.f32 %v290, %v293
    %297 = vrot.lane.b32.xlu0 %v295, 96
    %v298 = vpop.permute.xlu0 %297
    %v300 = vmul.f32 %v277, %v298
    %v301 = vadd.f32 %v300, %v288
    %vm302 = vcmask 261120
    %v303 = vsel %vm302, %v301, 0.0
    %v305 = vsel %vm175, %v303, 0
    %307 = vmatprep.subr.mxu0 %v145
    %308 = vmatpush1.msra.mxu0 %v144
    %309 = vmatprep.subr.mxu0 %v147
    %310 = vmatpush1.msra.mxu0 %v146
    %311 = vmatprep.subr.mxu0 %v149
    %312 = vmatpush1.msra.mxu0 %v148
    %313 = vmatprep.subr.mxu0 %v151
    %314 = vmatpush1.msra.mxu0 %v150
    %315 = vmatprep.subr.mxu0 %v153
    %316 = vmatpush1.msra.mxu0 %v152
    %317 = vmatprep.subr.mxu0 %v155
    %318 = vmatpush1.msra.mxu0 %v154
    %319 = vmatprep.subr.mxu0 %v157
    %320 = vmatpush1.msra.mxu0 %v156
    %321 = vmatprep.subr.mxu0 %v159
    %322 = vmatpush1.msra.mxu0 %v158
    %323 = vmatprep.subr.mxu0 0.0
    %324 = vmatpush1.msra.mxu0 0.0
    %325 = vmatprep.subr.mxu0 0.0
    %326 = vmatpush1.msra.mxu0 0.0
    %327 = vmatprep.subr.mxu0 0.0
    %328 = vmatpush1.msra.mxu0 0.0
    %329 = vmatprep.subr.mxu0 0.0
    %330 = vmatpush1.msra.mxu0 0.0
    %331 = vmatprep.subr.mxu0 0.0
    %332 = vmatpush1.msra.mxu0 0.0
    %333 = vmatprep.subr.mxu0 0.0
    %334 = vmatpush1.msra.mxu0 0.0
    %335 = vmatprep.subr.mxu0 0.0
    %336 = vmatpush1.msra.mxu0 0.0
    %337 = vmatprep.subr.mxu0 0.0
    %338 = vmatpush1.msra.mxu0 0.0
    %339 = vmatprep.subr.mxu0 0.0
    %340 = vmatpush1.msra.mxu0 0.0
    %341 = vmatprep.subr.mxu0 0.0
    %342 = vmatpush1.msra.mxu0 0.0
    %343 = vmatprep.subr.mxu0 0.0
    %344 = vmatpush1.msra.mxu0 0.0
    %345 = vmatprep.subr.mxu0 0.0
    %346 = vmatpush1.msra.mxu0 0.0
    %347 = vmatprep.subr.mxu0 0.0
    %348 = vmatpush1.msra.mxu0 0.0
    %349 = vmatprep.subr.mxu0 0.0
    %350 = vmatpush1.msra.mxu0 0.0
    %351 = vmatprep.subr.mxu0 0.0
    %352 = vmatpush1.msra.mxu0 0.0
    %353 = vmatprep.subr.mxu0 0.0
    %354 = vmatpush1.msra.mxu0 0.0
    %355 = vmatprep.subr.mxu0 0.0
    %356 = vmatpush1.msra.mxu0 0.0
    %357 = vmatprep.subr.mxu0 0.0
    %358 = vmatpush1.msra.mxu0 0.0
    %359 = vmatprep.subr.mxu0 0.0
    %360 = vmatpush1.msra.mxu0 0.0
    %361 = vmatprep.subr.mxu0 0.0
    %362 = vmatpush1.msra.mxu0 0.0
    %363 = vmatprep.subr.mxu0 0.0
    %364 = vmatpush1.msra.mxu0 0.0
    %365 = vmatprep.subr.mxu0 0.0
    %366 = vmatpush1.msra.mxu0 0.0
    %367 = vmatprep.subr.mxu0 0.0
    %368 = vmatpush1.msra.mxu0 0.0
    %369 = vmatprep.subr.mxu0 0.0
    %370 = vmatpush1.msra.mxu0 0.0
    %371 = vmatprep.mubr.f32.mxu0 0.0
    %372 = vmatmul.mubr.f32.gmra.mrb[0].mxu0 %v305
    %v373 = vpop.f32.mrb[0].mxu0
    %v374 = vadd.f32 %v168, %v373
    %v375 = vpop.f32.mrb[0].mxu0
    %v376 = vadd.f32 %v172, %v375
    %377 = vdwg.mxu0
    %v379 = vrot.slane %v136, 2
    %v381 = vadd.f32 %v374, %v379
    %v382 = vmul.f32 %v253, %v289
    %v383 = vadd.f32 %v381, %v382
    %v384 = vxor.u32 %v383, 2147483648
    %v385 = vmul.f32 %v384, 1.442695
    %v386 = vpow.pop %v385
    %v387 = vadd.f32 %v386, 1.0
    %v388 = vrcp.pop %v387
    %v389 = vmul.f32 1.0, %v388
    %391 = vrot.lane.b32.xlu0 %v289, 32
    %v392 = vpop.permute.xlu0 %391
    %v394 = vmul.f32 %v253, %v392
    %v395 = vadd.f32 %v381, %v394
    %v396 = vxor.u32 %v395, 2147483648
    %v397 = vmul.f32 %v396, 1.442695
    %v398 = vpow.pop %v397
    %v399 = vadd.f32 %v398, 1.0
    %v400 = vrcp.pop %v399
    %v401 = vmul.f32 1.0, %v400
    %402 = vrot.lane.b32.xlu0 %v289, 64
    %v403 = vpop.permute.xlu0 %402
    %v405 = vmul.f32 %v253, %v403
    %v406 = vadd.f32 %v381, %v405
    %v407 = vxor.u32 %v406, 2147483648
    %v408 = vmul.f32 %v407, 1.442695
    %v409 = vpow.pop %v408
    %v410 = vadd.f32 %v409, 1.0
    %v411 = vrcp.pop %v410
    %v412 = vmul.f32 1.0, %v411
    %v413 = vmul.f32 %v401, %v392
    %v414 = vtanh.pop %v381
    %416 = vrot.lane.b32.xlu0 %v414, 32
    %v417 = vpop.permute.xlu0 %416
    %v419 = vmul.f32 %v389, %v417
    %421 = vrot.lane.b32.xlu0 %v419, 32
    %v422 = vpop.permute.xlu0 %421
    %v424 = vadd.f32 %v413, %v422
    %v425 = vlaneseq
    %v426 = vshrl.u32 %v425, 7
    %v427 = vsub.s32 1, %v426
    %v428 = vrot.slane %v162, %v427
    %430 = vrot.lane.b32.xlu0 %v424, 96
    %v431 = vpop.permute.xlu0 %430
    %v433 = vmul.f32 %v428, %v431
    %v434 = vlaneseq
    %v435 = vshrl.u32 %v434, 7
    %v436 = vsub.s32 1, %v435
    %v437 = vrot.slane %v283, %v436
    %v438 = vmul.f32 %v437, %v289
    %v439 = vadd.f32 %v433, %v438
    %v440 = vtanh.pop %v424
    %442 = vrot.lane.b32.xlu0 %v412, 96
    %v443 = vpop.permute.xlu0 %442
    %v445 = vmul.f32 %v440, %v443
    %447 = vrot.lane.b32.xlu0 %v445, 96
    %v448 = vpop.permute.xlu0 %447
    %v450 = vmul.f32 %v428, %v448
    %v451 = vmul.f32 %v437, %v301
    %v452 = vadd.f32 %v450, %v451
    %v453 = vlaneseq
    %v454 = vshrl.u32 %v453, 7
    %v455 = vsub.s32 1, %v454
    %v456 = vrot.slane %v161, %v455
    %v457 = vmul.f32 %v456, 0.0
    %v458 = vadd.f32 %v376, %v457
    %v459 = vxor.u32 %v458, 2147483648
    %v460 = vmul.f32 %v459, 1.442695
    %v461 = vpow.pop %v460
    %v462 = vadd.f32 %v461, 1.0
    %v463 = vrcp.pop %v462
    %v464 = vmul.f32 1.0, %v463
    %v465 = vmul.f32 %v464, 0.0
    %v466 = vtanh.pop %v376
    %468 = vrot.lane.b32.xlu0 %v466, 32
    %v469 = vpop.permute.xlu0 %468
    %v471 = vmul.f32 %v464, %v469
    %473 = vrot.lane.b32.xlu0 %v471, 32
    %v474 = vpop.permute.xlu0 %473
    %v476 = vadd.f32 %v465, %v474
    %v477 = vlaneseq
    %v478 = vshrl.u32 %v477, 7
    %v479 = vsub.s32 0, %v478
    %v480 = vrot.slane %v163, %v479
    %482 = vrot.lane.b32.xlu0 %v476, 96
    %v483 = vpop.permute.xlu0 %482
    %v485 = vmul.f32 %v480, %v483
    %v486 = vsub.f32 1.0, %v163
    %v487 = vlaneseq
    %v488 = vshrl.u32 %v487, 7
    %v489 = vsub.s32 0, %v488
    %v490 = vrot.slane %v486, %v489
    %v491 = vmul.f32 %v490, 0.0
    %v492 = vadd.f32 %v485, %v491
    %v493 = vtanh.pop %v476
    %495 = vrot.lane.b32.xlu0 %v464, 96
    %v496 = vpop.permute.xlu0 %495
    %v498 = vmul.f32 %v493, %v496
    %500 = vrot.lane.b32.xlu0 %v498, 96
    %v501 = vpop.permute.xlu0 %500
    %v503 = vmul.f32 %v480, %v501
    %v504 = vadd.f32 %v503, %v491
    %v505 = vadd.f32 %v504, 0.0
    %507 = vrot.lane.b32.xlu0 %v504, 32
    %v508 = vpop.permute.xlu0 %507
    %v510 = vsel %vm302, %v452, %v508
    %v512 = vsel %vm175, %v510, 0
    %514 = vmatprep.subr.mxu0 %v145
    %515 = vmatpush1.msra.mxu0 %v144
    %516 = vmatprep.subr.mxu0 %v147
    %517 = vmatpush1.msra.mxu0 %v146
    %518 = vmatprep.subr.mxu0 %v149
    %519 = vmatpush1.msra.mxu0 %v148
    %520 = vmatprep.subr.mxu0 %v151
    %521 = vmatpush1.msra.mxu0 %v150
    %522 = vmatprep.subr.mxu0 %v153
    %523 = vmatpush1.msra.mxu0 %v152
    %524 = vmatprep.subr.mxu0 %v155
    %525 = vmatpush1.msra.mxu0 %v154
    %526 = vmatprep.subr.mxu0 %v157
    %527 = vmatpush1.msra.mxu0 %v156
    %528 = vmatprep.subr.mxu0 %v159
    %529 = vmatpush1.msra.mxu0 %v158
    %530 = vmatprep.subr.mxu0 0.0
    %531 = vmatpush1.msra.mxu0 0.0
    %532 = vmatprep.subr.mxu0 0.0
    %533 = vmatpush1.msra.mxu0 0.0
    %534 = vmatprep.subr.mxu0 0.0
    %535 = vmatpush1.msra.mxu0 0.0
    %536 = vmatprep.subr.mxu0 0.0
    %537 = vmatpush1.msra.mxu0 0.0
    %538 = vmatprep.subr.mxu0 0.0
    %539 = vmatpush1.msra.mxu0 0.0
    %540 = vmatprep.subr.mxu0 0.0
    %541 = vmatpush1.msra.mxu0 0.0
    %542 = vmatprep.subr.mxu0 0.0
    %543 = vmatpush1.msra.mxu0 0.0
    %544 = vmatprep.subr.mxu0 0.0
    %545 = vmatpush1.msra.mxu0 0.0
    %546 = vmatprep.subr.mxu0 0.0
    %547 = vmatpush1.msra.mxu0 0.0
    %548 = vmatprep.subr.mxu0 0.0
    %549 = vmatpush1.msra.mxu0 0.0
    %550 = vmatprep.subr.mxu0 0.0
    %551 = vmatpush1.msra.mxu0 0.0
    %552 = vmatprep.subr.mxu0 0.0
    %553 = vmatpush1.msra.mxu0 0.0
    %554 = vmatprep.subr.mxu0 0.0
    %555 = vmatpush1.msra.mxu0 0.0
    %556 = vmatprep.subr.mxu0 0.0
    %557 = vmatpush1.msra.mxu0 0.0
    %558 = vmatprep.subr.mxu0 0.0
    %559 = vmatpush1.msra.mxu0 0.0
    %560 = vmatprep.subr.mxu0 0.0
    %561 = vmatpush1.msra.mxu0 0.0
    %562 = vmatprep.subr.mxu0 0.0
    %563 = vmatpush1.msra.mxu0 0.0
    %564 = vmatprep.subr.mxu0 0.0
    %565 = vmatpush1.msra.mxu0 0.0
    %566 = vmatprep.subr.mxu0 0.0
    %567 = vmatpush1.msra.mxu0 0.0
    %568 = vmatprep.subr.mxu0 0.0
    %569 = vmatpush1.msra.mxu0 0.0
    %570 = vmatprep.subr.mxu0 0.0
    %571 = vmatpush1.msra.mxu0 0.0
    %572 = vmatprep.subr.mxu0 0.0
    %573 = vmatpush1.msra.mxu0 0.0
    %574 = vmatprep.subr.mxu0 0.0
    %575 = vmatpush1.msra.mxu0 0.0
    %576 = vmatprep.subr.mxu0 0.0
    %577 = vmatpush1.msra.mxu0 0.0
    %578 = vmatprep.mubr.f32.mxu0 0.0
    %579 = vmatmul.mubr.f32.gmra.mrb[0].mxu0 %v512
    %v580 = vpop.f32.mrb[0].mxu0
    %v581 = vadd.f32 %v168, %v580
    %v582 = vpop.f32.mrb[0].mxu0
    %v583 = vadd.f32 %v172, %v582
    %584 = vdwg.mxu0
    %v585 = vrot.slane %v136, 4
    %v587 = vadd.f32 %v581, %v585
    %v588 = vmul.f32 %v253, %v439
    %v589 = vadd.f32 %v587, %v588
    %v590 = vxor.u32 %v589, 2147483648
    %v591 = vmul.f32 %v590, 1.442695
    %v592 = vpow.pop %v591
    %v593 = vadd.f32 %v592, 1.0
    %v594 = vrcp.pop %v593
    %v595 = vmul.f32 1.0, %v594
    %597 = vrot.lane.b32.xlu0 %v439, 32
    %v598 = vpop.permute.xlu0 %597
    %v600 = vmul.f32 %v253, %v598
    %v601 = vadd.f32 %v587, %v600
    %v602 = vxor.u32 %v601, 2147483648
    %v603 = vmul.f32 %v602, 1.442695
    %v604 = vpow.pop %v603
    %v605 = vadd.f32 %v604, 1.0
    %v606 = vrcp.pop %v605
    %v607 = vmul.f32 1.0, %v606
    %608 = vrot.lane.b32.xlu0 %v439, 64
    %v609 = vpop.permute.xlu0 %608
    %v611 = vmul.f32 %v253, %v609
    %v612 = vadd.f32 %v587, %v611
    %v613 = vxor.u32 %v612, 2147483648
    %v614 = vmul.f32 %v613, 1.442695
    %v615 = vpow.pop %v614
    %v616 = vadd.f32 %v615, 1.0
    %v617 = vrcp.pop %v616
    %v618 = vmul.f32 1.0, %v617
    %v619 = vmul.f32 %v607, %v598
    %v620 = vtanh.pop %v587
    %622 = vrot.lane.b32.xlu0 %v620, 32
    %v623 = vpop.permute.xlu0 %622
    %v625 = vmul.f32 %v595, %v623
    %627 = vrot.lane.b32.xlu0 %v625, 32
    %v628 = vpop.permute.xlu0 %627
    %v630 = vadd.f32 %v619, %v628
    %v631 = vlaneseq
    %v632 = vshrl.u32 %v631, 7
    %v633 = vsub.s32 2, %v632
    %v634 = vrot.slane %v162, %v633
    %636 = vrot.lane.b32.xlu0 %v630, 96
    %v637 = vpop.permute.xlu0 %636
    %v639 = vmul.f32 %v634, %v637
    %v640 = vlaneseq
    %v641 = vshrl.u32 %v640, 7
    %v642 = vsub.s32 2, %v641
    %v643 = vrot.slane %v283, %v642
    %v644 = vmul.f32 %v643, %v439
    %v645 = vadd.f32 %v639, %v644
    %v646 = vtanh.pop %v630
    %648 = vrot.lane.b32.xlu0 %v618, 96
    %v649 = vpop.permute.xlu0 %648
    %v651 = vmul.f32 %v646, %v649
    %653 = vrot.lane.b32.xlu0 %v651, 96
    %v654 = vpop.permute.xlu0 %653
    %v656 = vmul.f32 %v634, %v654
    %v657 = vmul.f32 %v643, %v452
    %v658 = vadd.f32 %v656, %v657
    %v659 = vmul.f32 %v456, %v492
    %v660 = vadd.f32 %v583, %v659
    %v661 = vxor.u32 %v660, 2147483648
    %v662 = vmul.f32 %v661, 1.442695
    %v663 = vpow.pop %v662
    %v664 = vadd.f32 %v663, 1.0
    %v665 = vrcp.pop %v664
    %v666 = vmul.f32 1.0, %v665
    %668 = vrot.lane.b32.xlu0 %v492, 32
    %v669 = vpop.permute.xlu0 %668
    %v671 = vmul.f32 %v456, %v669
    %v672 = vadd.f32 %v583, %v671
    %v673 = vxor.u32 %v672, 2147483648
    %v674 = vmul.f32 %v673, 1.442695
    %v675 = vpow.pop %v674
    %v676 = vadd.f32 %v675, 1.0
    %v677 = vrcp.pop %v676
    %v678 = vmul.f32 1.0, %v677
    %679 = vrot.lane.b32.xlu0 %v492, 64
    %v680 = vpop.permute.xlu0 %679
    %v682 = vmul.f32 %v456, %v680
    %v683 = vadd.f32 %v583, %v682
    %v684 = vxor.u32 %v683, 2147483648
    %v685 = vmul.f32 %v684, 1.442695
    %v686 = vpow.pop %v685
    %v687 = vadd.f32 %v686, 1.0
    %v688 = vrcp.pop %v687
    %v689 = vmul.f32 1.0, %v688
    %v690 = vmul.f32 %v678, %v669
    %v691 = vtanh.pop %v583
    %693 = vrot.lane.b32.xlu0 %v691, 32
    %v694 = vpop.permute.xlu0 %693
    %v696 = vmul.f32 %v666, %v694
    %698 = vrot.lane.b32.xlu0 %v696, 32
    %v699 = vpop.permute.xlu0 %698
    %v701 = vadd.f32 %v690, %v699
    %v702 = vlaneseq
    %v703 = vshrl.u32 %v702, 7
    %v704 = vsub.s32 1, %v703
    %v705 = vrot.slane %v163, %v704
    %707 = vrot.lane.b32.xlu0 %v701, 96
    %v708 = vpop.permute.xlu0 %707
    %v710 = vmul.f32 %v705, %v708
    %v711 = vlaneseq
    %v712 = vshrl.u32 %v711, 7
    %v713 = vsub.s32 1, %v712
    %v714 = vrot.slane %v486, %v713
    %v715 = vmul.f32 %v714, %v492
    %v716 = vadd.f32 %v710, %v715
    %v717 = vtanh.pop %v701
    %719 = vrot.lane.b32.xlu0 %v689, 96
    %v720 = vpop.permute.xlu0 %719
    %v722 = vmul.f32 %v717, %v720
    %724 = vrot.lane.b32.xlu0 %v722, 96
    %v725 = vpop.permute.xlu0 %724
    %v727 = vmul.f32 %v705, %v725
    %v728 = vmul.f32 %v714, %v504
    %v729 = vadd.f32 %v727, %v728
    %v730 = vadd.f32 %v505, %v729
    %732 = vrot.lane.b32.xlu0 %v729, 32
    %v733 = vpop.permute.xlu0 %732
    %v735 = vsel %vm302, %v658, %v733
    %v737 = vsel %vm175, %v735, 0
    %739 = vmatprep.subr.mxu0 %v145
    %740 = vmatpush1.msra.mxu0 %v144
    %741 = vmatprep.subr.mxu0 %v147
    %742 = vmatpush1.msra.mxu0 %v146
    %743 = vmatprep.subr.mxu0 %v149
    %744 = vmatpush1.msra.mxu0 %v148
    %745 = vmatprep.subr.mxu0 %v151
    %746 = vmatpush1.msra.mxu0 %v150
    %747 = vmatprep.subr.mxu0 %v153
    %748 = vmatpush1.msra.mxu0 %v152
    %749 = vmatprep.subr.mxu0 %v155
    %750 = vmatpush1.msra.mxu0 %v154
    %751 = vmatprep.subr.mxu0 %v157
    %752 = vmatpush1.msra.mxu0 %v156
    %753 = vmatprep.subr.mxu0 %v159
    %754 = vmatpush1.msra.mxu0 %v158
    %755 = vmatprep.subr.mxu0 0.0
    %756 = vmatpush1.msra.mxu0 0.0
    %757 = vmatprep.subr.mxu0 0.0
    %758 = vmatpush1.msra.mxu0 0.0
    %759 = vmatprep.subr.mxu0 0.0
    %760 = vmatpush1.msra.mxu0 0.0
    %761 = vmatprep.subr.mxu0 0.0
    %762 = vmatpush1.msra.mxu0 0.0
    %763 = vmatprep.subr.mxu0 0.0
    %764 = vmatpush1.msra.mxu0 0.0
    %765 = vmatprep.subr.mxu0 0.0
    %766 = vmatpush1.msra.mxu0 0.0
    %767 = vmatprep.subr.mxu0 0.0
    %768 = vmatpush1.msra.mxu0 0.0
    %769 = vmatprep.subr.mxu0 0.0
    %770 = vmatpush1.msra.mxu0 0.0
    %771 = vmatprep.subr.mxu0 0.0
    %772 = vmatpush1.msra.mxu0 0.0
    %773 = vmatprep.subr.mxu0 0.0
    %774 = vmatpush1.msra.mxu0 0.0
    %775 = vmatprep.subr.mxu0 0.0
    %776 = vmatpush1.msra.mxu0 0.0
    %777 = vmatprep.subr.mxu0 0.0
    %778 = vmatpush1.msra.mxu0 0.0
    %779 = vmatprep.subr.mxu0 0.0
    %780 = vmatpush1.msra.mxu0 0.0
    %781 = vmatprep.subr.mxu0 0.0
    %782 = vmatpush1.msra.mxu0 0.0
    %783 = vmatprep.subr.mxu0 0.0
    %784 = vmatpush1.msra.mxu0 0.0
    %785 = vmatprep.subr.mxu0 0.0
    %786 = vmatpush1.msra.mxu0 0.0
    %787 = vmatprep.subr.mxu0 0.0
    %788 = vmatpush1.msra.mxu0 0.0
    %789 = vmatprep.subr.mxu0 0.0
    %790 = vmatpush1.msra.mxu0 0.0
    %791 = vmatprep.subr.mxu0 0.0
    %792 = vmatpush1.msra.mxu0 0.0
    %793 = vmatprep.subr.mxu0 0.0
    %794 = vmatpush1.msra.mxu0 0.0
    %795 = vmatprep.subr.mxu0 0.0
    %796 = vmatpush1.msra.mxu0 0.0
    %797 = vmatprep.subr.mxu0 0.0
    %798 = vmatpush1.msra.mxu0 0.0
    %799 = vmatprep.subr.mxu0 0.0
    %800 = vmatpush1.msra.mxu0 0.0
    %801 = vmatprep.subr.mxu0 0.0
    %802 = vmatpush1.msra.mxu0 0.0
    %803 = vmatprep.mubr.f32.mxu0 0.0
    %804 = vmatmul.mubr.f32.gmra.mrb[0].mxu0 %v737
    %v805 = vpop.f32.mrb[0].mxu0
    %v806 = vadd.f32 %v168, %v805
    %v807 = vpop.f32.mrb[0].mxu0
    %v808 = vadd.f32 %v172, %v807
    %809 = vdwg.mxu0
    %v810 = vrot.slane %v136, 6
    %v812 = vadd.f32 %v806, %v810
    %v813 = vmul.f32 %v253, %v645
    %v814 = vadd.f32 %v812, %v813
    %v815 = vxor.u32 %v814, 2147483648
    %v816 = vmul.f32 %v815, 1.442695
    %v817 = vpow.pop %v816
    %v818 = vadd.f32 %v817, 1.0
    %v819 = vrcp.pop %v818
    %v820 = vmul.f32 1.0, %v819
    %822 = vrot.lane.b32.xlu0 %v645, 32
    %v823 = vpop.permute.xlu0 %822
    %v825 = vmul.f32 %v253, %v823
    %v826 = vadd.f32 %v812, %v825
    %v827 = vxor.u32 %v826, 2147483648
    %v828 = vmul.f32 %v827, 1.442695
    %v829 = vpow.pop %v828
    %v830 = vadd.f32 %v829, 1.0
    %v831 = vrcp.pop %v830
    %v832 = vmul.f32 1.0, %v831
    %833 = vrot.lane.b32.xlu0 %v645, 64
    %v834 = vpop.permute.xlu0 %833
    %v836 = vmul.f32 %v253, %v834
    %v837 = vadd.f32 %v812, %v836
    %v838 = vxor.u32 %v837, 2147483648
    %v839 = vmul.f32 %v838, 1.442695
    %v840 = vpow.pop %v839
    %v841 = vadd.f32 %v840, 1.0
    %v842 = vrcp.pop %v841
    %v843 = vmul.f32 1.0, %v842
    %v844 = vmul.f32 %v832, %v823
    %v845 = vtanh.pop %v812
    %847 = vrot.lane.b32.xlu0 %v845, 32
    %v848 = vpop.permute.xlu0 %847
    %v850 = vmul.f32 %v820, %v848
    %852 = vrot.lane.b32.xlu0 %v850, 32
    %v853 = vpop.permute.xlu0 %852
    %v855 = vadd.f32 %v844, %v853
    %v856 = vlaneseq
    %v857 = vshrl.u32 %v856, 7
    %v858 = vsub.s32 3, %v857
    %v859 = vrot.slane %v162, %v858
    %861 = vrot.lane.b32.xlu0 %v855, 96
    %v862 = vpop.permute.xlu0 %861
    %v864 = vmul.f32 %v859, %v862
    %v865 = vlaneseq
    %v866 = vshrl.u32 %v865, 7
    %v867 = vsub.s32 3, %v866
    %v868 = vrot.slane %v283, %v867
    %v869 = vmul.f32 %v868, %v645
    %v870 = vadd.f32 %v864, %v869
    %v871 = vtanh.pop %v855
    %873 = vrot.lane.b32.xlu0 %v843, 96
    %v874 = vpop.permute.xlu0 %873
    %v876 = vmul.f32 %v871, %v874
    %878 = vrot.lane.b32.xlu0 %v876, 96
    %v879 = vpop.permute.xlu0 %878
    %v881 = vmul.f32 %v859, %v879
    %v882 = vmul.f32 %v868, %v658
    %v883 = vadd.f32 %v881, %v882
    %v884 = vmul.f32 %v456, %v716
    %v885 = vadd.f32 %v808, %v884
    %v886 = vxor.u32 %v885, 2147483648
    %v887 = vmul.f32 %v886, 1.442695
    %v888 = vpow.pop %v887
    %v889 = vadd.f32 %v888, 1.0
    %v890 = vrcp.pop %v889
    %v891 = vmul.f32 1.0, %v890
    %893 = vrot.lane.b32.xlu0 %v716, 32
    %v894 = vpop.permute.xlu0 %893
    %v896 = vmul.f32 %v456, %v894
    %v897 = vadd.f32 %v808, %v896
    %v898 = vxor.u32 %v897, 2147483648
    %v899 = vmul.f32 %v898, 1.442695
    %v900 = vpow.pop %v899
    %v901 = vadd.f32 %v900, 1.0
    %v902 = vrcp.pop %v901
    %v903 = vmul.f32 1.0, %v902
    %904 = vrot.lane.b32.xlu0 %v716, 64
    %v905 = vpop.permute.xlu0 %904
    %v907 = vmul.f32 %v456, %v905
    %v908 = vadd.f32 %v808, %v907
    %v909 = vxor.u32 %v908, 2147483648
    %v910 = vmul.f32 %v909, 1.442695
    %v911 = vpow.pop %v910
    %v912 = vadd.f32 %v911, 1.0
    %v913 = vrcp.pop %v912
    %v914 = vmul.f32 1.0, %v913
    %v915 = vmul.f32 %v903, %v894
    %v916 = vtanh.pop %v808
    %918 = vrot.lane.b32.xlu0 %v916, 32
    %v919 = vpop.permute.xlu0 %918
    %v921 = vmul.f32 %v891, %v919
    %923 = vrot.lane.b32.xlu0 %v921, 32
    %v924 = vpop.permute.xlu0 %923
    %v926 = vadd.f32 %v915, %v924
    %v927 = vlaneseq
    %v928 = vshrl.u32 %v927, 7
    %v929 = vsub.s32 2, %v928
    %v930 = vrot.slane %v163, %v929
    %932 = vrot.lane.b32.xlu0 %v926, 96
    %v933 = vpop.permute.xlu0 %932
    %v935 = vmul.f32 %v930, %v933
    %v936 = vlaneseq
    %v937 = vshrl.u32 %v936, 7
    %v938 = vsub.s32 2, %v937
    %v939 = vrot.slane %v486, %v938
    %v940 = vmul.f32 %v939, %v716
    %v941 = vadd.f32 %v935, %v940
    %v942 = vtanh.pop %v926
    %944 = vrot.lane.b32.xlu0 %v914, 96
    %v945 = vpop.permute.xlu0 %944
    %v947 = vmul.f32 %v942, %v945
    %949 = vrot.lane.b32.xlu0 %v947, 96
    %v950 = vpop.permute.xlu0 %949
    %v952 = vmul.f32 %v930, %v950
    %v953 = vmul.f32 %v939, %v729
    %v954 = vadd.f32 %v952, %v953
    %v955 = vadd.f32 %v730, %v954
    %957 = vrot.lane.b32.xlu0 %v954, 32
    %v958 = vpop.permute.xlu0 %957
    %v960 = vsel %vm302, %v883, %v958
    %v962 = vsel %vm175, %v960, 0
    %964 = vmatprep.subr.mxu0 %v145
    %965 = vmatpush1.msra.mxu0 %v144
    %966 = vmatprep.subr.mxu0 %v147
    %967 = vmatpush1.msra.mxu0 %v146
    %968 = vmatprep.subr.mxu0 %v149
    %969 = vmatpush1.msra.mxu0 %v148
    %970 = vmatprep.subr.mxu0 %v151
    %971 = vmatpush1.msra.mxu0 %v150
    %972 = vmatprep.subr.mxu0 %v153
    %973 = vmatpush1.msra.mxu0 %v152
    %974 = vmatprep.subr.mxu0 %v155
    %975 = vmatpush1.msra.mxu0 %v154
    %976 = vmatprep.subr.mxu0 %v157
    %977 = vmatpush1.msra.mxu0 %v156
    %978 = vmatprep.subr.mxu0 %v159
    %979 = vmatpush1.msra.mxu0 %v158
    %980 = vmatprep.subr.mxu0 0.0
    %981 = vmatpush1.msra.mxu0 0.0
    %982 = vmatprep.subr.mxu0 0.0
    %983 = vmatpush1.msra.mxu0 0.0
    %984 = vmatprep.subr.mxu0 0.0
    %985 = vmatpush1.msra.mxu0 0.0
    %986 = vmatprep.subr.mxu0 0.0
    %987 = vmatpush1.msra.mxu0 0.0
    %988 = vmatprep.subr.mxu0 0.0
    %989 = vmatpush1.msra.mxu0 0.0
    %990 = vmatprep.subr.mxu0 0.0
    %991 = vmatpush1.msra.mxu0 0.0
    %992 = vmatprep.subr.mxu0 0.0
    %993 = vmatpush1.msra.mxu0 0.0
    %994 = vmatprep.subr.mxu0 0.0
    %995 = vmatpush1.msra.mxu0 0.0
    %996 = vmatprep.subr.mxu0 0.0
    %997 = vmatpush1.msra.mxu0 0.0
    %998 = vmatprep.subr.mxu0 0.0
    %999 = vmatpush1.msra.mxu0 0.0
    %1000 = vmatprep.subr.mxu0 0.0
    %1001 = vmatpush1.msra.mxu0 0.0
    %1002 = vmatprep.subr.mxu0 0.0
    %1003 = vmatpush1.msra.mxu0 0.0
    %1004 = vmatprep.subr.mxu0 0.0
    %1005 = vmatpush1.msra.mxu0 0.0
    %1006 = vmatprep.subr.mxu0 0.0
    %1007 = vmatpush1.msra.mxu0 0.0
    %1008 = vmatprep.subr.mxu0 0.0
    %1009 = vmatpush1.msra.mxu0 0.0
    %1010 = vmatprep.subr.mxu0 0.0
    %1011 = vmatpush1.msra.mxu0 0.0
    %1012 = vmatprep.subr.mxu0 0.0
    %1013 = vmatpush1.msra.mxu0 0.0
    %1014 = vmatprep.subr.mxu0 0.0
    %1015 = vmatpush1.msra.mxu0 0.0
    %1016 = vmatprep.subr.mxu0 0.0
    %1017 = vmatpush1.msra.mxu0 0.0
    %1018 = vmatprep.subr.mxu0 0.0
    %1019 = vmatpush1.msra.mxu0 0.0
    %1020 = vmatprep.subr.mxu0 0.0
    %1021 = vmatpush1.msra.mxu0 0.0
    %1022 = vmatprep.subr.mxu0 0.0
    %1023 = vmatpush1.msra.mxu0 0.0
    %1024 = vmatprep.subr.mxu0 0.0
    %1025 = vmatpush1.msra.mxu0 0.0
    %1026 = vmatprep.subr.mxu0 0.0
    %1027 = vmatpush1.msra.mxu0 0.0
    %1028 = vmatprep.mubr.f32.mxu0 0.0
    %1029 = vmatmul.mubr.f32.gmra.mrb[0].mxu0 %v962
    %v1030 = vpop.f32.mrb[0].mxu0
    %v1031 = vadd.f32 %v168, %v1030
    %v1032 = vpop.f32.mrb[0].mxu0
    %v1033 = vadd.f32 %v172, %v1032
    %1034 = vdwg.mxu0
    %v1035 = vadd.f32 %v1031, %v141
    %v1036 = vmul.f32 %v253, %v870
    %v1037 = vadd.f32 %v1035, %v1036
    %v1038 = vxor.u32 %v1037, 2147483648
    %v1039 = vmul.f32 %v1038, 1.442695
    %v1040 = vpow.pop %v1039
    %v1041 = vadd.f32 %v1040, 1.0
    %v1042 = vrcp.pop %v1041
    %v1043 = vmul.f32 1.0, %v1042
    %1045 = vrot.lane.b32.xlu0 %v870, 32
    %v1046 = vpop.permute.xlu0 %1045
    %v1048 = vmul.f32 %v253, %v1046
    %v1049 = vadd.f32 %v1035, %v1048
    %v1050 = vxor.u32 %v1049, 2147483648
    %v1051 = vmul.f32 %v1050, 1.442695
    %v1052 = vpow.pop %v1051
    %v1053 = vadd.f32 %v1052, 1.0
    %v1054 = vrcp.pop %v1053
    %v1055 = vmul.f32 1.0, %v1054
    %1056 = vrot.lane.b32.xlu0 %v870, 64
    %v1057 = vpop.permute.xlu0 %1056
    %v1059 = vmul.f32 %v253, %v1057
    %v1060 = vadd.f32 %v1035, %v1059
    %v1061 = vxor.u32 %v1060, 2147483648
    %v1062 = vmul.f32 %v1061, 1.442695
    %v1063 = vpow.pop %v1062
    %v1064 = vadd.f32 %v1063, 1.0
    %v1065 = vrcp.pop %v1064
    %v1066 = vmul.f32 1.0, %v1065
    %v1067 = vmul.f32 %v1055, %v1046
    %v1068 = vtanh.pop %v1035
    %1070 = vrot.lane.b32.xlu0 %v1068, 32
    %v1071 = vpop.permute.xlu0 %1070
    %v1073 = vmul.f32 %v1043, %v1071
    %1075 = vrot.lane.b32.xlu0 %v1073, 32
    %v1076 = vpop.permute.xlu0 %1075
    %v1078 = vadd.f32 %v1067, %v1076
    %v1079 = vlaneseq
    %v1080 = vshrl.u32 %v1079, 7
    %v1081 = vsub.s32 4, %v1080
    %v1082 = vrot.slane %v162, %v1081
    %1084 = vrot.lane.b32.xlu0 %v1078, 96
    %v1085 = vpop.permute.xlu0 %1084
    %v1087 = vmul.f32 %v1082, %v1085
    %v1088 = vlaneseq
    %v1089 = vshrl.u32 %v1088, 7
    %v1090 = vsub.s32 4, %v1089
    %v1091 = vrot.slane %v283, %v1090
    %v1092 = vmul.f32 %v1091, %v870
    %v1093 = vadd.f32 %v1087, %v1092
    %v1094 = vtanh.pop %v1078
    %1096 = vrot.lane.b32.xlu0 %v1066, 96
    %v1097 = vpop.permute.xlu0 %1096
    %v1099 = vmul.f32 %v1094, %v1097
    %1101 = vrot.lane.b32.xlu0 %v1099, 96
    %v1102 = vpop.permute.xlu0 %1101
    %v1104 = vmul.f32 %v1082, %v1102
    %v1105 = vmul.f32 %v1091, %v883
    %v1106 = vadd.f32 %v1104, %v1105
    %v1107 = vmul.f32 %v456, %v941
    %v1108 = vadd.f32 %v1033, %v1107
    %v1109 = vxor.u32 %v1108, 2147483648
    %v1110 = vmul.f32 %v1109, 1.442695
    %v1111 = vpow.pop %v1110
    %v1112 = vadd.f32 %v1111, 1.0
    %v1113 = vrcp.pop %v1112
    %v1114 = vmul.f32 1.0, %v1113
    %1116 = vrot.lane.b32.xlu0 %v941, 32
    %v1117 = vpop.permute.xlu0 %1116
    %v1119 = vmul.f32 %v456, %v1117
    %v1120 = vadd.f32 %v1033, %v1119
    %v1121 = vxor.u32 %v1120, 2147483648
    %v1122 = vmul.f32 %v1121, 1.442695
    %v1123 = vpow.pop %v1122
    %v1124 = vadd.f32 %v1123, 1.0
    %v1125 = vrcp.pop %v1124
    %v1126 = vmul.f32 1.0, %v1125
    %1127 = vrot.lane.b32.xlu0 %v941, 64
    %v1128 = vpop.permute.xlu0 %1127
    %v1130 = vmul.f32 %v456, %v1128
    %v1131 = vadd.f32 %v1033, %v1130
    %v1132 = vxor.u32 %v1131, 2147483648
    %v1133 = vmul.f32 %v1132, 1.442695
    %v1134 = vpow.pop %v1133
    %v1135 = vadd.f32 %v1134, 1.0
    %v1136 = vrcp.pop %v1135
    %v1137 = vmul.f32 1.0, %v1136
    %v1138 = vmul.f32 %v1126, %v1117
    %v1139 = vtanh.pop %v1033
    %1141 = vrot.lane.b32.xlu0 %v1139, 32
    %v1142 = vpop.permute.xlu0 %1141
    %v1144 = vmul.f32 %v1114, %v1142
    %1146 = vrot.lane.b32.xlu0 %v1144, 32
    %v1147 = vpop.permute.xlu0 %1146
    %v1149 = vadd.f32 %v1138, %v1147
    %v1150 = vlaneseq
    %v1151 = vshrl.u32 %v1150, 7
    %v1152 = vsub.s32 3, %v1151
    %v1153 = vrot.slane %v163, %v1152
    %1155 = vrot.lane.b32.xlu0 %v1149, 96
    %v1156 = vpop.permute.xlu0 %1155
    %v1158 = vmul.f32 %v1153, %v1156
    %v1159 = vlaneseq
    %v1160 = vshrl.u32 %v1159, 7
    %v1161 = vsub.s32 3, %v1160
    %v1162 = vrot.slane %v486, %v1161
    %v1163 = vmul.f32 %v1162, %v941
    %v1164 = vadd.f32 %v1158, %v1163
    %v1165 = vtanh.pop %v1149
    %1167 = vrot.lane.b32.xlu0 %v1137, 96
    %v1168 = vpop.permute.xlu0 %1167
    %v1170 = vmul.f32 %v1165, %v1168
    %1172 = vrot.lane.b32.xlu0 %v1170, 96
    %v1173 = vpop.permute.xlu0 %1172
    %v1175 = vmul.f32 %v1153, %v1173
    %v1176 = vmul.f32 %v1162, %v954
    %v1177 = vadd.f32 %v1175, %v1176
    %v1178 = vadd.f32 %v955, %v1177
    %1180 = vrot.lane.b32.xlu0 %v1177, 32
    %v1181 = vpop.permute.xlu0 %1180
    %v1183 = vsel %vm302, %v1106, %v1181
    %v1185 = vsel %vm175, %v1183, 0
    %1187 = vmatprep.subr.mxu0 %v145
    %1188 = vmatpush1.msra.mxu0 %v144
    %1189 = vmatprep.subr.mxu0 %v147
    %1190 = vmatpush1.msra.mxu0 %v146
    %1191 = vmatprep.subr.mxu0 %v149
    %1192 = vmatpush1.msra.mxu0 %v148
    %1193 = vmatprep.subr.mxu0 %v151
    %1194 = vmatpush1.msra.mxu0 %v150
    %1195 = vmatprep.subr.mxu0 %v153
    %1196 = vmatpush1.msra.mxu0 %v152
    %1197 = vmatprep.subr.mxu0 %v155
    %1198 = vmatpush1.msra.mxu0 %v154
    %1199 = vmatprep.subr.mxu0 %v157
    %1200 = vmatpush1.msra.mxu0 %v156
    %1201 = vmatprep.subr.mxu0 %v159
    %1202 = vmatpush1.msra.mxu0 %v158
    %1203 = vmatprep.subr.mxu0 0.0
    %1204 = vmatpush1.msra.mxu0 0.0
    %1205 = vmatprep.subr.mxu0 0.0
    %1206 = vmatpush1.msra.mxu0 0.0
    %1207 = vmatprep.subr.mxu0 0.0
    %1208 = vmatpush1.msra.mxu0 0.0
    %1209 = vmatprep.subr.mxu0 0.0
    %1210 = vmatpush1.msra.mxu0 0.0
    %1211 = vmatprep.subr.mxu0 0.0
    %1212 = vmatpush1.msra.mxu0 0.0
    %1213 = vmatprep.subr.mxu0 0.0
    %1214 = vmatpush1.msra.mxu0 0.0
    %1215 = vmatprep.subr.mxu0 0.0
    %1216 = vmatpush1.msra.mxu0 0.0
    %1217 = vmatprep.subr.mxu0 0.0
    %1218 = vmatpush1.msra.mxu0 0.0
    %1219 = vmatprep.subr.mxu0 0.0
    %1220 = vmatpush1.msra.mxu0 0.0
    %1221 = vmatprep.subr.mxu0 0.0
    %1222 = vmatpush1.msra.mxu0 0.0
    %1223 = vmatprep.subr.mxu0 0.0
    %1224 = vmatpush1.msra.mxu0 0.0
    %1225 = vmatprep.subr.mxu0 0.0
    %1226 = vmatpush1.msra.mxu0 0.0
    %1227 = vmatprep.subr.mxu0 0.0
    %1228 = vmatpush1.msra.mxu0 0.0
    %1229 = vmatprep.subr.mxu0 0.0
    %1230 = vmatpush1.msra.mxu0 0.0
    %1231 = vmatprep.subr.mxu0 0.0
    %1232 = vmatpush1.msra.mxu0 0.0
    %1233 = vmatprep.subr.mxu0 0.0
    %1234 = vmatpush1.msra.mxu0 0.0
    %1235 = vmatprep.subr.mxu0 0.0
    %1236 = vmatpush1.msra.mxu0 0.0
    %1237 = vmatprep.subr.mxu0 0.0
    %1238 = vmatpush1.msra.mxu0 0.0
    %1239 = vmatprep.subr.mxu0 0.0
    %1240 = vmatpush1.msra.mxu0 0.0
    %1241 = vmatprep.subr.mxu0 0.0
    %1242 = vmatpush1.msra.mxu0 0.0
    %1243 = vmatprep.subr.mxu0 0.0
    %1244 = vmatpush1.msra.mxu0 0.0
    %1245 = vmatprep.subr.mxu0 0.0
    %1246 = vmatpush1.msra.mxu0 0.0
    %1247 = vmatprep.subr.mxu0 0.0
    %1248 = vmatpush1.msra.mxu0 0.0
    %1249 = vmatprep.subr.mxu0 0.0
    %1250 = vmatpush1.msra.mxu0 0.0
    %1251 = vmatprep.mubr.f32.mxu0 0.0
    %1252 = vmatmul.mubr.f32.gmra.mrb[0].mxu0 %v1185
    %v1253 = vpop.f32.mrb[0].mxu0
    %v1254 = vadd.f32 %v168, %v1253
    %v1255 = vpop.f32.mrb[0].mxu0
    %v1256 = vadd.f32 %v172, %v1255
    %1257 = vdwg.mxu0
    %v1259 = vrot.slane %v141, 2
    %v1261 = vadd.f32 %v1254, %v1259
    %v1262 = vmul.f32 %v253, %v1093
    %v1263 = vadd.f32 %v1261, %v1262
    %v1264 = vxor.u32 %v1263, 2147483648
    %v1265 = vmul.f32 %v1264, 1.442695
    %v1266 = vpow.pop %v1265
    %v1267 = vadd.f32 %v1266, 1.0
    %v1268 = vrcp.pop %v1267
    %v1269 = vmul.f32 1.0, %v1268
    %1271 = vrot.lane.b32.xlu0 %v1093, 32
    %v1272 = vpop.permute.xlu0 %1271
    %v1274 = vmul.f32 %v253, %v1272
    %v1275 = vadd.f32 %v1261, %v1274
    %v1276 = vxor.u32 %v1275, 2147483648
    %v1277 = vmul.f32 %v1276, 1.442695
    %v1278 = vpow.pop %v1277
    %v1279 = vadd.f32 %v1278, 1.0
    %v1280 = vrcp.pop %v1279
    %v1281 = vmul.f32 1.0, %v1280
    %1282 = vrot.lane.b32.xlu0 %v1093, 64
    %v1283 = vpop.permute.xlu0 %1282
    %v1285 = vmul.f32 %v253, %v1283
    %v1286 = vadd.f32 %v1261, %v1285
    %v1287 = vxor.u32 %v1286, 2147483648
    %v1288 = vmul.f32 %v1287, 1.442695
    %v1289 = vpow.pop %v1288
    %v1290 = vadd.f32 %v1289, 1.0
    %v1291 = vrcp.pop %v1290
    %v1292 = vmul.f32 1.0, %v1291
    %v1293 = vmul.f32 %v1281, %v1272
    %v1294 = vtanh.pop %v1261
    %1296 = vrot.lane.b32.xlu0 %v1294, 32
    %v1297 = vpop.permute.xlu0 %1296
    %v1299 = vmul.f32 %v1269, %v1297
    %1301 = vrot.lane.b32.xlu0 %v1299, 32
    %v1302 = vpop.permute.xlu0 %1301
    %v1304 = vadd.f32 %v1293, %v1302
    %v1305 = vlaneseq
    %v1306 = vshrl.u32 %v1305, 7
    %v1307 = vsub.s32 5, %v1306
    %v1308 = vrot.slane %v162, %v1307
    %1310 = vrot.lane.b32.xlu0 %v1304, 96
    %v1311 = vpop.permute.xlu0 %1310
    %v1313 = vmul.f32 %v1308, %v1311
    %v1314 = vlaneseq
    %v1315 = vshrl.u32 %v1314, 7
    %v1316 = vsub.s32 5, %v1315
    %v1317 = vrot.slane %v283, %v1316
    %v1318 = vmul.f32 %v1317, %v1093
    %v1319 = vadd.f32 %v1313, %v1318
    %v1320 = vtanh.pop %v1304
    %1322 = vrot.lane.b32.xlu0 %v1292, 96
    %v1323 = vpop.permute.xlu0 %1322
    %v1325 = vmul.f32 %v1320, %v1323
    %1327 = vrot.lane.b32.xlu0 %v1325, 96
    %v1328 = vpop.permute.xlu0 %1327
    %v1330 = vmul.f32 %v1308, %v1328
    %v1331 = vmul.f32 %v1317, %v1106
    %v1332 = vadd.f32 %v1330, %v1331
    %v1333 = vmul.f32 %v456, %v1164
    %v1334 = vadd.f32 %v1256, %v1333
    %v1335 = vxor.u32 %v1334, 2147483648
    %v1336 = vmul.f32 %v1335, 1.442695
    %v1337 = vpow.pop %v1336
    %v1338 = vadd.f32 %v1337, 1.0
    %v1339 = vrcp.pop %v1338
    %v1340 = vmul.f32 1.0, %v1339
    %1342 = vrot.lane.b32.xlu0 %v1164, 32
    %v1343 = vpop.permute.xlu0 %1342
    %v1345 = vmul.f32 %v456, %v1343
    %v1346 = vadd.f32 %v1256, %v1345
    %v1347 = vxor.u32 %v1346, 2147483648
    %v1348 = vmul.f32 %v1347, 1.442695
    %v1349 = vpow.pop %v1348
    %v1350 = vadd.f32 %v1349, 1.0
    %v1351 = vrcp.pop %v1350
    %v1352 = vmul.f32 1.0, %v1351
    %1353 = vrot.lane.b32.xlu0 %v1164, 64
    %v1354 = vpop.permute.xlu0 %1353
    %v1356 = vmul.f32 %v456, %v1354
    %v1357 = vadd.f32 %v1256, %v1356
    %v1358 = vxor.u32 %v1357, 2147483648
    %v1359 = vmul.f32 %v1358, 1.442695
    %v1360 = vpow.pop %v1359
    %v1361 = vadd.f32 %v1360, 1.0
    %v1362 = vrcp.pop %v1361
    %v1363 = vmul.f32 1.0, %v1362
    %v1364 = vmul.f32 %v1352, %v1343
    %v1365 = vtanh.pop %v1256
    %1367 = vrot.lane.b32.xlu0 %v1365, 32
    %v1368 = vpop.permute.xlu0 %1367
    %v1370 = vmul.f32 %v1340, %v1368
    %1372 = vrot.lane.b32.xlu0 %v1370, 32
    %v1373 = vpop.permute.xlu0 %1372
    %v1375 = vadd.f32 %v1364, %v1373
    %v1376 = vlaneseq
    %v1377 = vshrl.u32 %v1376, 7
    %v1378 = vsub.s32 4, %v1377
    %v1379 = vrot.slane %v163, %v1378
    %1381 = vrot.lane.b32.xlu0 %v1375, 96
    %v1382 = vpop.permute.xlu0 %1381
    %v1384 = vmul.f32 %v1379, %v1382
    %v1385 = vlaneseq
    %v1386 = vshrl.u32 %v1385, 7
    %v1387 = vsub.s32 4, %v1386
    %v1388 = vrot.slane %v486, %v1387
    %v1389 = vmul.f32 %v1388, %v1164
    %v1390 = vadd.f32 %v1384, %v1389
    %v1391 = vtanh.pop %v1375
    %1393 = vrot.lane.b32.xlu0 %v1363, 96
    %v1394 = vpop.permute.xlu0 %1393
    %v1396 = vmul.f32 %v1391, %v1394
    %1398 = vrot.lane.b32.xlu0 %v1396, 96
    %v1399 = vpop.permute.xlu0 %1398
    %v1401 = vmul.f32 %v1379, %v1399
    %v1402 = vmul.f32 %v1388, %v1177
    %v1403 = vadd.f32 %v1401, %v1402
    %v1404 = vadd.f32 %v1178, %v1403
    %1406 = vrot.lane.b32.xlu0 %v1403, 32
    %v1407 = vpop.permute.xlu0 %1406
    %v1409 = vsel %vm302, %v1332, %v1407
    %v1411 = vsel %vm175, %v1409, 0
    %1413 = vmatprep.subr.mxu0 %v145
    %1414 = vmatpush1.msra.mxu0 %v144
    %1415 = vmatprep.subr.mxu0 %v147
    %1416 = vmatpush1.msra.mxu0 %v146
    %1417 = vmatprep.subr.mxu0 %v149
    %1418 = vmatpush1.msra.mxu0 %v148
    %1419 = vmatprep.subr.mxu0 %v151
    %1420 = vmatpush1.msra.mxu0 %v150
    %1421 = vmatprep.subr.mxu0 %v153
    %1422 = vmatpush1.msra.mxu0 %v152
    %1423 = vmatprep.subr.mxu0 %v155
    %1424 = vmatpush1.msra.mxu0 %v154
    %1425 = vmatprep.subr.mxu0 %v157
    %1426 = vmatpush1.msra.mxu0 %v156
    %1427 = vmatprep.subr.mxu0 %v159
    %1428 = vmatpush1.msra.mxu0 %v158
    %1429 = vmatprep.subr.mxu0 0.0
    %1430 = vmatpush1.msra.mxu0 0.0
    %1431 = vmatprep.subr.mxu0 0.0
    %1432 = vmatpush1.msra.mxu0 0.0
    %1433 = vmatprep.subr.mxu0 0.0
    %1434 = vmatpush1.msra.mxu0 0.0
    %1435 = vmatprep.subr.mxu0 0.0
    %1436 = vmatpush1.msra.mxu0 0.0
    %1437 = vmatprep.subr.mxu0 0.0
    %1438 = vmatpush1.msra.mxu0 0.0
    %1439 = vmatprep.subr.mxu0 0.0
    %1440 = vmatpush1.msra.mxu0 0.0
    %1441 = vmatprep.subr.mxu0 0.0
    %1442 = vmatpush1.msra.mxu0 0.0
    %1443 = vmatprep.subr.mxu0 0.0
    %1444 = vmatpush1.msra.mxu0 0.0
    %1445 = vmatprep.subr.mxu0 0.0
    %1446 = vmatpush1.msra.mxu0 0.0
    %1447 = vmatprep.subr.mxu0 0.0
    %1448 = vmatpush1.msra.mxu0 0.0
    %1449 = vmatprep.subr.mxu0 0.0
    %1450 = vmatpush1.msra.mxu0 0.0
    %1451 = vmatprep.subr.mxu0 0.0
    %1452 = vmatpush1.msra.mxu0 0.0
    %1453 = vmatprep.subr.mxu0 0.0
    %1454 = vmatpush1.msra.mxu0 0.0
    %1455 = vmatprep.subr.mxu0 0.0
    %1456 = vmatpush1.msra.mxu0 0.0
    %1457 = vmatprep.subr.mxu0 0.0
    %1458 = vmatpush1.msra.mxu0 0.0
    %1459 = vmatprep.subr.mxu0 0.0
    %1460 = vmatpush1.msra.mxu0 0.0
    %1461 = vmatprep.subr.mxu0 0.0
    %1462 = vmatpush1.msra.mxu0 0.0
    %1463 = vmatprep.subr.mxu0 0.0
    %1464 = vmatpush1.msra.mxu0 0.0
    %1465 = vmatprep.subr.mxu0 0.0
    %1466 = vmatpush1.msra.mxu0 0.0
    %1467 = vmatprep.subr.mxu0 0.0
    %1468 = vmatpush1.msra.mxu0 0.0
    %1469 = vmatprep.subr.mxu0 0.0
    %1470 = vmatpush1.msra.mxu0 0.0
    %1471 = vmatprep.subr.mxu0 0.0
    %1472 = vmatpush1.msra.mxu0 0.0
    %1473 = vmatprep.subr.mxu0 0.0
    %1474 = vmatpush1.msra.mxu0 0.0
    %1475 = vmatprep.subr.mxu0 0.0
    %1476 = vmatpush1.msra.mxu0 0.0
    %1477 = vmatprep.mubr.f32.mxu0 0.0
    %1478 = vmatmul.mubr.f32.gmra.mrb[0].mxu0 %v1411
    %v1479 = vpop.f32.mrb[0].mxu0
    %v1480 = vadd.f32 %v168, %v1479
    %v1481 = vpop.f32.mrb[0].mxu0
    %v1482 = vadd.f32 %v172, %v1481
    %1483 = vdwg.mxu0
    %v1484 = vrot.slane %v141, 4
    %v1486 = vadd.f32 %v1480, %v1484
    %v1487 = vmul.f32 %v253, %v1319
    %v1488 = vadd.f32 %v1486, %v1487
    %v1489 = vxor.u32 %v1488, 2147483648
    %v1490 = vmul.f32 %v1489, 1.442695
    %v1491 = vpow.pop %v1490
    %v1492 = vadd.f32 %v1491, 1.0
    %v1493 = vrcp.pop %v1492
    %v1494 = vmul.f32 1.0, %v1493
    %1496 = vrot.lane.b32.xlu0 %v1319, 32
    %v1497 = vpop.permute.xlu0 %1496
    %v1499 = vmul.f32 %v253, %v1497
    %v1500 = vadd.f32 %v1486, %v1499
    %v1501 = vxor.u32 %v1500, 2147483648
    %v1502 = vmul.f32 %v1501, 1.442695
    %v1503 = vpow.pop %v1502
    %v1504 = vadd.f32 %v1503, 1.0
    %v1505 = vrcp.pop %v1504
    %v1506 = vmul.f32 1.0, %v1505
    %1507 = vrot.lane.b32.xlu0 %v1319, 64
    %v1508 = vpop.permute.xlu0 %1507
    %v1510 = vmul.f32 %v253, %v1508
    %v1511 = vadd.f32 %v1486, %v1510
    %v1512 = vxor.u32 %v1511, 2147483648
    %v1513 = vmul.f32 %v1512, 1.442695
    %v1514 = vpow.pop %v1513
    %v1515 = vadd.f32 %v1514, 1.0
    %v1516 = vrcp.pop %v1515
    %v1517 = vmul.f32 1.0, %v1516
    %v1518 = vmul.f32 %v1506, %v1497
    %v1519 = vtanh.pop %v1486
    %1521 = vrot.lane.b32.xlu0 %v1519, 32
    %v1522 = vpop.permute.xlu0 %1521
    %v1524 = vmul.f32 %v1494, %v1522
    %1526 = vrot.lane.b32.xlu0 %v1524, 32
    %v1527 = vpop.permute.xlu0 %1526
    %v1529 = vadd.f32 %v1518, %v1527
    %v1530 = vlaneseq
    %v1531 = vshrl.u32 %v1530, 7
    %v1532 = vsub.s32 6, %v1531
    %v1533 = vrot.slane %v162, %v1532
    %1535 = vrot.lane.b32.xlu0 %v1529, 96
    %v1536 = vpop.permute.xlu0 %1535
    %v1538 = vmul.f32 %v1533, %v1536
    %v1539 = vlaneseq
    %v1540 = vshrl.u32 %v1539, 7
    %v1541 = vsub.s32 6, %v1540
    %v1542 = vrot.slane %v283, %v1541
    %v1543 = vmul.f32 %v1542, %v1319
    %v1544 = vadd.f32 %v1538, %v1543
    %v1545 = vtanh.pop %v1529
    %1547 = vrot.lane.b32.xlu0 %v1517, 96
    %v1548 = vpop.permute.xlu0 %1547
    %v1550 = vmul.f32 %v1545, %v1548
    %1552 = vrot.lane.b32.xlu0 %v1550, 96
    %v1553 = vpop.permute.xlu0 %1552
    %v1555 = vmul.f32 %v1533, %v1553
    %v1556 = vmul.f32 %v1542, %v1332
    %v1557 = vadd.f32 %v1555, %v1556
    %v1558 = vmul.f32 %v456, %v1390
    %v1559 = vadd.f32 %v1482, %v1558
    %v1560 = vxor.u32 %v1559, 2147483648
    %v1561 = vmul.f32 %v1560, 1.442695
    %v1562 = vpow.pop %v1561
    %v1563 = vadd.f32 %v1562, 1.0
    %v1564 = vrcp.pop %v1563
    %v1565 = vmul.f32 1.0, %v1564
    %1567 = vrot.lane.b32.xlu0 %v1390, 32
    %v1568 = vpop.permute.xlu0 %1567
    %v1570 = vmul.f32 %v456, %v1568
    %v1571 = vadd.f32 %v1482, %v1570
    %v1572 = vxor.u32 %v1571, 2147483648
    %v1573 = vmul.f32 %v1572, 1.442695
    %v1574 = vpow.pop %v1573
    %v1575 = vadd.f32 %v1574, 1.0
    %v1576 = vrcp.pop %v1575
    %v1577 = vmul.f32 1.0, %v1576
    %1578 = vrot.lane.b32.xlu0 %v1390, 64
    %v1579 = vpop.permute.xlu0 %1578
    %v1581 = vmul.f32 %v456, %v1579
    %v1582 = vadd.f32 %v1482, %v1581
    %v1583 = vxor.u32 %v1582, 2147483648
    %v1584 = vmul.f32 %v1583, 1.442695
    %v1585 = vpow.pop %v1584
    %v1586 = vadd.f32 %v1585, 1.0
    %v1587 = vrcp.pop %v1586
    %v1588 = vmul.f32 1.0, %v1587
    %v1589 = vmul.f32 %v1577, %v1568
    %v1590 = vtanh.pop %v1482
    %1592 = vrot.lane.b32.xlu0 %v1590, 32
    %v1593 = vpop.permute.xlu0 %1592
    %v1595 = vmul.f32 %v1565, %v1593
    %1597 = vrot.lane.b32.xlu0 %v1595, 32
    %v1598 = vpop.permute.xlu0 %1597
    %v1600 = vadd.f32 %v1589, %v1598
    %v1601 = vlaneseq
    %v1602 = vshrl.u32 %v1601, 7
    %v1603 = vsub.s32 5, %v1602
    %v1604 = vrot.slane %v163, %v1603
    %1606 = vrot.lane.b32.xlu0 %v1600, 96
    %v1607 = vpop.permute.xlu0 %1606
    %v1609 = vmul.f32 %v1604, %v1607
    %v1610 = vlaneseq
    %v1611 = vshrl.u32 %v1610, 7
    %v1612 = vsub.s32 5, %v1611
    %v1613 = vrot.slane %v486, %v1612
    %v1614 = vmul.f32 %v1613, %v1390
    %v1615 = vadd.f32 %v1609, %v1614
    %v1616 = vtanh.pop %v1600
    %1618 = vrot.lane.b32.xlu0 %v1588, 96
    %v1619 = vpop.permute.xlu0 %1618
    %v1621 = vmul.f32 %v1616, %v1619
    %1623 = vrot.lane.b32.xlu0 %v1621, 96
    %v1624 = vpop.permute.xlu0 %1623
    %v1626 = vmul.f32 %v1604, %v1624
    %v1627 = vmul.f32 %v1613, %v1403
    %v1628 = vadd.f32 %v1626, %v1627
    %v1629 = vadd.f32 %v1404, %v1628
    %1631 = vrot.lane.b32.xlu0 %v1628, 32
    %v1632 = vpop.permute.xlu0 %1631
    %v1634 = vsel %vm302, %v1557, %v1632
    %v1636 = vsel %vm175, %v1634, 0
    %1638 = vmatprep.subr.mxu0 %v145
    %1639 = vmatpush1.msra.mxu0 %v144
    %1640 = vmatprep.subr.mxu0 %v147
    %1641 = vmatpush1.msra.mxu0 %v146
    %1642 = vmatprep.subr.mxu0 %v149
    %1643 = vmatpush1.msra.mxu0 %v148
    %1644 = vmatprep.subr.mxu0 %v151
    %1645 = vmatpush1.msra.mxu0 %v150
    %1646 = vmatprep.subr.mxu0 %v153
    %1647 = vmatpush1.msra.mxu0 %v152
    %1648 = vmatprep.subr.mxu0 %v155
    %1649 = vmatpush1.msra.mxu0 %v154
    %1650 = vmatprep.subr.mxu0 %v157
    %1651 = vmatpush1.msra.mxu0 %v156
    %1652 = vmatprep.subr.mxu0 %v159
    %1653 = vmatpush1.msra.mxu0 %v158
    %1654 = vmatprep.subr.mxu0 0.0
    %1655 = vmatpush1.msra.mxu0 0.0
    %1656 = vmatprep.subr.mxu0 0.0
    %1657 = vmatpush1.msra.mxu0 0.0
    %1658 = vmatprep.subr.mxu0 0.0
    %1659 = vmatpush1.msra.mxu0 0.0
    %1660 = vmatprep.subr.mxu0 0.0
    %1661 = vmatpush1.msra.mxu0 0.0
    %1662 = vmatprep.subr.mxu0 0.0
    %1663 = vmatpush1.msra.mxu0 0.0
    %1664 = vmatprep.subr.mxu0 0.0
    %1665 = vmatpush1.msra.mxu0 0.0
    %1666 = vmatprep.subr.mxu0 0.0
    %1667 = vmatpush1.msra.mxu0 0.0
    %1668 = vmatprep.subr.mxu0 0.0
    %1669 = vmatpush1.msra.mxu0 0.0
    %1670 = vmatprep.subr.mxu0 0.0
    %1671 = vmatpush1.msra.mxu0 0.0
    %1672 = vmatprep.subr.mxu0 0.0
    %1673 = vmatpush1.msra.mxu0 0.0
    %1674 = vmatprep.subr.mxu0 0.0
    %1675 = vmatpush1.msra.mxu0 0.0
    %1676 = vmatprep.subr.mxu0 0.0
    %1677 = vmatpush1.msra.mxu0 0.0
    %1678 = vmatprep.subr.mxu0 0.0
    %1679 = vmatpush1.msra.mxu0 0.0
    %1680 = vmatprep.subr.mxu0 0.0
    %1681 = vmatpush1.msra.mxu0 0.0
    %1682 = vmatprep.subr.mxu0 0.0
    %1683 = vmatpush1.msra.mxu0 0.0
    %1684 = vmatprep.subr.mxu0 0.0
    %1685 = vmatpush1.msra.mxu0 0.0
    %1686 = vmatprep.subr.mxu0 0.0
    %1687 = vmatpush1.msra.mxu0 0.0
    %1688 = vmatprep.subr.mxu0 0.0
    %1689 = vmatpush1.msra.mxu0 0.0
    %1690 = vmatprep.subr.mxu0 0.0
    %1691 = vmatpush1.msra.mxu0 0.0
    %1692 = vmatprep.subr.mxu0 0.0
    %1693 = vmatpush1.msra.mxu0 0.0
    %1694 = vmatprep.subr.mxu0 0.0
    %1695 = vmatpush1.msra.mxu0 0.0
    %1696 = vmatprep.subr.mxu0 0.0
    %1697 = vmatpush1.msra.mxu0 0.0
    %1698 = vmatprep.subr.mxu0 0.0
    %1699 = vmatpush1.msra.mxu0 0.0
    %1700 = vmatprep.subr.mxu0 0.0
    %1701 = vmatpush1.msra.mxu0 0.0
    %1702 = vmatprep.mubr.f32.mxu0 0.0
    %1703 = vmatmul.mubr.f32.gmra.mrb[0].mxu0 %v1636
    %v1704 = vpop.f32.mrb[0].mxu0
    %v1705 = vadd.f32 %v168, %v1704
    %v1706 = vpop.f32.mrb[0].mxu0
    %v1707 = vadd.f32 %v172, %v1706
    %1708 = vdwg.mxu0
    %v1709 = vrot.slane %v141, 6
    %v1711 = vadd.f32 %v1705, %v1709
    %v1712 = vmul.f32 %v253, %v1544
    %v1713 = vadd.f32 %v1711, %v1712
    %v1714 = vxor.u32 %v1713, 2147483648
    %v1715 = vmul.f32 %v1714, 1.442695
    %v1716 = vpow.pop %v1715
    %v1717 = vadd.f32 %v1716, 1.0
    %v1718 = vrcp.pop %v1717
    %v1719 = vmul.f32 1.0, %v1718
    %1721 = vrot.lane.b32.xlu0 %v1544, 32
    %v1722 = vpop.permute.xlu0 %1721
    %v1724 = vmul.f32 %v253, %v1722
    %v1725 = vadd.f32 %v1711, %v1724
    %v1726 = vxor.u32 %v1725, 2147483648
    %v1727 = vmul.f32 %v1726, 1.442695
    %v1728 = vpow.pop %v1727
    %v1729 = vadd.f32 %v1728, 1.0
    %v1730 = vrcp.pop %v1729
    %v1731 = vmul.f32 1.0, %v1730
    %1732 = vrot.lane.b32.xlu0 %v1544, 64
    %v1733 = vpop.permute.xlu0 %1732
    %v1735 = vmul.f32 %v253, %v1733
    %v1736 = vadd.f32 %v1711, %v1735
    %v1737 = vxor.u32 %v1736, 2147483648
    %v1738 = vmul.f32 %v1737, 1.442695
    %v1739 = vpow.pop %v1738
    %v1740 = vadd.f32 %v1739, 1.0
    %v1741 = vrcp.pop %v1740
    %v1742 = vmul.f32 1.0, %v1741
    %v1743 = vmul.f32 %v1731, %v1722
    %v1744 = vtanh.pop %v1711
    %1746 = vrot.lane.b32.xlu0 %v1744, 32
    %v1747 = vpop.permute.xlu0 %1746
    %v1749 = vmul.f32 %v1719, %v1747
    %1751 = vrot.lane.b32.xlu0 %v1749, 32
    %v1752 = vpop.permute.xlu0 %1751
    %v1754 = vadd.f32 %v1743, %v1752
    %v1755 = vtanh.pop %v1754
    %1757 = vrot.lane.b32.xlu0 %v1742, 96
    %v1758 = vpop.permute.xlu0 %1757
    %v1760 = vmul.f32 %v1755, %v1758
    %v1761 = vlaneseq
    %v1762 = vshrl.u32 %v1761, 7
    %v1763 = vsub.s32 7, %v1762
    %v1764 = vrot.slane %v162, %v1763
    %1766 = vrot.lane.b32.xlu0 %v1760, 96
    %v1767 = vpop.permute.xlu0 %1766
    %v1769 = vmul.f32 %v1764, %v1767
    %v1770 = vlaneseq
    %v1771 = vshrl.u32 %v1770, 7
    %v1772 = vsub.s32 7, %v1771
    %v1773 = vrot.slane %v283, %v1772
    %v1774 = vmul.f32 %v1773, %v1557
    %v1775 = vadd.f32 %v1769, %v1774
    %v1776 = vmul.f32 %v456, %v1615
    %v1777 = vadd.f32 %v1707, %v1776
    %v1778 = vxor.u32 %v1777, 2147483648
    %v1779 = vmul.f32 %v1778, 1.442695
    %v1780 = vpow.pop %v1779
    %v1781 = vadd.f32 %v1780, 1.0
    %v1782 = vrcp.pop %v1781
    %v1783 = vmul.f32 1.0, %v1782
    %1785 = vrot.lane.b32.xlu0 %v1615, 32
    %v1786 = vpop.permute.xlu0 %1785
    %v1788 = vmul.f32 %v456, %v1786
    %v1789 = vadd.f32 %v1707, %v1788
    %v1790 = vxor.u32 %v1789, 2147483648
    %v1791 = vmul.f32 %v1790, 1.442695
    %v1792 = vpow.pop %v1791
    %v1793 = vadd.f32 %v1792, 1.0
    %v1794 = vrcp.pop %v1793
    %v1795 = vmul.f32 1.0, %v1794
    %1796 = vrot.lane.b32.xlu0 %v1615, 64
    %v1797 = vpop.permute.xlu0 %1796
    %v1799 = vmul.f32 %v456, %v1797
    %v1800 = vadd.f32 %v1707, %v1799
    %v1801 = vxor.u32 %v1800, 2147483648
    %v1802 = vmul.f32 %v1801, 1.442695
    %v1803 = vpow.pop %v1802
    %v1804 = vadd.f32 %v1803, 1.0
    %v1805 = vrcp.pop %v1804
    %v1806 = vmul.f32 1.0, %v1805
    %v1807 = vmul.f32 %v1795, %v1786
    %v1808 = vtanh.pop %v1707
    %1810 = vrot.lane.b32.xlu0 %v1808, 32
    %v1811 = vpop.permute.xlu0 %1810
    %v1813 = vmul.f32 %v1783, %v1811
    %1815 = vrot.lane.b32.xlu0 %v1813, 32
    %v1816 = vpop.permute.xlu0 %1815
    %v1818 = vadd.f32 %v1807, %v1816
    %v1819 = vlaneseq
    %v1820 = vshrl.u32 %v1819, 7
    %v1821 = vsub.s32 6, %v1820
    %v1822 = vrot.slane %v163, %v1821
    %1824 = vrot.lane.b32.xlu0 %v1818, 96
    %v1825 = vpop.permute.xlu0 %1824
    %v1827 = vmul.f32 %v1822, %v1825
    %v1828 = vlaneseq
    %v1829 = vshrl.u32 %v1828, 7
    %v1830 = vsub.s32 6, %v1829
    %v1831 = vrot.slane %v486, %v1830
    %v1832 = vmul.f32 %v1831, %v1615
    %v1833 = vadd.f32 %v1827, %v1832
    %v1834 = vtanh.pop %v1818
    %1836 = vrot.lane.b32.xlu0 %v1806, 96
    %v1837 = vpop.permute.xlu0 %1836
    %v1839 = vmul.f32 %v1834, %v1837
    %1841 = vrot.lane.b32.xlu0 %v1839, 96
    %v1842 = vpop.permute.xlu0 %1841
    %v1844 = vmul.f32 %v1822, %v1842
    %v1845 = vmul.f32 %v1831, %v1628
    %v1846 = vadd.f32 %v1844, %v1845
    %v1847 = vadd.f32 %v1629, %v1846
    %1849 = vrot.lane.b32.xlu0 %v1846, 32
    %v1850 = vpop.permute.xlu0 %1849
    %v1852 = vsel %vm302, %v1775, %v1850
    %v1854 = vsel %vm175, %v1852, 0
    %1856 = vmatprep.subr.mxu0 %v145
    %1857 = vmatpush1.msra.mxu0 %v144
    %1858 = vmatprep.subr.mxu0 %v147
    %1859 = vmatpush1.msra.mxu0 %v146
    %1860 = vmatprep.subr.mxu0 %v149
    %1861 = vmatpush1.msra.mxu0 %v148
    %1862 = vmatprep.subr.mxu0 %v151
    %1863 = vmatpush1.msra.mxu0 %v150
    %1864 = vmatprep.subr.mxu0 %v153
    %1865 = vmatpush1.msra.mxu0 %v152
    %1866 = vmatprep.subr.mxu0 %v155
    %1867 = vmatpush1.msra.mxu0 %v154
    %1868 = vmatprep.subr.mxu0 %v157
    %1869 = vmatpush1.msra.mxu0 %v156
    %1870 = vmatprep.subr.mxu0 %v159
    %1871 = vmatpush1.msra.mxu0 %v158
    %1872 = vmatprep.subr.mxu0 0.0
    %1873 = vmatpush1.msra.mxu0 0.0
    %1874 = vmatprep.subr.mxu0 0.0
    %1875 = vmatpush1.msra.mxu0 0.0
    %1876 = vmatprep.subr.mxu0 0.0
    %1877 = vmatpush1.msra.mxu0 0.0
    %1878 = vmatprep.subr.mxu0 0.0
    %1879 = vmatpush1.msra.mxu0 0.0
    %1880 = vmatprep.subr.mxu0 0.0
    %1881 = vmatpush1.msra.mxu0 0.0
    %1882 = vmatprep.subr.mxu0 0.0
    %1883 = vmatpush1.msra.mxu0 0.0
    %1884 = vmatprep.subr.mxu0 0.0
    %1885 = vmatpush1.msra.mxu0 0.0
    %1886 = vmatprep.subr.mxu0 0.0
    %1887 = vmatpush1.msra.mxu0 0.0
    %1888 = vmatprep.subr.mxu0 0.0
    %1889 = vmatpush1.msra.mxu0 0.0
    %1890 = vmatprep.subr.mxu0 0.0
    %1891 = vmatpush1.msra.mxu0 0.0
    %1892 = vmatprep.subr.mxu0 0.0
    %1893 = vmatpush1.msra.mxu0 0.0
    %1894 = vmatprep.subr.mxu0 0.0
    %1895 = vmatpush1.msra.mxu0 0.0
    %1896 = vmatprep.subr.mxu0 0.0
    %1897 = vmatpush1.msra.mxu0 0.0
    %1898 = vmatprep.subr.mxu0 0.0
    %1899 = vmatpush1.msra.mxu0 0.0
    %1900 = vmatprep.subr.mxu0 0.0
    %1901 = vmatpush1.msra.mxu0 0.0
    %1902 = vmatprep.subr.mxu0 0.0
    %1903 = vmatpush1.msra.mxu0 0.0
    %1904 = vmatprep.subr.mxu0 0.0
    %1905 = vmatpush1.msra.mxu0 0.0
    %1906 = vmatprep.subr.mxu0 0.0
    %1907 = vmatpush1.msra.mxu0 0.0
    %1908 = vmatprep.subr.mxu0 0.0
    %1909 = vmatpush1.msra.mxu0 0.0
    %1910 = vmatprep.subr.mxu0 0.0
    %1911 = vmatpush1.msra.mxu0 0.0
    %1912 = vmatprep.subr.mxu0 0.0
    %1913 = vmatpush1.msra.mxu0 0.0
    %1914 = vmatprep.subr.mxu0 0.0
    %1915 = vmatpush1.msra.mxu0 0.0
    %1916 = vmatprep.subr.mxu0 0.0
    %1917 = vmatpush1.msra.mxu0 0.0
    %1918 = vmatprep.subr.mxu0 0.0
    %1919 = vmatpush1.msra.mxu0 0.0
    %1920 = vmatprep.mubr.f32.mxu0 0.0
    %1921 = vmatmul.mubr.f32.gmra.mrb[0].mxu0 %v1854
    %v1922 = vpop.f32.mrb[0].mxu0
    %v1923 = vpop.f32.mrb[0].mxu0
    %v1924 = vadd.f32 %v172, %v1923
    %1925 = vdwg.mxu0
    %v1926 = vmul.f32 %v456, %v1833
    %v1927 = vadd.f32 %v1924, %v1926
    %v1928 = vxor.u32 %v1927, 2147483648
    %v1929 = vmul.f32 %v1928, 1.442695
    %v1930 = vpow.pop %v1929
    %v1931 = vadd.f32 %v1930, 1.0
    %v1932 = vrcp.pop %v1931
    %v1933 = vmul.f32 1.0, %v1932
    %1935 = vrot.lane.b32.xlu0 %v1833, 32
    %v1936 = vpop.permute.xlu0 %1935
    %v1938 = vmul.f32 %v456, %v1936
    %v1939 = vadd.f32 %v1924, %v1938
    %v1940 = vxor.u32 %v1939, 2147483648
    %v1941 = vmul.f32 %v1940, 1.442695
    %v1942 = vpow.pop %v1941
    %v1943 = vadd.f32 %v1942, 1.0
    %v1944 = vrcp.pop %v1943
    %v1945 = vmul.f32 1.0, %v1944
    %1946 = vrot.lane.b32.xlu0 %v1833, 64
    %v1947 = vpop.permute.xlu0 %1946
    %v1949 = vmul.f32 %v456, %v1947
    %v1950 = vadd.f32 %v1924, %v1949
    %v1951 = vxor.u32 %v1950, 2147483648
    %v1952 = vmul.f32 %v1951, 1.442695
    %v1953 = vpow.pop %v1952
    %v1954 = vadd.f32 %v1953, 1.0
    %v1955 = vrcp.pop %v1954
    %v1956 = vmul.f32 1.0, %v1955
    %v1957 = vmul.f32 %v1945, %v1936
    %v1958 = vtanh.pop %v1924
    %1960 = vrot.lane.b32.xlu0 %v1958, 32
    %v1961 = vpop.permute.xlu0 %1960
    %v1963 = vmul.f32 %v1933, %v1961
    %1965 = vrot.lane.b32.xlu0 %v1963, 32
    %v1966 = vpop.permute.xlu0 %1965
    %v1968 = vadd.f32 %v1957, %v1966
    %v1969 = vtanh.pop %v1968
    %1971 = vrot.lane.b32.xlu0 %v1956, 96
    %v1972 = vpop.permute.xlu0 %1971
    %v1974 = vmul.f32 %v1969, %v1972
    %v1975 = vlaneseq
    %v1976 = vshrl.u32 %v1975, 7
    %v1977 = vsub.s32 7, %v1976
    %v1978 = vrot.slane %v163, %v1977
    %1980 = vrot.lane.b32.xlu0 %v1974, 96
    %v1981 = vpop.permute.xlu0 %1980
    %v1983 = vmul.f32 %v1978, %v1981
    %v1984 = vlaneseq
    %v1985 = vshrl.u32 %v1984, 7
    %v1986 = vsub.s32 7, %v1985
    %v1987 = vrot.slane %v486, %v1986
    %v1988 = vmul.f32 %v1987, %v1846
    %v1989 = vadd.f32 %v1983, %v1988
    %v1990 = vadd.f32 %v1847, %v1989
    %v1991 = vld [vmem:[%s7] sm:$0xff]
    %v1992 = vld [vmem:[%s7 + $0x8] sm:$0xff]
    %v1993 = vld [vmem:[%s7 + $0x10] sm:$0xff]
    %v1994 = vld [vmem:[%s7 + $0x18] sm:$0xff]
    %v1995 = vld [vmem:[%s8] sm:$0x1]
    %v1997 = vlaneseq
    %v1998 = vshrl.u32 %v1997, 7
    %v1999 = vsub.s32 0, %v1998
    %v2000 = vrot.slane %v1995, %v1999
    %v2003 = vsel %vm302, %v1990, 0
    %2005 = vmatprep.subr.mxu0 0.0
    %2006 = vmatpush1.msra.mxu0 %v1991
    %2007 = vmatprep.subr.mxu0 0.0
    %2008 = vmatpush1.msra.mxu0 %v1992
    %2009 = vmatprep.subr.mxu0 0.0
    %2010 = vmatpush1.msra.mxu0 %v1993
    %2011 = vmatprep.subr.mxu0 0.0
    %2012 = vmatpush1.msra.mxu0 %v1994
    %2013 = vmatprep.subr.mxu0 0.0
    %2014 = vmatpush1.msra.mxu0 0.0
    %2015 = vmatprep.subr.mxu0 0.0
    %2016 = vmatpush1.msra.mxu0 0.0
    %2017 = vmatprep.subr.mxu0 0.0
    %2018 = vmatpush1.msra.mxu0 0.0
    %2019 = vmatprep.subr.mxu0 0.0
    %2020 = vmatpush1.msra.mxu0 0.0
    %2021 = vmatprep.subr.mxu0 0.0
    %2022 = vmatpush1.msra.mxu0 0.0
    %2023 = vmatprep.subr.mxu0 0.0
    %2024 = vmatpush1.msra.mxu0 0.0
    %2025 = vmatprep.subr.mxu0 0.0
    %2026 = vmatpush1.msra.mxu0 0.0
    %2027 = vmatprep.subr.mxu0 0.0
    %2028 = vmatpush1.msra.mxu0 0.0
    %2029 = vmatprep.subr.mxu0 0.0
    %2030 = vmatpush1.msra.mxu0 0.0
    %2031 = vmatprep.subr.mxu0 0.0
    %2032 = vmatpush1.msra.mxu0 0.0
    %2033 = vmatprep.subr.mxu0 0.0
    %2034 = vmatpush1.msra.mxu0 0.0
    %2035 = vmatprep.subr.mxu0 0.0
    %2036 = vmatpush1.msra.mxu0 0.0
    %2037 = vmatprep.subr.mxu0 0.0
    %2038 = vmatpush1.msra.mxu0 0.0
    %2039 = vmatprep.subr.mxu0 0.0
    %2040 = vmatpush1.msra.mxu0 0.0
    %2041 = vmatprep.subr.mxu0 0.0
    %2042 = vmatpush1.msra.mxu0 0.0
    %2043 = vmatprep.subr.mxu0 0.0
    %2044 = vmatpush1.msra.mxu0 0.0
    %2045 = vmatprep.subr.mxu0 0.0
    %2046 = vmatpush1.msra.mxu0 0.0
    %2047 = vmatprep.subr.mxu0 0.0
    %2048 = vmatpush1.msra.mxu0 0.0
    %2049 = vmatprep.subr.mxu0 0.0
    %2050 = vmatpush1.msra.mxu0 0.0
    %2051 = vmatprep.subr.mxu0 0.0
    %2052 = vmatpush1.msra.mxu0 0.0
    %2053 = vmatprep.subr.mxu0 0.0
    %2054 = vmatpush1.msra.mxu0 0.0
    %2055 = vmatprep.subr.mxu0 0.0
    %2056 = vmatpush1.msra.mxu0 0.0
    %2057 = vmatprep.subr.mxu0 0.0
    %2058 = vmatpush1.msra.mxu0 0.0
    %2059 = vmatprep.subr.mxu0 0.0
    %2060 = vmatpush1.msra.mxu0 0.0
    %2061 = vmatprep.subr.mxu0 0.0
    %2062 = vmatpush1.msra.mxu0 0.0
    %2063 = vmatprep.subr.mxu0 0.0
    %2064 = vmatpush1.msra.mxu0 0.0
    %2065 = vmatprep.subr.mxu0 0.0
    %2066 = vmatpush1.msra.mxu0 0.0
    %2067 = vmatprep.subr.mxu0 0.0
    %2068 = vmatpush1.msra.mxu0 0.0
    %2069 = vmatprep.mubr.f32.mxu0 0.0
    %2070 = vmatmul.mubr.f32.gmra.mrb[0].mxu0 %v2003
    %v2071 = vpop.f32.mrb[0].mxu0
    %v2072 = vadd.f32 %v2000, %v2071
    %v2073 = vpop.f32.mrb[0].mxu0
    %2074 = vdwg.mxu0
    %vm2075 = vcmask 25600
    %v2076 = vsel %vm2075, %v2072, -inf
    %2077 = vmax.xlane.f32.xlu0 %v2076
    %v2078 = vpop.xlane.xlu0 %2077
    %v2079 = vsub.f32 %v2072, %v2078
    %v2080 = vmul.f32 %v2079, 1.442695
    %v2081 = vpow.pop %v2080
    %v2082 = vsel %vm2075, %v2081, 0.0
    %2083 = vadd.xlane.f32.xlu0 %v2082
    %v2084 = vpop.xlane.xlu0 %2083
    %v2085 = vrcp.pop %v2084
    %v2086 = vmul.f32 %v2081, %v2085
    %2087 = vst.msk [vmem:[#allocation5] sm:$0x3] %vm2075, %v2086
    // Predicated region
    $region42: #{model_forward.1} parent=1 // pred_check
      _
    $region43: #{model_forward.1} parent=1 // pred_check_branch
      %2089 = sbr.rel (0) target = $region45
    $region44: #{model_forward.1} parent=1 // pred_region
      %s2091 = ssub.s32 32, 32
      %2092 = vsyncadd [#allocation4], %s2091
      %s2094 = sshll.u32 [#allocation5], 4
      %s2095 = int_to_ptr.vmem [resolvable:$true] %s2094
      %2097 = dma.vmem_to_hbm [thread:$0]  %s2095, 32, %s9, [#allocation4]
    $region45: #{model_forward.1} parent=1 // pred_fallthru
      _
    // Predicated region
    $region46: #{model_forward.1} parent=1 // pred_check
      _
    $region47: #{model_forward.1} parent=1 // pred_check_branch
      %2099 = sbr.rel (0) target = $region49
    $region48: #{model_forward.1} parent=1 // pred_region
      %2100 = dma.done [#allocation4], 32
    $region49: #{model_forward.1} parent=1 // pred_fallthru
      _
    %2101 = vsyncpa [#allocation3], 1
    %2102 = vsyncpa [#allocation4], 1

</llo_original>
